<compile_context>
chip_gen: v7x
topology: tpu7x:2x2x1
jax: 0.10.0
libtpu: 0.0.40
codegen_flags: <defaults>
</compile_context>

<pallas_src>
import jax
import jax.numpy as jnp
from jax.experimental import pallas as pl
from jax.experimental.pallas import tpu as pltpu

EPS = 1e-5   # nn.BatchNorm2d default
_FP = 16     # front/back pad rows of the flattened activation scratch (keeps stores aligned)


# --------------------------------------------------------------------------
# BN folding (eval mode): y = x*scale + shift
# --------------------------------------------------------------------------
def fold_bn(bn):
    scale = bn['gamma'] * jax.lax.rsqrt(bn['var'] + EPS)
    shift = bn['beta'] - bn['mean'] * scale
    return scale, shift


def _pick_row_block(h, w):
    """Largest R dividing H with R*W matmul rows <= 2048 and >= 2 row steps when possible."""
    best = 1
    cap = max(h // 2, 1)
    for r in range(1, h + 1):
        if h % r == 0 and r <= cap and r * w <= 2048:
            best = r
    return best


# --------------------------------------------------------------------------
# Fused kernel: BN1+ReLU (+zero pad) -> 3x3 conv -> BN2+ReLU -> 1x1 conv (+bias)
# --------------------------------------------------------------------------
def _segment_head_kernel(xt_ref, xm_ref, xb_ref, col_ref, s1_ref, t1_ref,
                         w1_ref, s2_ref, t2_ref, w2_ref, b2_ref,
                         o_ref, af_ref, acc_ref):
    r = pl.program_id(1)
    nr = pl.num_programs(1)
    _, R, W, cin = xm_ref.shape
    cinter, cpad = w2_ref.shape

    s1 = s1_ref[...]                      # (1, Cin) folded BN1 scale
    t1 = t1_ref[...]                      # (1, Cin) folded BN1 shift

    def act(piece):                       # (rows, W, Cin) f32 -> (rows*W, Cin) bf16
        rows = piece.shape[0]
        a = jnp.maximum(piece * s1 + t1, 0.0)
        return a.astype(jnp.bfloat16).reshape(rows * W, cin)

    # Halo rows = row above / below this block.  At the image edges they stand for Conv2d
    # zero padding, so force the *activated* values to zero there.
    top = jnp.where(r > 0, act(xt_ref[0]), 0.0)           # (W, Cin)
    main = act(xm_ref[0])                                  # (R*W, Cin)
    bot = jnp.where(r < nr - 1, act(xb_ref[0]), 0.0)       # (W, Cin)

    # Assemble the flattened (R+2, W) activated halo block in VMEM.  Every 3x3 tap (dy, dx)
    # then becomes a static slice  af[_FP + dy*W + dx - 1 : ... + R*W]  of this buffer.
    zero_pad = jnp.zeros((_FP, cin), jnp.bfloat16)
    af_ref[pl.ds(0, _FP), :] = zero_pad
    af_ref[pl.ds(_FP, W), :] = top
    af_ref[pl.ds(_FP + W, R * W), :] = main
    af_ref[pl.ds(_FP + W + R * W, W), :] = bot
    af_ref[pl.ds(_FP + (R + 2) * W, _FP), :] = zero_pad
    afv = af_ref[...]

    # Column masks: dx=0 (dx=2) taps must not contribute at output column 0 (W-1); those
    # patch rows would otherwise wrap to the previous / next image row.
    col = col_ref[...]                    # (R*W, 1) int32 output-column index
    not_left = col > 0
    not_right = col < W - 1

    for dy in range(3):
        for dx in range(3):
            off = _FP + dy * W + dx - 1
            patch = afv[off:off + R * W, :]
            if dx == 0:
                patch = jnp.where(not_left, patch, 0.0)
            elif dx == 2:
                patch = jnp.where(not_right, patch, 0.0)
            update = jnp.dot(patch, w1_ref[dy * 3 + dx],
                             preferred_element_type=jnp.float32)
            if dy == 0 and dx == 0:
                acc_ref[...] = update
            else:
                acc_ref[...] += update

    # conv2: BN2 + ReLU + 1x1 conv with bias; Cout padded to a lane-dense multiple of 128.
    hact = jnp.maximum(acc_ref[...] * s2_ref[...] + t2_ref[...], 0.0)
    out = jnp.dot(hact.astype(jnp.bfloat16), w2_ref[...],
                  preferred_element_type=jnp.float32) + b2_ref[...]
    o_ref[0] = out.reshape(R, W, cpad)


def fused_segment_head(x, col_idx, s1, t1, w1r, s2, t2, w2p, b2p, R):
    n, h, w, cin = x.shape
    cinter, cpad = w2p.shape

    def const(shape):
        return pl.BlockSpec(shape, lambda b, r, _s=shape: (0,) * len(_s))

    x_main = pl.BlockSpec((1, R, w, cin), lambda b, r: (b, r, 0, 0))
    x_top = pl.BlockSpec((1, 1, w, cin),
                         lambda b, r: (b, jnp.maximum(r * R - 1, 0), 0, 0))
    x_bot = pl.BlockSpec((1, 1, w, cin),
                         lambda b, r: (b, jnp.minimum(r * R + R, h - 1), 0, 0))

    return pl.pallas_call(
        _segment_head_kernel,
        out_shape=jax.ShapeDtypeStruct((n, h, w, cpad), jnp.float32),
        grid=(n, h // R),
        in_specs=[x_top, x_main, x_bot,
                  const((R * w, 1)),
                  const((1, cin)), const((1, cin)),
                  const((9, cin, cinter)),
                  const((1, cinter)), const((1, cinter)),
                  const((cinter, cpad)), const((1, cpad))],
        out_specs=pl.BlockSpec((1, R, w, cpad), lambda b, r: (b, r, 0, 0)),
        scratch_shapes=[pltpu.VMEM(((R + 2) * w + 2 * _FP, cin), jnp.bfloat16),
                        pltpu.VMEM((R * w, cinter), jnp.float32)],
        compiler_params=pltpu.CompilerParams(
            dimension_semantics=("parallel", "parallel")),
    )(x, x, x, col_idx, s1, t1, w1r, s2, t2, w2p, b2p)


# --------------------------------------------------------------------------
# Bilinear upsample, F.interpolate(mode='bilinear', align_corners=False) semantics (XLA glue)
# --------------------------------------------------------------------------
def upsample_bilinear(x, oh, ow):
    n, h, w, c = x.shape
    if h == oh and w == ow:
        return x
    sy, sx = h / oh, w / ow
    ys = jnp.maximum((jnp.arange(oh, dtype=jnp.float32) + 0.5) * sy - 0.5, 0.0)
    xs = jnp.maximum((jnp.arange(ow, dtype=jnp.float32) + 0.5) * sx - 0.5, 0.0)
    y0 = jnp.floor(ys).astype(jnp.int32)
    x0 = jnp.floor(xs).astype(jnp.int32)
    y1 = jnp.minimum(y0 + 1, h - 1)
    x1 = jnp.minimum(x0 + 1, w - 1)
    wy = (ys - y0.astype(jnp.float32))[None, :, None, None]
    wx = (xs - x0.astype(jnp.float32))[None, None, :, None]

    def g(yi, xi):
        return x[:, yi][:, :, xi]

    return ((1 - wy) * ((1 - wx) * g(y0, x0) + wx * g(y0, x1)) +
            wy * ((1 - wx) * g(y1, x0) + wx * g(y1, x1)))


# --------------------------------------------------------------------------
# SegmentHead forward (Pallas) and pure-JAX reference
# --------------------------------------------------------------------------
def segment_head_forward(x, params, scale_factor=None):
    n, h, w, cin = x.shape
    cinter = params['w1'].shape[3]
    cout = params['w2'].shape[1]
    s1, t1 = fold_bn(params['bn1'])
    s2, t2 = fold_bn(params['bn2'])
    # conv1 weights tap-major bf16; conv2 weights/bias zero-padded to a lane-dense Cout.
    w1r = params['w1'].reshape(9, cin, cinter).astype(jnp.bfloat16)
    cpad = ((cout + 127) // 128) * 128
    w2p = jnp.zeros((cinter, cpad), jnp.float32).at[:, :cout].set(params['w2'])
    w2p = w2p.astype(jnp.bfloat16)
    b2p = jnp.zeros((1, cpad), jnp.float32).at[:, :cout].set(params['b2'])
    R = _pick_row_block(h, w)
    col_idx = (jnp.arange(R * w, dtype=jnp.int32) % w).reshape(R * w, 1)

    out = fused_segment_head(x, col_idx, s1, t1, w1r, s2, t2, w2p, b2p, R)
    out = out[..., :cout]   # drop lane padding (XLA fuses this slice into the upsample gather)
    if scale_factor is not None:
        out = upsample_bilinear(out, h * scale_factor, w * scale_factor)
    return out


def segment_head_reference(x, params, scale_factor=None):
    s1, t1 = fold_bn(params['bn1'])
    s2, t2 = fold_bn(params['bn2'])
    a = jnp.maximum(x * s1 + t1, 0.0)
    h = jax.lax.conv_general_dilated(a, params['w1'], window_strides=(1, 1), padding='SAME',
                                     dimension_numbers=('NHWC', 'HWIO', 'NHWC'))
    h = jnp.maximum(h * s2 + t2, 0.0)
    out = jnp.einsum('nhwc,co->nhwo', h, params['w2']) + params['b2'][0]
    if scale_factor is not None:
        out = upsample_bilinear(out, x.shape[1] * scale_factor, x.shape[2] * scale_factor)
    return out


# --------------------------------------------------------------------------
# Deterministic parameter init (weights stored as (kh,kw,Cin,Cout) / (Cin,Cout))
# --------------------------------------------------------------------------
def _init_bn(key, c):
    ks = jax.random.split(key, 4)
    return {
        'gamma': jax.random.uniform(ks[0], (1, c), jnp.float32, 0.5, 1.5),
        'beta':  jax.random.uniform(ks[1], (1, c), jnp.float32, -0.3, 0.3),
        'mean':  jax.random.uniform(ks[2], (1, c), jnp.float32, -0.3, 0.3),
        'var':   jax.random.uniform(ks[3], (1, c), jnp.float32, 0.5, 1.5),
    }


def init_params(key, cin, cinter, cout):
    ks = jax.random.split(key, 5)
    return {
        'bn1': _init_bn(ks[0], cin),
        'w1':  0.1 * jax.random.normal(ks[1], (3, 3, cin, cinter), jnp.float32),
        'bn2': _init_bn(ks[2], cinter),
        'w2':  0.1 * jax.random.normal(ks[3], (cinter, cout), jnp.float32),
        'b2':  0.05 * jax.random.normal(ks[4], (1, cout), jnp.float32),
    }


if __name__ == "__main__":
    N, C_IN, H, W = 2, 16, 16, 16        # small demo shapes, NHWC
    C_INTER, C_OUT, SCALE = 32, 8, 2     # interplanes, outplanes (classes), scale_factor

    key = jax.random.PRNGKey(0)
    kx, kp = jax.random.split(key)
    params = init_params(kp, C_IN, C_INTER, C_OUT)
    x = jax.random.normal(kx, (N, H, W, C_IN), jnp.float32)

    fwd = jax.jit(lambda xx: segment_head_forward(xx, params, scale_factor=SCALE))
    out = fwd(x)
    jax.block_until_ready(out)

    assert out.shape == (N, H * SCALE, W * SCALE, C_OUT), out.shape
    assert jnp.all(jnp.isfinite(out))

    ref = segment_head_reference(x, params, scale_factor=SCALE)
    err = float(jnp.max(jnp.abs(out - ref)))
    assert err < 8e-2, f"max abs err vs reference: {err}"
    print("KERNEL_OK")
</pallas_src>

<mosaic_0001>
module attributes {stable_mosaic.version = 11 : i64} {
  func.func @_segment_head_kernel(%arg0: i32, %arg1: i32, %arg2: memref<1x1x16x16xf32, #tpu.memory_space<vmem>>, %arg3: memref<1x8x16x16xf32, #tpu.memory_space<vmem>>, %arg4: memref<1x1x16x16xf32, #tpu.memory_space<vmem>>, %arg5: memref<128x1xi32, #tpu.memory_space<vmem>>, %arg6: memref<1x16xf32, #tpu.memory_space<vmem>>, %arg7: memref<1x16xf32, #tpu.memory_space<vmem>>, %arg8: memref<9x16x32xbf16, #tpu.memory_space<vmem>>, %arg9: memref<1x32xf32, #tpu.memory_space<vmem>>, %arg10: memref<1x32xf32, #tpu.memory_space<vmem>>, %arg11: memref<32x128xbf16, #tpu.memory_space<vmem>>, %arg12: memref<1x128xf32, #tpu.memory_space<vmem>>, %arg13: memref<1x8x16x128xf32, #tpu.memory_space<vmem>>, %arg14: memref<192x16xbf16, #tpu.memory_space<vmem>>, %arg15: memref<128x32xf32, #tpu.memory_space<vmem>>) attributes {dimension_semantics = [#tpu.dimension_semantics<parallel>, #tpu.dimension_semantics<parallel>], iteration_bounds = array<i64: 2, 2>, scalar_prefetch = 0 : i64, scratch_operands = 2 : i64, tpu.core_type = #tpu.core_type<tc>, window_params = [{transform_indices = @transform_0, window_bounds = array<i64: 1, 1, 16, 16>}, {transform_indices = @transform_1, window_bounds = array<i64: 1, 8, 16, 16>}, {transform_indices = @transform_2, window_bounds = array<i64: 1, 1, 16, 16>}, {pipeline_mode = #tpu.pipeline_mode<synchronous>, transform_indices = @transform_3, window_bounds = array<i64: 128, 1>}, {pipeline_mode = #tpu.pipeline_mode<synchronous>, transform_indices = @transform_4, window_bounds = array<i64: 1, 16>}, {pipeline_mode = #tpu.pipeline_mode<synchronous>, transform_indices = @transform_5, window_bounds = array<i64: 1, 16>}, {pipeline_mode = #tpu.pipeline_mode<synchronous>, transform_indices = @transform_6, window_bounds = array<i64: 9, 16, 32>}, {pipeline_mode = #tpu.pipeline_mode<synchronous>, transform_indices = @transform_7, window_bounds = array<i64: 1, 32>}, {pipeline_mode = #tpu.pipeline_mode<synchronous>, transform_indices = @transform_8, window_bounds = array<i64: 1, 32>}, {pipeline_mode = #tpu.pipeline_mode<synchronous>, transform_indices = @transform_9, window_bounds = array<i64: 32, 128>}, {pipeline_mode = #tpu.pipeline_mode<synchronous>, transform_indices = @transform_10, window_bounds = array<i64: 1, 128>}, {transform_indices = @transform_11, window_bounds = array<i64: 1, 8, 16, 128>}]} {
    %c0 = arith.constant 0 : index
    %c0_0 = arith.constant 0 : index
    %0 = vector.load %arg6[%c0, %c0_0] : memref<1x16xf32, #tpu.memory_space<vmem>>, vector<1x16xf32>
    %c0_1 = arith.constant 0 : index
    %c0_2 = arith.constant 0 : index
    %1 = vector.load %arg7[%c0_1, %c0_2] : memref<1x16xf32, #tpu.memory_space<vmem>>, vector<1x16xf32>
    %c0_i32 = arith.constant 0 : i32
    %2 = arith.cmpi sgt, %arg1, %c0_i32 : i32
    %c0_3 = arith.constant 0 : index
    %c0_4 = arith.constant 0 : index
    %c0_5 = arith.constant 0 : index
    %c0_6 = arith.constant 0 : index
    %3 = vector.load %arg2[%c0_3, %c0_4, %c0_5, %c0_6] : memref<1x1x16x16xf32, #tpu.memory_space<vmem>>, vector<1x1x16x16xf32>
    %4 = vector.shape_cast %3 : vector<1x1x16x16xf32> to vector<1x16x16xf32>
    %5 = vector.shape_cast %0 : vector<1x16xf32> to vector<1x1x16xf32>
    %6 = vector.broadcast %5 : vector<1x1x16xf32> to vector<1x16x16xf32>
    %7 = arith.mulf %4, %6 : vector<1x16x16xf32>
    %8 = vector.shape_cast %1 : vector<1x16xf32> to vector<1x1x16xf32>
    %9 = vector.broadcast %8 : vector<1x1x16xf32> to vector<1x16x16xf32>
    %10 = arith.addf %7, %9 : vector<1x16x16xf32>
    %cst = arith.constant 0.000000e+00 : f32
    %11 = vector.broadcast %cst : f32 to vector<1x16x16xf32>
    %12 = arith.maximumf %10, %11 : vector<1x16x16xf32>
    %13 = arith.truncf %12 : vector<1x16x16xf32> to vector<1x16x16xbf16>
    %14 = vector.shape_cast %13 : vector<1x16x16xbf16> to vector<16x16xbf16>
    %cst_7 = arith.constant 0.000000e+00 : f32
    %15 = arith.truncf %cst_7 : f32 to bf16
    %16 = vector.broadcast %15 : bf16 to vector<16x16xbf16>
    %17 = arith.select %2, %14, %16 : vector<16x16xbf16>
    %c0_8 = arith.constant 0 : index
    %c0_9 = arith.constant 0 : index
    %c0_10 = arith.constant 0 : index
    %c0_11 = arith.constant 0 : index
    %18 = vector.load %arg3[%c0_8, %c0_9, %c0_10, %c0_11] : memref<1x8x16x16xf32, #tpu.memory_space<vmem>>, vector<1x8x16x16xf32>
    %19 = vector.shape_cast %18 : vector<1x8x16x16xf32> to vector<8x16x16xf32>
    %20 = vector.shape_cast %0 : vector<1x16xf32> to vector<1x1x16xf32>
    %21 = vector.broadcast %20 : vector<1x1x16xf32> to vector<8x16x16xf32>
    %22 = arith.mulf %19, %21 : vector<8x16x16xf32>
    %23 = vector.shape_cast %1 : vector<1x16xf32> to vector<1x1x16xf32>
    %24 = vector.broadcast %23 : vector<1x1x16xf32> to vector<8x16x16xf32>
    %25 = arith.addf %22, %24 : vector<8x16x16xf32>
    %cst_12 = arith.constant 0.000000e+00 : f32
    %26 = vector.broadcast %cst_12 : f32 to vector<8x16x16xf32>
    %27 = arith.maximumf %25, %26 : vector<8x16x16xf32>
    %28 = arith.truncf %27 : vector<8x16x16xf32> to vector<8x16x16xbf16>
    %29 = vector.shape_cast %28 : vector<8x16x16xbf16> to vector<128x16xbf16>
    %c1_i32 = arith.constant 1 : i32
    %30 = arith.cmpi slt, %arg1, %c1_i32 : i32
    %c0_13 = arith.constant 0 : index
    %c0_14 = arith.constant 0 : index
    %c0_15 = arith.constant 0 : index
    %c0_16 = arith.constant 0 : index
    %31 = vector.load %arg4[%c0_13, %c0_14, %c0_15, %c0_16] : memref<1x1x16x16xf32, #tpu.memory_space<vmem>>, vector<1x1x16x16xf32>
    %32 = vector.shape_cast %31 : vector<1x1x16x16xf32> to vector<1x16x16xf32>
    %33 = vector.shape_cast %0 : vector<1x16xf32> to vector<1x1x16xf32>
    %34 = vector.broadcast %33 : vector<1x1x16xf32> to vector<1x16x16xf32>
    %35 = arith.mulf %32, %34 : vector<1x16x16xf32>
    %36 = vector.shape_cast %1 : vector<1x16xf32> to vector<1x1x16xf32>
    %37 = vector.broadcast %36 : vector<1x1x16xf32> to vector<1x16x16xf32>
    %38 = arith.addf %35, %37 : vector<1x16x16xf32>
    %cst_17 = arith.constant 0.000000e+00 : f32
    %39 = vector.broadcast %cst_17 : f32 to vector<1x16x16xf32>
    %40 = arith.maximumf %38, %39 : vector<1x16x16xf32>
    %41 = arith.truncf %40 : vector<1x16x16xf32> to vector<1x16x16xbf16>
    %42 = vector.shape_cast %41 : vector<1x16x16xbf16> to vector<16x16xbf16>
    %cst_18 = arith.constant 0.000000e+00 : f32
    %43 = arith.truncf %cst_18 : f32 to bf16
    %44 = vector.broadcast %43 : bf16 to vector<16x16xbf16>
    %45 = arith.select %30, %42, %44 : vector<16x16xbf16>
    %cst_19 = arith.constant 0.000000e+00 : bf16
    %46 = vector.broadcast %cst_19 : bf16 to vector<16x16xbf16>
    %c0_20 = arith.constant 0 : index
    %c0_21 = arith.constant 0 : index
    %47 = vector.load %arg14[%c0_20, %c0_21] : memref<192x16xbf16, #tpu.memory_space<vmem>>, vector<16x16xbf16>
    tpu.vector_store %arg14[%c0_20, %c0_21], %46 {strides = array<i32>} : memref<192x16xbf16, #tpu.memory_space<vmem>>, vector<16x16xbf16>,
    %c16 = arith.constant 16 : index
    %c0_22 = arith.constant 0 : index
    %48 = vector.load %arg14[%c16, %c0_22] : memref<192x16xbf16, #tpu.memory_space<vmem>>, vector<16x16xbf16>
    tpu.vector_store %arg14[%c16, %c0_22], %17 {strides = array<i32>} : memref<192x16xbf16, #tpu.memory_space<vmem>>, vector<16x16xbf16>,
    %c32 = arith.constant 32 : index
    %c0_23 = arith.constant 0 : index
    %49 = vector.load %arg14[%c32, %c0_23] : memref<192x16xbf16, #tpu.memory_space<vmem>>, vector<128x16xbf16>
    tpu.vector_store %arg14[%c32, %c0_23], %29 {strides = array<i32>} : memref<192x16xbf16, #tpu.memory_space<vmem>>, vector<128x16xbf16>,
    %c160 = arith.constant 160 : index
    %c0_24 = arith.constant 0 : index
    %50 = vector.load %arg14[%c160, %c0_24] : memref<192x16xbf16, #tpu.memory_space<vmem>>, vector<16x16xbf16>
    tpu.vector_store %arg14[%c160, %c0_24], %45 {strides = array<i32>} : memref<192x16xbf16, #tpu.memory_space<vmem>>, vector<16x16xbf16>,
    %c176 = arith.constant 176 : index
    %c0_25 = arith.constant 0 : index
    %51 = vector.load %arg14[%c176, %c0_25] : memref<192x16xbf16, #tpu.memory_space<vmem>>, vector<16x16xbf16>
    tpu.vector_store %arg14[%c176, %c0_25], %46 {strides = array<i32>} : memref<192x16xbf16, #tpu.memory_space<vmem>>, vector<16x16xbf16>,
    %c0_26 = arith.constant 0 : index
    %c0_27 = arith.constant 0 : index
    %52 = vector.load %arg14[%c0_26, %c0_27] : memref<192x16xbf16, #tpu.memory_space<vmem>>, vector<192x16xbf16>
    %c0_28 = arith.constant 0 : index
    %c0_29 = arith.constant 0 : index
    %53 = vector.load %arg5[%c0_28, %c0_29] : memref<128x1xi32, #tpu.memory_space<vmem>>, vector<128x1xi32>
    %c0_i32_30 = arith.constant 0 : i32
    %54 = vector.broadcast %c0_i32_30 : i32 to vector<128x1xi32>
    %55 = arith.cmpi sgt, %53, %54 : vector<128x1xi32>
    %c15_i32 = arith.constant 15 : i32
    %56 = vector.broadcast %c15_i32 : i32 to vector<128x1xi32>
    %57 = arith.cmpi slt, %53, %56 : vector<128x1xi32>
    %58 = vector.extract_strided_slice %52 {offsets = [15, 0], sizes = [128, 16], strides = [1, 1]} : vector<192x16xbf16> to vector<128x16xbf16>
    %cst_31 = arith.constant 0.000000e+00 : f32
    %59 = arith.truncf %cst_31 : f32 to bf16
    %60 = vector.shape_cast %55 : vector<128x1xi1> to vector<128x1xi1>
    %61 = vector.broadcast %60 : vector<128x1xi1> to vector<128x16xi1>
    %62 = vector.broadcast %59 : bf16 to vector<128x16xbf16>
    %63 = arith.select %61, %58, %62 : vector<128x16xi1>, vector<128x16xbf16>
    %c0_32 = arith.constant 0 : index
    %c0_33 = arith.constant 0 : index
    %c0_34 = arith.constant 0 : index
    %64 = vector.load %arg8[%c0_32, %c0_33, %c0_34] : memref<9x16x32xbf16, #tpu.memory_space<vmem>>, vector<1x16x32xbf16>
    %65 = vector.shape_cast %64 : vector<1x16x32xbf16> to vector<16x32xbf16>
    %cst_35 = arith.constant dense<0.000000e+00> : vector<128x32xf32>
    %66 = tpu.matmul %63, %65, %cst_35 {dimension_numbers = #tpu.dot_dimension_numbers<[1], [0], [0], [1], [0, 0, 1, 1], [], []>} : vector<128x16xbf16>, vector<16x32xbf16>, vector<128x32xf32> -> vector<128x32xf32>
    %c0_36 = arith.constant 0 : index
    %c0_37 = arith.constant 0 : index
    %67 = vector.load %arg15[%c0_36, %c0_37] : memref<128x32xf32, #tpu.memory_space<vmem>>, vector<128x32xf32>
    tpu.vector_store %arg15[%c0_36, %c0_37], %66 {strides = array<i32>} : memref<128x32xf32, #tpu.memory_space<vmem>>, vector<128x32xf32>,
    %68 = vector.extract_strided_slice %52 {offsets = [16, 0], sizes = [128, 16], strides = [1, 1]} : vector<192x16xbf16> to vector<128x16xbf16>
    %c1 = arith.constant 1 : index
    %c0_38 = arith.constant 0 : index
    %c0_39 = arith.constant 0 : index
    %69 = vector.load %arg8[%c1, %c0_38, %c0_39] : memref<9x16x32xbf16, #tpu.memory_space<vmem>>, vector<1x16x32xbf16>
    %70 = vector.shape_cast %69 : vector<1x16x32xbf16> to vector<16x32xbf16>
    %cst_40 = arith.constant dense<0.000000e+00> : vector<128x32xf32>
    %71 = tpu.matmul %68, %70, %cst_40 {dimension_numbers = #tpu.dot_dimension_numbers<[1], [0], [0], [1], [0, 0, 1, 1], [], []>} : vector<128x16xbf16>, vector<16x32xbf16>, vector<128x32xf32> -> vector<128x32xf32>
    %c0_41 = arith.constant 0 : index
    %c0_42 = arith.constant 0 : index
    %72 = vector.load %arg15[%c0_41, %c0_42] : memref<128x32xf32, #tpu.memory_space<vmem>>, vector<128x32xf32>
    %73 = arith.addf %72, %71 : vector<128x32xf32>
    %c0_43 = arith.constant 0 : index
    %c0_44 = arith.constant 0 : index
    %74 = vector.load %arg15[%c0_43, %c0_44] : memref<128x32xf32, #tpu.memory_space<vmem>>, vector<128x32xf32>
    tpu.vector_store %arg15[%c0_43, %c0_44], %73 {strides = array<i32>} : memref<128x32xf32, #tpu.memory_space<vmem>>, vector<128x32xf32>,
    %75 = vector.extract_strided_slice %52 {offsets = [17, 0], sizes = [128, 16], strides = [1, 1]} : vector<192x16xbf16> to vector<128x16xbf16>
    %cst_45 = arith.constant 0.000000e+00 : f32
    %76 = arith.truncf %cst_45 : f32 to bf16
    %77 = vector.shape_cast %57 : vector<128x1xi1> to vector<128x1xi1>
    %78 = vector.broadcast %77 : vector<128x1xi1> to vector<128x16xi1>
    %79 = vector.broadcast %76 : bf16 to vector<128x16xbf16>
    %80 = arith.select %78, %75, %79 : vector<128x16xi1>, vector<128x16xbf16>
    %c2 = arith.constant 2 : index
    %c0_46 = arith.constant 0 : index
    %c0_47 = arith.constant 0 : index
    %81 = vector.load %arg8[%c2, %c0_46, %c0_47] : memref<9x16x32xbf16, #tpu.memory_space<vmem>>, vector<1x16x32xbf16>
    %82 = vector.shape_cast %81 : vector<1x16x32xbf16> to vector<16x32xbf16>
    %cst_48 = arith.constant dense<0.000000e+00> : vector<128x32xf32>
    %83 = tpu.matmul %80, %82, %cst_48 {dimension_numbers = #tpu.dot_dimension_numbers<[1], [0], [0], [1], [0, 0, 1, 1], [], []>} : vector<128x16xbf16>, vector<16x32xbf16>, vector<128x32xf32> -> vector<128x32xf32>
    %c0_49 = arith.constant 0 : index
    %c0_50 = arith.constant 0 : index
    %84 = vector.load %arg15[%c0_49, %c0_50] : memref<128x32xf32, #tpu.memory_space<vmem>>, vector<128x32xf32>
    %85 = arith.addf %84, %83 : vector<128x32xf32>
    %c0_51 = arith.constant 0 : index
    %c0_52 = arith.constant 0 : index
    %86 = vector.load %arg15[%c0_51, %c0_52] : memref<128x32xf32, #tpu.memory_space<vmem>>, vector<128x32xf32>
    tpu.vector_store %arg15[%c0_51, %c0_52], %85 {strides = array<i32>} : memref<128x32xf32, #tpu.memory_space<vmem>>, vector<128x32xf32>,
    %87 = vector.extract_strided_slice %52 {offsets = [31, 0], sizes = [128, 16], strides = [1, 1]} : vector<192x16xbf16> to vector<128x16xbf16>
    %cst_53 = arith.constant 0.000000e+00 : f32
    %88 = arith.truncf %cst_53 : f32 to bf16
    %89 = vector.shape_cast %55 : vector<128x1xi1> to vector<128x1xi1>
    %90 = vector.broadcast %89 : vector<128x1xi1> to vector<128x16xi1>
    %91 = vector.broadcast %88 : bf16 to vector<128x16xbf16>
    %92 = arith.select %90, %87, %91 : vector<128x16xi1>, vector<128x16xbf16>
    %c3 = arith.constant 3 : index
    %c0_54 = arith.constant 0 : index
    %c0_55 = arith.constant 0 : index
    %93 = vector.load %arg8[%c3, %c0_54, %c0_55] : memref<9x16x32xbf16, #tpu.memory_space<vmem>>, vector<1x16x32xbf16>
    %94 = vector.shape_cast %93 : vector<1x16x32xbf16> to vector<16x32xbf16>
    %cst_56 = arith.constant dense<0.000000e+00> : vector<128x32xf32>
    %95 = tpu.matmul %92, %94, %cst_56 {dimension_numbers = #tpu.dot_dimension_numbers<[1], [0], [0], [1], [0, 0, 1, 1], [], []>} : vector<128x16xbf16>, vector<16x32xbf16>, vector<128x32xf32> -> vector<128x32xf32>
    %c0_57 = arith.constant 0 : index
    %c0_58 = arith.constant 0 : index
    %96 = vector.load %arg15[%c0_57, %c0_58] : memref<128x32xf32, #tpu.memory_space<vmem>>, vector<128x32xf32>
    %97 = arith.addf %96, %95 : vector<128x32xf32>
    %c0_59 = arith.constant 0 : index
    %c0_60 = arith.constant 0 : index
    %98 = vector.load %arg15[%c0_59, %c0_60] : memref<128x32xf32, #tpu.memory_space<vmem>>, vector<128x32xf32>
    tpu.vector_store %arg15[%c0_59, %c0_60], %97 {strides = array<i32>} : memref<128x32xf32, #tpu.memory_space<vmem>>, vector<128x32xf32>,
    %99 = vector.extract_strided_slice %52 {offsets = [32, 0], sizes = [128, 16], strides = [1, 1]} : vector<192x16xbf16> to vector<128x16xbf16>
    %c4 = arith.constant 4 : index
    %c0_61 = arith.constant 0 : index
    %c0_62 = arith.constant 0 : index
    %100 = vector.load %arg8[%c4, %c0_61, %c0_62] : memref<9x16x32xbf16, #tpu.memory_space<vmem>>, vector<1x16x32xbf16>
    %101 = vector.shape_cast %100 : vector<1x16x32xbf16> to vector<16x32xbf16>
    %cst_63 = arith.constant dense<0.000000e+00> : vector<128x32xf32>
    %102 = tpu.matmul %99, %101, %cst_63 {dimension_numbers = #tpu.dot_dimension_numbers<[1], [0], [0], [1], [0, 0, 1, 1], [], []>} : vector<128x16xbf16>, vector<16x32xbf16>, vector<128x32xf32> -> vector<128x32xf32>
    %c0_64 = arith.constant 0 : index
    %c0_65 = arith.constant 0 : index
    %103 = vector.load %arg15[%c0_64, %c0_65] : memref<128x32xf32, #tpu.memory_space<vmem>>, vector<128x32xf32>
    %104 = arith.addf %103, %102 : vector<128x32xf32>
    %c0_66 = arith.constant 0 : index
    %c0_67 = arith.constant 0 : index
    %105 = vector.load %arg15[%c0_66, %c0_67] : memref<128x32xf32, #tpu.memory_space<vmem>>, vector<128x32xf32>
    tpu.vector_store %arg15[%c0_66, %c0_67], %104 {strides = array<i32>} : memref<128x32xf32, #tpu.memory_space<vmem>>, vector<128x32xf32>,
    %106 = vector.extract_strided_slice %52 {offsets = [33, 0], sizes = [128, 16], strides = [1, 1]} : vector<192x16xbf16> to vector<128x16xbf16>
    %cst_68 = arith.constant 0.000000e+00 : f32
    %107 = arith.truncf %cst_68 : f32 to bf16
    %108 = vector.shape_cast %57 : vector<128x1xi1> to vector<128x1xi1>
    %109 = vector.broadcast %108 : vector<128x1xi1> to vector<128x16xi1>
    %110 = vector.broadcast %107 : bf16 to vector<128x16xbf16>
    %111 = arith.select %109, %106, %110 : vector<128x16xi1>, vector<128x16xbf16>
    %c5 = arith.constant 5 : index
    %c0_69 = arith.constant 0 : index
    %c0_70 = arith.constant 0 : index
    %112 = vector.load %arg8[%c5, %c0_69, %c0_70] : memref<9x16x32xbf16, #tpu.memory_space<vmem>>, vector<1x16x32xbf16>
    %113 = vector.shape_cast %112 : vector<1x16x32xbf16> to vector<16x32xbf16>
    %cst_71 = arith.constant dense<0.000000e+00> : vector<128x32xf32>
    %114 = tpu.matmul %111, %113, %cst_71 {dimension_numbers = #tpu.dot_dimension_numbers<[1], [0], [0], [1], [0, 0, 1, 1], [], []>} : vector<128x16xbf16>, vector<16x32xbf16>, vector<128x32xf32> -> vector<128x32xf32>
    %c0_72 = arith.constant 0 : index
    %c0_73 = arith.constant 0 : index
    %115 = vector.load %arg15[%c0_72, %c0_73] : memref<128x32xf32, #tpu.memory_space<vmem>>, vector<128x32xf32>
    %116 = arith.addf %115, %114 : vector<128x32xf32>
    %c0_74 = arith.constant 0 : index
    %c0_75 = arith.constant 0 : index
    %117 = vector.load %arg15[%c0_74, %c0_75] : memref<128x32xf32, #tpu.memory_space<vmem>>, vector<128x32xf32>
    tpu.vector_store %arg15[%c0_74, %c0_75], %116 {strides = array<i32>} : memref<128x32xf32, #tpu.memory_space<vmem>>, vector<128x32xf32>,
    %118 = vector.extract_strided_slice %52 {offsets = [47, 0], sizes = [128, 16], strides = [1, 1]} : vector<192x16xbf16> to vector<128x16xbf16>
    %cst_76 = arith.constant 0.000000e+00 : f32
    %119 = arith.truncf %cst_76 : f32 to bf16
    %120 = vector.shape_cast %55 : vector<128x1xi1> to vector<128x1xi1>
    %121 = vector.broadcast %120 : vector<128x1xi1> to vector<128x16xi1>
    %122 = vector.broadcast %119 : bf16 to vector<128x16xbf16>
    %123 = arith.select %121, %118, %122 : vector<128x16xi1>, vector<128x16xbf16>
    %c6 = arith.constant 6 : index
    %c0_77 = arith.constant 0 : index
    %c0_78 = arith.constant 0 : index
    %124 = vector.load %arg8[%c6, %c0_77, %c0_78] : memref<9x16x32xbf16, #tpu.memory_space<vmem>>, vector<1x16x32xbf16>
    %125 = vector.shape_cast %124 : vector<1x16x32xbf16> to vector<16x32xbf16>
    %cst_79 = arith.constant dense<0.000000e+00> : vector<128x32xf32>
    %126 = tpu.matmul %123, %125, %cst_79 {dimension_numbers = #tpu.dot_dimension_numbers<[1], [0], [0], [1], [0, 0, 1, 1], [], []>} : vector<128x16xbf16>, vector<16x32xbf16>, vector<128x32xf32> -> vector<128x32xf32>
    %c0_80 = arith.constant 0 : index
    %c0_81 = arith.constant 0 : index
    %127 = vector.load %arg15[%c0_80, %c0_81] : memref<128x32xf32, #tpu.memory_space<vmem>>, vector<128x32xf32>
    %128 = arith.addf %127, %126 : vector<128x32xf32>
    %c0_82 = arith.constant 0 : index
    %c0_83 = arith.constant 0 : index
    %129 = vector.load %arg15[%c0_82, %c0_83] : memref<128x32xf32, #tpu.memory_space<vmem>>, vector<128x32xf32>
    tpu.vector_store %arg15[%c0_82, %c0_83], %128 {strides = array<i32>} : memref<128x32xf32, #tpu.memory_space<vmem>>, vector<128x32xf32>,
    %130 = vector.extract_strided_slice %52 {offsets = [48, 0], sizes = [128, 16], strides = [1, 1]} : vector<192x16xbf16> to vector<128x16xbf16>
    %c7 = arith.constant 7 : index
    %c0_84 = arith.constant 0 : index
    %c0_85 = arith.constant 0 : index
    %131 = vector.load %arg8[%c7, %c0_84, %c0_85] : memref<9x16x32xbf16, #tpu.memory_space<vmem>>, vector<1x16x32xbf16>
    %132 = vector.shape_cast %131 : vector<1x16x32xbf16> to vector<16x32xbf16>
    %cst_86 = arith.constant dense<0.000000e+00> : vector<128x32xf32>
    %133 = tpu.matmul %130, %132, %cst_86 {dimension_numbers = #tpu.dot_dimension_numbers<[1], [0], [0], [1], [0, 0, 1, 1], [], []>} : vector<128x16xbf16>, vector<16x32xbf16>, vector<128x32xf32> -> vector<128x32xf32>
    %c0_87 = arith.constant 0 : index
    %c0_88 = arith.constant 0 : index
    %134 = vector.load %arg15[%c0_87, %c0_88] : memref<128x32xf32, #tpu.memory_space<vmem>>, vector<128x32xf32>
    %135 = arith.addf %134, %133 : vector<128x32xf32>
    %c0_89 = arith.constant 0 : index
    %c0_90 = arith.constant 0 : index
    %136 = vector.load %arg15[%c0_89, %c0_90] : memref<128x32xf32, #tpu.memory_space<vmem>>, vector<128x32xf32>
    tpu.vector_store %arg15[%c0_89, %c0_90], %135 {strides = array<i32>} : memref<128x32xf32, #tpu.memory_space<vmem>>, vector<128x32xf32>,
    %137 = vector.extract_strided_slice %52 {offsets = [49, 0], sizes = [128, 16], strides = [1, 1]} : vector<192x16xbf16> to vector<128x16xbf16>
    %cst_91 = arith.constant 0.000000e+00 : f32
    %138 = arith.truncf %cst_91 : f32 to bf16
    %139 = vector.shape_cast %57 : vector<128x1xi1> to vector<128x1xi1>
    %140 = vector.broadcast %139 : vector<128x1xi1> to vector<128x16xi1>
    %141 = vector.broadcast %138 : bf16 to vector<128x16xbf16>
    %142 = arith.select %140, %137, %141 : vector<128x16xi1>, vector<128x16xbf16>
    %c8 = arith.constant 8 : index
    %c0_92 = arith.constant 0 : index
    %c0_93 = arith.constant 0 : index
    %143 = vector.load %arg8[%c8, %c0_92, %c0_93] : memref<9x16x32xbf16, #tpu.memory_space<vmem>>, vector<1x16x32xbf16>
    %144 = vector.shape_cast %143 : vector<1x16x32xbf16> to vector<16x32xbf16>
    %cst_94 = arith.constant dense<0.000000e+00> : vector<128x32xf32>
    %145 = tpu.matmul %142, %144, %cst_94 {dimension_numbers = #tpu.dot_dimension_numbers<[1], [0], [0], [1], [0, 0, 1, 1], [], []>} : vector<128x16xbf16>, vector<16x32xbf16>, vector<128x32xf32> -> vector<128x32xf32>
    %c0_95 = arith.constant 0 : index
    %c0_96 = arith.constant 0 : index
    %146 = vector.load %arg15[%c0_95, %c0_96] : memref<128x32xf32, #tpu.memory_space<vmem>>, vector<128x32xf32>
    %147 = arith.addf %146, %145 : vector<128x32xf32>
    %c0_97 = arith.constant 0 : index
    %c0_98 = arith.constant 0 : index
    %148 = vector.load %arg15[%c0_97, %c0_98] : memref<128x32xf32, #tpu.memory_space<vmem>>, vector<128x32xf32>
    tpu.vector_store %arg15[%c0_97, %c0_98], %147 {strides = array<i32>} : memref<128x32xf32, #tpu.memory_space<vmem>>, vector<128x32xf32>,
    %c0_99 = arith.constant 0 : index
    %c0_100 = arith.constant 0 : index
    %149 = vector.load %arg15[%c0_99, %c0_100] : memref<128x32xf32, #tpu.memory_space<vmem>>, vector<128x32xf32>
    %c0_101 = arith.constant 0 : index
    %c0_102 = arith.constant 0 : index
    %150 = vector.load %arg9[%c0_101, %c0_102] : memref<1x32xf32, #tpu.memory_space<vmem>>, vector<1x32xf32>
    %151 = vector.broadcast %150 : vector<1x32xf32> to vector<128x32xf32>
    %152 = arith.mulf %149, %151 : vector<128x32xf32>
    %c0_103 = arith.constant 0 : index
    %c0_104 = arith.constant 0 : index
    %153 = vector.load %arg10[%c0_103, %c0_104] : memref<1x32xf32, #tpu.memory_space<vmem>>, vector<1x32xf32>
    %154 = vector.broadcast %153 : vector<1x32xf32> to vector<128x32xf32>
    %155 = arith.addf %152, %154 : vector<128x32xf32>
    %cst_105 = arith.constant 0.000000e+00 : f32
    %156 = vector.broadcast %cst_105 : f32 to vector<128x32xf32>
    %157 = arith.maximumf %155, %156 : vector<128x32xf32>
    %158 = arith.truncf %157 : vector<128x32xf32> to vector<128x32xbf16>
    %c0_106 = arith.constant 0 : index
    %c0_107 = arith.constant 0 : index
    %159 = vector.load %arg11[%c0_106, %c0_107] : memref<32x128xbf16, #tpu.memory_space<vmem>>, vector<32x128xbf16>
    %cst_108 = arith.constant dense<0.000000e+00> : vector<128x128xf32>
    %160 = tpu.matmul %158, %159, %cst_108 {dimension_numbers = #tpu.dot_dimension_numbers<[1], [0], [0], [1], [0, 0, 1, 1], [], []>} : vector<128x32xbf16>, vector<32x128xbf16>, vector<128x128xf32> -> vector<128x128xf32>
    %c0_109 = arith.constant 0 : index
    %c0_110 = arith.constant 0 : index
    %161 = vector.load %arg12[%c0_109, %c0_110] : memref<1x128xf32, #tpu.memory_space<vmem>>, vector<1x128xf32>
    %162 = vector.broadcast %161 : vector<1x128xf32> to vector<128x128xf32>
    %163 = arith.addf %160, %162 : vector<128x128xf32>
    %164 = vector.shape_cast %163 : vector<128x128xf32> to vector<8x16x128xf32>
    %c0_111 = arith.constant 0 : index
    %c0_112 = arith.constant 0 : index
    %c0_113 = arith.constant 0 : index
    %c0_114 = arith.constant 0 : index
    %165 = vector.load %arg13[%c0_111, %c0_112, %c0_113, %c0_114] : memref<1x8x16x128xf32, #tpu.memory_space<vmem>>, vector<1x8x16x128xf32>
    %166 = vector.shape_cast %165 : vector<1x8x16x128xf32> to vector<8x16x128xf32>
    %167 = vector.shape_cast %164 : vector<8x16x128xf32> to vector<1x8x16x128xf32>
    tpu.vector_store %arg13[%c0_111, %c0_112, %c0_113, %c0_114], %167 {strides = array<i32>} : memref<1x8x16x128xf32, #tpu.memory_space<vmem>>, vector<1x8x16x128xf32>,
    return
  }
  func.func @transform_0(%arg0: i32, %arg1: i32) -> (i32, i32, i32, i32) {
    %c8_i32 = arith.constant 8 : i32
    %0 = arith.muli %arg1, %c8_i32 : i32
    %c1_i32 = arith.constant 1 : i32
    %1 = arith.subi %0, %c1_i32 : i32
    %c0_i32 = arith.constant 0 : i32
    %2 = arith.maxsi %1, %c0_i32 : i32
    %c0_i32_0 = arith.constant 0 : i32
    %c0_i32_1 = arith.constant 0 : i32
    %c0_i32_2 = arith.constant 0 : i32
    return %arg0, %2, %c0_i32_0, %c0_i32_1 : i32, i32, i32, i32
  }
  func.func @transform_1(%arg0: i32, %arg1: i32) -> (i32, i32, i32, i32) {
    %c0_i32 = arith.constant 0 : i32
    %c0_i32_0 = arith.constant 0 : i32
    %c0_i32_1 = arith.constant 0 : i32
    return %arg0, %arg1, %c0_i32, %c0_i32_0 : i32, i32, i32, i32
  }
  func.func @transform_2(%arg0: i32, %arg1: i32) -> (i32, i32, i32, i32) {
    %c8_i32 = arith.constant 8 : i32
    %0 = arith.muli %arg1, %c8_i32 : i32
    %c8_i32_0 = arith.constant 8 : i32
    %1 = arith.addi %0, %c8_i32_0 : i32
    %c15_i32 = arith.constant 15 : i32
    %2 = arith.minsi %1, %c15_i32 : i32
    %c0_i32 = arith.constant 0 : i32
    %c0_i32_1 = arith.constant 0 : i32
    %c0_i32_2 = arith.constant 0 : i32
    return %arg0, %2, %c0_i32, %c0_i32_1 : i32, i32, i32, i32
  }
  func.func @transform_3(%arg0: i32, %arg1: i32) -> (i32, i32) {
    %c0_i32 = arith.constant 0 : i32
    %c0_i32_0 = arith.constant 0 : i32
    %c0_i32_1 = arith.constant 0 : i32
    return %c0_i32, %c0_i32_0 : i32, i32
  }
  func.func @transform_4(%arg0: i32, %arg1: i32) -> (i32, i32) {
    %c0_i32 = arith.constant 0 : i32
    %c0_i32_0 = arith.constant 0 : i32
    %c0_i32_1 = arith.constant 0 : i32
    return %c0_i32, %c0_i32_0 : i32, i32
  }
  func.func @transform_5(%arg0: i32, %arg1: i32) -> (i32, i32) {
    %c0_i32 = arith.constant 0 : i32
    %c0_i32_0 = arith.constant 0 : i32
    %c0_i32_1 = arith.constant 0 : i32
    return %c0_i32, %c0_i32_0 : i32, i32
  }
  func.func @transform_6(%arg0: i32, %arg1: i32) -> (i32, i32, i32) {
    %c0_i32 = arith.constant 0 : i32
    %c0_i32_0 = arith.constant 0 : i32
    %c0_i32_1 = arith.constant 0 : i32
    %c0_i32_2 = arith.constant 0 : i32
    return %c0_i32, %c0_i32_0, %c0_i32_1 : i32, i32, i32
  }
  func.func @transform_7(%arg0: i32, %arg1: i32) -> (i32, i32) {
    %c0_i32 = arith.constant 0 : i32
    %c0_i32_0 = arith.constant 0 : i32
    %c0_i32_1 = arith.constant 0 : i32
    return %c0_i32, %c0_i32_0 : i32, i32
  }
  func.func @transform_8(%arg0: i32, %arg1: i32) -> (i32, i32) {
    %c0_i32 = arith.constant 0 : i32
    %c0_i32_0 = arith.constant 0 : i32
    %c0_i32_1 = arith.constant 0 : i32
    return %c0_i32, %c0_i32_0 : i32, i32
  }
  func.func @transform_9(%arg0: i32, %arg1: i32) -> (i32, i32) {
    %c0_i32 = arith.constant 0 : i32
    %c0_i32_0 = arith.constant 0 : i32
    %c0_i32_1 = arith.constant 0 : i32
    return %c0_i32, %c0_i32_0 : i32, i32
  }
  func.func @transform_10(%arg0: i32, %arg1: i32) -> (i32, i32) {
    %c0_i32 = arith.constant 0 : i32
    %c0_i32_0 = arith.constant 0 : i32
    %c0_i32_1 = arith.constant 0 : i32
    return %c0_i32, %c0_i32_0 : i32, i32
  }
  func.func @transform_11(%arg0: i32, %arg1: i32) -> (i32, i32, i32, i32) {
    %c0_i32 = arith.constant 0 : i32
    %c0_i32_0 = arith.constant 0 : i32
    %c0_i32_1 = arith.constant 0 : i32
    return %arg0, %arg1, %c0_i32, %c0_i32_0 : i32, i32, i32, i32
  }
}

</mosaic_0001>

<llo_original>
// kernel: _lambda_.1
$region0: #{_lambda_.1}
  #allocation0 [shape = 'u32[]', space=smem, size = 0x4, offset = 0x4, fixed_abs, tag = 'smem constant byte address 0x4 - core index']
  #allocation1 [shape = 'u32[144,128]{1,0:T(1,128)}', space=vmem, size = 0x12000, scoped, tag = 'internal scratch']
  #allocation2 [shape = 'bf16[192,16]{1,0:T(16,128)(2,1)}', space=vmem, size = 0xc000, scoped, tag = 'scratch operand']
  #allocation3 [shape = 'f32[128,32]{1,0:T(8,128)}', space=vmem, size = 0x10000, scoped, tag = 'scratch operand']
  %s0 = inlined_call_operand.hbm [shape: f32[2,16,16,16], index: 0, kind: input, shape index: {}, may-alias: {0,1,2}]
  %s1 = inlined_call_operand.hbm [shape: f32[2,16,16,16], index: 1, kind: input, shape index: {}, may-alias: {0,1,2}]
  %s2 = inlined_call_operand.hbm [shape: f32[2,16,16,16], index: 2, kind: input, shape index: {}, may-alias: {0,1,2}]
  %s3 = inlined_call_operand.vmem [shape: s32[128,1], index: 3, kind: input, shape index: {}]
  %s4 = inlined_call_operand.vmem [shape: f32[1,16], index: 4, kind: input, shape index: {}]
  %s5 = inlined_call_operand.vmem [shape: f32[1,16], index: 5, kind: input, shape index: {}]
  %s6 = inlined_call_operand.vmem [shape: bf16[9,16,32], index: 6, kind: input, shape index: {}]
  %s7 = inlined_call_operand.vmem [shape: f32[1,32], index: 7, kind: input, shape index: {}]
  %s8 = inlined_call_operand.vmem [shape: f32[1,32], index: 8, kind: input, shape index: {}]
  %s9 = inlined_call_operand.vmem [shape: bf16[32,128], index: 9, kind: input, shape index: {}]
  %s10 = inlined_call_operand.vmem [shape: f32[1,128], index: 10, kind: input, shape index: {}]
  %s11 = inlined_call_operand.vmem [shape: f32[2,16,16,128], index: 11, kind: output, shape index: {}]
  %s12 = sld [smem:[#allocation0]]
  $region89: #{_lambda_.1} parent=0
    _
  %s14 = ssub.s32 1, %s12
  %s15 = scalar_select 0, %s14, %s12
  $region1: #{_lambda_.1} parent=0
    #allocation4 [shape = 'u8[16384]{0}', space=vmem, size = 0x4000, scoped, tag = 'input window, operand 0']
    #allocation5 [shape = 's32[2]{0}', space=sflag, size = 0x8, scoped, tag = 'scoped memory for _lambda_.1']
    #allocation6 [shape = 'u8[131072]{0}', space=vmem, size = 0x20000, scoped, tag = 'input window, operand 1']
    #allocation7 [shape = 's32[2]{0}', space=sflag, size = 0x8, scoped, tag = 'scoped memory for _lambda_.1']
    #allocation8 [shape = 'u8[16384]{0}', space=vmem, size = 0x4000, scoped, tag = 'input window, operand 2']
    %16 = vsyncpa [#allocation5], 0
    %s17 = scalar_lea.sflag [#allocation5], 1
    %18 = vsyncpa %s17, 0
    %19 = vsyncpa [#allocation7], 0
    %s20 = scalar_lea.sflag [#allocation7], 1
    %21 = vsyncpa %s20, 0
    loop: start=0, step=1, limit=6
    $region2: #{_lambda_.1} parent=1 // loop_pre_header
      _
    $region3: #{_lambda_.1} parent=1 // loop_header
      %s23 = sphi 0, %s27
      %p24 = scmp.ge.s32.totalorder %s23, 6
      %s30 = sphi 0, %s42
      %s31 = sphi 0, %s38
      %s32 = sphi 0, %s30
      %s33 = sphi 0, %s31
      %s34 = sphi 0, %s32
      %s35 = sphi 0, %s33
      %s55 = sphi 0, %s57
      %s58 = sphi 0, %s55
      %s59 = sphi 0, %s58
      %s75 = sphi 0, %s59
      %s83 = sphi 0, %s85
      %s86 = sphi 0, %s83
      %s87 = sphi 0, %s86
      %s103 = sphi 0, %s87
      %s119 = sphi 0, %s121
      %s122 = sphi 0, %s119
      %s123 = sphi 0, %s122
      %s139 = sphi 0, %s123
      %s143 = sphi 0, %s143
      %s145 = sphi 0, %s143
      %s146 = sphi 0, %s145
      %s160 = sphi 0, %s146
      %s164 = sphi 0, %s164
      %s166 = sphi 0, %s164
      %s167 = sphi 0, %s166
      %s181 = sphi 0, %s167
      %s185 = sphi 0, %s185
      %s187 = sphi 0, %s185
      %s188 = sphi 0, %s187
      %s202 = sphi 0, %s188
      %s206 = sphi 0, %s206
      %s208 = sphi 0, %s206
      %s209 = sphi 0, %s208
      %s223 = sphi 0, %s209
      %s227 = sphi 0, %s227
      %s229 = sphi 0, %s227
      %s230 = sphi 0, %s229
      %s244 = sphi 0, %s230
      %s248 = sphi 0, %s248
      %s250 = sphi 0, %s248
      %s251 = sphi 0, %s250
      %s265 = sphi 0, %s251
      %s269 = sphi 0, %s269
      %s271 = sphi 0, %s269
      %s272 = sphi 0, %s271
      %s286 = sphi 0, %s272
      %s290 = sphi 0, %s290
      %s292 = sphi 0, %s290
      %s293 = sphi 0, %s292
      %s307 = sphi 0, %s293
      %s315 = sphi 0, %s317
      %s318 = sphi 0, %s315
      %s319 = sphi 0, %s318
      %s335 = sphi 0, %s319
    $region4: #{_lambda_.1} parent=1 // loop_header_branch
      %26 = sbr.rel (%p24) target = $region8
    $region5: #{_lambda_.1} parent=1 // loop_body
      %s28 = ssub.s32 %s23, 1
      %s29 = ssub.s32 %s23, 2
      %s36 = sadd.s32 1, %s31
      %p37 = scmp.ge.s32.totalorder %s36, 2
      %s38 = scalar_select %p37, 0, %s36
      %s39 = sadd.s32 1, %s30
      %s40 = scalar_select %p37, %s39, %s30
      %p41 = scmp.ge.s32.totalorder %s40, 2
      %s42 = scalar_select %p41, 0, %s40
      %s43 = smul.u32 %s31, 8
      %s44 = ssub.s32 %s43, 1
      %p45 = scmp.gt.s32.totalorder %s44, 0
      %s46 = scalar_select %p45, %s44, 0
      %s47 = smul.u32 %s38, 8
      %s48 = ssub.s32 %s47, 1
      %p49 = scmp.gt.s32.totalorder %s48, 0
      %s50 = scalar_select %p49, %s48, 0
      %s51 = ssub.s32 %s30, %s42
      %s52 = ssub.s32 %s46, %s50
      %s53 = sor.u32 %s51, %s52
      %p54 = scmp.eq.s32.totalorder %s53, 0
      %s56 = sadd.s32 %s55, 1
      %s57 = scalar_select %p54, %s55, %s56
      %p60 = pneg %p54
      %p61 = scmp.eq.s32.totalorder %s23, 3
      %p62 = por %p60, %p61
      %p63 = scmp.ne.s32.totalorder %s55, %s58
      %p64 = scmp.eq.s32.totalorder %s23, 0
      %p65 = por %p63, %p64
      %p66 = scmp.ne.s32.totalorder %s55, %s58
      %p67 = scmp.eq.s32.totalorder %s28, 3
      %p68 = por %p66, %p67
      %p69 = scmp.ne.s32.totalorder %s58, %s59
      %p70 = scmp.eq.s32.totalorder %s28, 0
      %p71 = por %p69, %p70
      %p72 = scmp.ne.s32.totalorder %s58, %s59
      %p73 = scmp.eq.s32.totalorder %s29, 3
      %p74 = por %p72, %p73
      %p76 = scmp.ne.s32.totalorder %s59, %s75
      %p77 = scmp.eq.s32.totalorder %s29, 0
      %p78 = por %p76, %p77
      %s79 = ssub.s32 %s30, %s42
      %s80 = ssub.s32 %s31, %s38
      %s81 = sor.u32 %s79, %s80
      %p82 = scmp.eq.s32.totalorder %s81, 0
      %s84 = sadd.s32 %s83, 1
      %s85 = scalar_select %p82, %s83, %s84
      %p88 = pneg %p82
      %p89 = scmp.eq.s32.totalorder %s23, 3
      %p90 = por %p88, %p89
      %p91 = scmp.ne.s32.totalorder %s83, %s86
      %p92 = scmp.eq.s32.totalorder %s23, 0
      %p93 = por %p91, %p92
      %p94 = scmp.ne.s32.totalorder %s83, %s86
      %p95 = scmp.eq.s32.totalorder %s28, 3
      %p96 = por %p94, %p95
      %p97 = scmp.ne.s32.totalorder %s86, %s87
      %p98 = scmp.eq.s32.totalorder %s28, 0
      %p99 = por %p97, %p98
      %p100 = scmp.ne.s32.totalorder %s86, %s87
      %p101 = scmp.eq.s32.totalorder %s29, 3
      %p102 = por %p100, %p101
      %p104 = scmp.ne.s32.totalorder %s87, %s103
      %p105 = scmp.eq.s32.totalorder %s29, 0
      %p106 = por %p104, %p105
      %s107 = smul.u32 %s31, 8
      %s108 = sadd.s32 %s107, 8
      %p109 = scmp.lt.s32.totalorder %s108, 15
      %s110 = scalar_select %p109, %s108, 15
      %s111 = smul.u32 %s38, 8
      %s112 = sadd.s32 %s111, 8
      %p113 = scmp.lt.s32.totalorder %s112, 15
      %s114 = scalar_select %p113, %s112, 15
      %s115 = ssub.s32 %s30, %s42
      %s116 = ssub.s32 %s110, %s114
      %s117 = sor.u32 %s115, %s116
      %p118 = scmp.eq.s32.totalorder %s117, 0
      %s120 = sadd.s32 %s119, 1
      %s121 = scalar_select %p118, %s119, %s120
      %p124 = pneg %p118
      %p125 = scmp.eq.s32.totalorder %s23, 3
      %p126 = por %p124, %p125
      %p127 = scmp.ne.s32.totalorder %s119, %s122
      %p128 = scmp.eq.s32.totalorder %s23, 0
      %p129 = por %p127, %p128
      %p130 = scmp.ne.s32.totalorder %s119, %s122
      %p131 = scmp.eq.s32.totalorder %s28, 3
      %p132 = por %p130, %p131
      %p133 = scmp.ne.s32.totalorder %s122, %s123
      %p134 = scmp.eq.s32.totalorder %s28, 0
      %p135 = por %p133, %p134
      %p136 = scmp.ne.s32.totalorder %s122, %s123
      %p137 = scmp.eq.s32.totalorder %s29, 3
      %p138 = por %p136, %p137
      %p140 = scmp.ne.s32.totalorder %s123, %s139
      %p141 = scmp.eq.s32.totalorder %s29, 0
      %p142 = por %p140, %p141
      %s144 = sadd.s32 %s143, 1
      %p147 = scmp.eq.s32.totalorder %s23, 3
      %p148 = scmp.ne.s32.totalorder %s143, %s145
      %p149 = scmp.eq.s32.totalorder %s23, 0
      %p150 = por %p148, %p149
      %p151 = scmp.ne.s32.totalorder %s143, %s145
      %p152 = scmp.eq.s32.totalorder %s28, 3
      %p153 = por %p151, %p152
      %p154 = scmp.ne.s32.totalorder %s145, %s146
      %p155 = scmp.eq.s32.totalorder %s28, 0
      %p156 = por %p154, %p155
      %p157 = scmp.ne.s32.totalorder %s145, %s146
      %p158 = scmp.eq.s32.totalorder %s29, 3
      %p159 = por %p157, %p158
      %p161 = scmp.ne.s32.totalorder %s146, %s160
      %p162 = scmp.eq.s32.totalorder %s29, 0
      %p163 = por %p161, %p162
      %s165 = sadd.s32 %s164, 1
      %p168 = scmp.eq.s32.totalorder %s23, 3
      %p169 = scmp.ne.s32.totalorder %s164, %s166
      %p170 = scmp.eq.s32.totalorder %s23, 0
      %p171 = por %p169, %p170
      %p172 = scmp.ne.s32.totalorder %s164, %s166
      %p173 = scmp.eq.s32.totalorder %s28, 3
      %p174 = por %p172, %p173
      %p175 = scmp.ne.s32.totalorder %s166, %s167
      %p176 = scmp.eq.s32.totalorder %s28, 0
      %p177 = por %p175, %p176
      %p178 = scmp.ne.s32.totalorder %s166, %s167
      %p179 = scmp.eq.s32.totalorder %s29, 3
      %p180 = por %p178, %p179
      %p182 = scmp.ne.s32.totalorder %s167, %s181
      %p183 = scmp.eq.s32.totalorder %s29, 0
      %p184 = por %p182, %p183
      %s186 = sadd.s32 %s185, 1
      %p189 = scmp.eq.s32.totalorder %s23, 3
      %p190 = scmp.ne.s32.totalorder %s185, %s187
      %p191 = scmp.eq.s32.totalorder %s23, 0
      %p192 = por %p190, %p191
      %p193 = scmp.ne.s32.totalorder %s185, %s187
      %p194 = scmp.eq.s32.totalorder %s28, 3
      %p195 = por %p193, %p194
      %p196 = scmp.ne.s32.totalorder %s187, %s188
      %p197 = scmp.eq.s32.totalorder %s28, 0
      %p198 = por %p196, %p197
      %p199 = scmp.ne.s32.totalorder %s187, %s188
      %p200 = scmp.eq.s32.totalorder %s29, 3
      %p201 = por %p199, %p200
      %p203 = scmp.ne.s32.totalorder %s188, %s202
      %p204 = scmp.eq.s32.totalorder %s29, 0
      %p205 = por %p203, %p204
      %s207 = sadd.s32 %s206, 1
      %p210 = scmp.eq.s32.totalorder %s23, 3
      %p211 = scmp.ne.s32.totalorder %s206, %s208
      %p212 = scmp.eq.s32.totalorder %s23, 0
      %p213 = por %p211, %p212
      %p214 = scmp.ne.s32.totalorder %s206, %s208
      %p215 = scmp.eq.s32.totalorder %s28, 3
      %p216 = por %p214, %p215
      %p217 = scmp.ne.s32.totalorder %s208, %s209
      %p218 = scmp.eq.s32.totalorder %s28, 0
      %p219 = por %p217, %p218
      %p220 = scmp.ne.s32.totalorder %s208, %s209
      %p221 = scmp.eq.s32.totalorder %s29, 3
      %p222 = por %p220, %p221
      %p224 = scmp.ne.s32.totalorder %s209, %s223
      %p225 = scmp.eq.s32.totalorder %s29, 0
      %p226 = por %p224, %p225
      %s228 = sadd.s32 %s227, 1
      %p231 = scmp.eq.s32.totalorder %s23, 3
      %p232 = scmp.ne.s32.totalorder %s227, %s229
      %p233 = scmp.eq.s32.totalorder %s23, 0
      %p234 = por %p232, %p233
      %p235 = scmp.ne.s32.totalorder %s227, %s229
      %p236 = scmp.eq.s32.totalorder %s28, 3
      %p237 = por %p235, %p236
      %p238 = scmp.ne.s32.totalorder %s229, %s230
      %p239 = scmp.eq.s32.totalorder %s28, 0
      %p240 = por %p238, %p239
      %p241 = scmp.ne.s32.totalorder %s229, %s230
      %p242 = scmp.eq.s32.totalorder %s29, 3
      %p243 = por %p241, %p242
      %p245 = scmp.ne.s32.totalorder %s230, %s244
      %p246 = scmp.eq.s32.totalorder %s29, 0
      %p247 = por %p245, %p246
      %s249 = sadd.s32 %s248, 1
      %p252 = scmp.eq.s32.totalorder %s23, 3
      %p253 = scmp.ne.s32.totalorder %s248, %s250
      %p254 = scmp.eq.s32.totalorder %s23, 0
      %p255 = por %p253, %p254
      %p256 = scmp.ne.s32.totalorder %s248, %s250
      %p257 = scmp.eq.s32.totalorder %s28, 3
      %p258 = por %p256, %p257
      %p259 = scmp.ne.s32.totalorder %s250, %s251
      %p260 = scmp.eq.s32.totalorder %s28, 0
      %p261 = por %p259, %p260
      %p262 = scmp.ne.s32.totalorder %s250, %s251
      %p263 = scmp.eq.s32.totalorder %s29, 3
      %p264 = por %p262, %p263
      %p266 = scmp.ne.s32.totalorder %s251, %s265
      %p267 = scmp.eq.s32.totalorder %s29, 0
      %p268 = por %p266, %p267
      %s270 = sadd.s32 %s269, 1
      %p273 = scmp.eq.s32.totalorder %s23, 3
      %p274 = scmp.ne.s32.totalorder %s269, %s271
      %p275 = scmp.eq.s32.totalorder %s23, 0
      %p276 = por %p274, %p275
      %p277 = scmp.ne.s32.totalorder %s269, %s271
      %p278 = scmp.eq.s32.totalorder %s28, 3
      %p279 = por %p277, %p278
      %p280 = scmp.ne.s32.totalorder %s271, %s272
      %p281 = scmp.eq.s32.totalorder %s28, 0
      %p282 = por %p280, %p281
      %p283 = scmp.ne.s32.totalorder %s271, %s272
      %p284 = scmp.eq.s32.totalorder %s29, 3
      %p285 = por %p283, %p284
      %p287 = scmp.ne.s32.totalorder %s272, %s286
      %p288 = scmp.eq.s32.totalorder %s29, 0
      %p289 = por %p287, %p288
      %s291 = sadd.s32 %s290, 1
      %p294 = scmp.eq.s32.totalorder %s23, 3
      %p295 = scmp.ne.s32.totalorder %s290, %s292
      %p296 = scmp.eq.s32.totalorder %s23, 0
      %p297 = por %p295, %p296
      %p298 = scmp.ne.s32.totalorder %s290, %s292
      %p299 = scmp.eq.s32.totalorder %s28, 3
      %p300 = por %p298, %p299
      %p301 = scmp.ne.s32.totalorder %s292, %s293
      %p302 = scmp.eq.s32.totalorder %s28, 0
      %p303 = por %p301, %p302
      %p304 = scmp.ne.s32.totalorder %s292, %s293
      %p305 = scmp.eq.s32.totalorder %s29, 3
      %p306 = por %p304, %p305
      %p308 = scmp.ne.s32.totalorder %s293, %s307
      %p309 = scmp.eq.s32.totalorder %s29, 0
      %p310 = por %p308, %p309
      %s311 = ssub.s32 %s30, %s42
      %s312 = ssub.s32 %s31, %s38
      %s313 = sor.u32 %s311, %s312
      %p314 = scmp.eq.s32.totalorder %s313, 0
      %s316 = sadd.s32 %s315, 1
      %s317 = scalar_select %p314, %s315, %s316
      %p320 = pneg %p314
      %p321 = scmp.eq.s32.totalorder %s23, 3
      %p322 = por %p320, %p321
      %p323 = scmp.ne.s32.totalorder %s315, %s318
      %p324 = scmp.eq.s32.totalorder %s23, 0
      %p325 = por %p323, %p324
      %p326 = scmp.ne.s32.totalorder %s315, %s318
      %p327 = scmp.eq.s32.totalorder %s28, 3
      %p328 = por %p326, %p327
      %p329 = scmp.ne.s32.totalorder %s318, %s319
      %p330 = scmp.eq.s32.totalorder %s28, 0
      %p331 = por %p329, %p330
      %p332 = scmp.ne.s32.totalorder %s318, %s319
      %p333 = scmp.eq.s32.totalorder %s29, 3
      %p334 = por %p332, %p333
      %p336 = scmp.ne.s32.totalorder %s319, %s335
      %p337 = scmp.eq.s32.totalorder %s29, 0
      %p338 = por %p336, %p337
      %p339 = scmp.le.s32.totalorder 1, %s23
      %p340 = scmp.lt.s32.totalorder %s23, 5
      %p341 = pnand %p339, %p340
      %p342 = pneg %p341
      // Predicated region
      $region9: #{_lambda_.1} parent=5 // pred_check
        _
      $region10: #{_lambda_.1} parent=5 // pred_check_branch
        %344 = sbr.rel (%p341) target = $region12
      $region11: #{_lambda_.1} parent=5 // pred_region
        %s345 = ssub.s32 %s23, 1
        // Predicated region
        $region13: #{_lambda_.1} parent=11 // pred_check
          %p346 = pneg %p156
        $region14: #{_lambda_.1} parent=11 // pred_check_branch
          %348 = sbr.rel (%p346) target = $region16
        $region15: #{_lambda_.1} parent=11 // pred_region
          _
        $region16: #{_lambda_.1} parent=11 // pred_fallthru
          _
        // Predicated region
        $region17: #{_lambda_.1} parent=11 // pred_check
          %p349 = pneg %p177
        $region18: #{_lambda_.1} parent=11 // pred_check_branch
          %351 = sbr.rel (%p349) target = $region20
        $region19: #{_lambda_.1} parent=11 // pred_region
          _
        $region20: #{_lambda_.1} parent=11 // pred_fallthru
          _
        // Predicated region
        $region21: #{_lambda_.1} parent=11 // pred_check
          %p352 = pneg %p198
        $region22: #{_lambda_.1} parent=11 // pred_check_branch
          %354 = sbr.rel (%p352) target = $region24
        $region23: #{_lambda_.1} parent=11 // pred_region
          _
        $region24: #{_lambda_.1} parent=11 // pred_fallthru
          _
        // Predicated region
        $region25: #{_lambda_.1} parent=11 // pred_check
          %p355 = pneg %p219
        $region26: #{_lambda_.1} parent=11 // pred_check_branch
          %357 = sbr.rel (%p355) target = $region28
        $region27: #{_lambda_.1} parent=11 // pred_region
          _
        $region28: #{_lambda_.1} parent=11 // pred_fallthru
          _
        // Predicated region
        $region29: #{_lambda_.1} parent=11 // pred_check
          %p358 = pneg %p240
        $region30: #{_lambda_.1} parent=11 // pred_check_branch
          %360 = sbr.rel (%p358) target = $region32
        $region31: #{_lambda_.1} parent=11 // pred_region
          _
        $region32: #{_lambda_.1} parent=11 // pred_fallthru
          _
        // Predicated region
        $region33: #{_lambda_.1} parent=11 // pred_check
          %p361 = pneg %p261
        $region34: #{_lambda_.1} parent=11 // pred_check_branch
          %363 = sbr.rel (%p361) target = $region36
        $region35: #{_lambda_.1} parent=11 // pred_region
          _
        $region36: #{_lambda_.1} parent=11 // pred_fallthru
          _
        // Predicated region
        $region37: #{_lambda_.1} parent=11 // pred_check
          %p364 = pneg %p282
        $region38: #{_lambda_.1} parent=11 // pred_check_branch
          %366 = sbr.rel (%p364) target = $region40
        $region39: #{_lambda_.1} parent=11 // pred_region
          _
        $region40: #{_lambda_.1} parent=11 // pred_fallthru
          _
        // Predicated region
        $region41: #{_lambda_.1} parent=11 // pred_check
          %p367 = pneg %p303
        $region42: #{_lambda_.1} parent=11 // pred_check_branch
          %369 = sbr.rel (%p367) target = $region44
        $region43: #{_lambda_.1} parent=11 // pred_region
          _
        $region44: #{_lambda_.1} parent=11 // pred_fallthru
          _
      $region12: #{_lambda_.1} parent=5 // pred_fallthru
        _
      %p370 = scmp.lt.s32.totalorder %s23, 4
      // Predicated region
      $region45: #{_lambda_.1} parent=5 // pred_check
        %p371 = pneg %p370
      $region46: #{_lambda_.1} parent=5 // pred_check_branch
        %373 = sbr.rel (%p371) target = $region48
      $region47: #{_lambda_.1} parent=5 // pred_region
        // Predicated region
        $region49: #{_lambda_.1} parent=47 // pred_check
          %p374 = pneg %p65
        $region50: #{_lambda_.1} parent=47 // pred_check_branch
          %376 = sbr.rel (%p374) target = $region52
        $region51: #{_lambda_.1} parent=47 // pred_region
          %s377 = sand.u32 %s55, 1
          %s378 = scalar_lea.sflag [#allocation5], %s377
          %s379 = sand.u32 %s55, 1
          %s380 = smul.addr %s379, 16
          %s381 = scalar_lea.vmem [#allocation4], %s380
          %s382 = smul.u32 %s31, 8
          %s383 = ssub.s32 %s382, 1
          %p384 = scmp.gt.s32.totalorder %s383, 0
          %s385 = scalar_select %p384, %s383, 0
          %s387 = ssub.s32 256, 256
          %388 = vsyncadd %s378, %s387
          %s389 = smul.addr %s385, 2
          %s390 = smul.addr %s30, 32
          %s391 = sadd.s32 %s389, %s390
          %s392 = smul.addr %s391, 128
          %s393 = scalar_lea.hbm %s0, %s392
          %s394 = sshll.u32 %s381, 4
          %s395 = int_to_ptr.vmem [resolvable:$true] %s394
          %400 = dma.hbm_to_vmem [thread:$0]  %s393, 256, %s395, %s378, 128, 128, 8
        $region52: #{_lambda_.1} parent=47 // pred_fallthru
          _
        // Predicated region
        $region53: #{_lambda_.1} parent=47 // pred_check
          %p401 = pneg %p93
        $region54: #{_lambda_.1} parent=47 // pred_check_branch
          %403 = sbr.rel (%p401) target = $region56
        $region55: #{_lambda_.1} parent=47 // pred_region
          %s404 = sand.u32 %s23, 1
          %s405 = scalar_lea.sflag [#allocation7], %s404
          %s406 = sand.u32 %s83, 1
          %s407 = smul.addr %s406, 128
          %s408 = scalar_lea.vmem [#allocation6], %s407
          %s409 = smul.u32 8, %s31
          %s411 = ssub.s32 2048, 2048
          %412 = vsyncadd %s405, %s411
          %s413 = smul.addr %s409, 2
          %s414 = smul.addr %s30, 32
          %s415 = sadd.s32 %s413, %s414
          %s416 = smul.addr %s415, 128
          %s417 = scalar_lea.hbm %s1, %s416
          %s418 = sshll.u32 %s408, 4
          %s419 = int_to_ptr.vmem [resolvable:$true] %s418
          %424 = dma.hbm_to_vmem [thread:$0]  %s417, 2048, %s419, %s405, 128, 128, 8
        $region56: #{_lambda_.1} parent=47 // pred_fallthru
          _
        // Predicated region
        $region57: #{_lambda_.1} parent=47 // pred_check
          %p425 = pneg %p129
        $region58: #{_lambda_.1} parent=47 // pred_check_branch
          %427 = sbr.rel (%p425) target = $region60
        $region59: #{_lambda_.1} parent=47 // pred_region
          %s428 = sand.u32 %s23, 1
          %s429 = scalar_lea.sflag [#allocation7], %s428
          %s430 = sand.u32 %s119, 1
          %s431 = smul.addr %s430, 16
          %s432 = scalar_lea.vmem [#allocation8], %s431
          %s433 = smul.u32 %s31, 8
          %s434 = sadd.s32 %s433, 8
          %p435 = scmp.lt.s32.totalorder %s434, 15
          %s436 = scalar_select %p435, %s434, 15
          %s438 = ssub.s32 256, 256
          %439 = vsyncadd %s429, %s438
          %s440 = smul.addr %s436, 2
          %s441 = smul.addr %s30, 32
          %s442 = sadd.s32 %s440, %s441
          %s443 = smul.addr %s442, 128
          %s444 = scalar_lea.hbm %s2, %s443
          %s445 = sshll.u32 %s432, 4
          %s446 = int_to_ptr.vmem [resolvable:$true] %s445
          %451 = dma.hbm_to_vmem [thread:$0]  %s444, 256, %s446, %s429, 128, 128, 8
        $region60: #{_lambda_.1} parent=47 // pred_fallthru
          _
      $region48: #{_lambda_.1} parent=5 // pred_fallthru
        _
      %p452 = scmp.le.s32.totalorder 1, %s23
      %p453 = scmp.lt.s32.totalorder %s23, 5
      %p454 = pnand %p452, %p453
      %p455 = pneg %p454
      // Predicated region
      $region61: #{_lambda_.1} parent=5 // pred_check
        _
      $region62: #{_lambda_.1} parent=5 // pred_check_branch
        %457 = sbr.rel (%p454) target = $region64
      $region63: #{_lambda_.1} parent=5 // pred_region
        %s458 = ssub.s32 %s23, 1
        %s459 = sand.u32 %s58, 1
        %s460 = scalar_lea.sflag [#allocation5], %s459
        %s461 = sand.u32 %s58, 1
        %s462 = smul.addr %s461, 16
        %s463 = scalar_lea.vmem [#allocation4], %s462
        // Predicated region
        $region65: #{_lambda_.1} parent=63 // pred_check
          %p464 = pneg %p71
        $region66: #{_lambda_.1} parent=63 // pred_check_branch
          %466 = sbr.rel (%p464) target = $region68
        $region67: #{_lambda_.1} parent=63 // pred_region
          %467 = dma.done %s460, 256
        $region68: #{_lambda_.1} parent=63 // pred_fallthru
          _
        %s468 = sand.u32 %s28, 1
        %s469 = scalar_lea.sflag [#allocation7], %s468
        %s470 = sand.u32 %s86, 1
        %s471 = smul.addr %s470, 128
        %s472 = scalar_lea.vmem [#allocation6], %s471
        // Predicated region
        $region69: #{_lambda_.1} parent=63 // pred_check
          %p473 = pneg %p99
        $region70: #{_lambda_.1} parent=63 // pred_check_branch
          %475 = sbr.rel (%p473) target = $region72
        $region71: #{_lambda_.1} parent=63 // pred_region
          %476 = dma.done %s469, 2048
        $region72: #{_lambda_.1} parent=63 // pred_fallthru
          _
        %s477 = sand.u32 %s28, 1
        %s478 = scalar_lea.sflag [#allocation7], %s477
        %s479 = sand.u32 %s122, 1
        %s480 = smul.addr %s479, 16
        %s481 = scalar_lea.vmem [#allocation8], %s480
        // Predicated region
        $region73: #{_lambda_.1} parent=63 // pred_check
          %p482 = pneg %p135
        $region74: #{_lambda_.1} parent=63 // pred_check_branch
          %484 = sbr.rel (%p482) target = $region76
        $region75: #{_lambda_.1} parent=63 // pred_region
          %485 = dma.done %s478, 256
        $region76: #{_lambda_.1} parent=63 // pred_fallthru
          _
        %s486 = sand.u32 %s58, 1
        %s487 = scalar_lea.sflag [#allocation5], %s486
        %s488 = sand.u32 %s58, 1
        %s489 = smul.addr %s488, 16
        %s490 = scalar_lea.vmem [#allocation4], %s489
        %p491 = pneg %p71
        %p492 = pneg %p68
        %s493 = sand.u32 %s28, 1
        %s494 = scalar_lea.sflag [#allocation7], %s493
        %s495 = sand.u32 %s86, 1
        %s496 = smul.addr %s495, 128
        %s497 = scalar_lea.vmem [#allocation6], %s496
        %p498 = pneg %p99
        %p499 = pneg %p96
        %s500 = sand.u32 %s28, 1
        %s501 = scalar_lea.sflag [#allocation7], %s500
        %s502 = sand.u32 %s122, 1
        %s503 = smul.addr %s502, 16
        %s504 = scalar_lea.vmem [#allocation8], %s503
        %p505 = pneg %p135
        %p506 = pneg %p132
        %p507 = pneg %p156
        %p508 = pneg %p153
        %p509 = pneg %p177
        %p510 = pneg %p174
        %p511 = pneg %p198
        %p512 = pneg %p195
        %p513 = pneg %p219
        %p514 = pneg %p216
        %p515 = pneg %p240
        %p516 = pneg %p237
        %p517 = pneg %p261
        %p518 = pneg %p258
        %p519 = pneg %p282
        %p520 = pneg %p279
        %p521 = pneg %p303
        %p522 = pneg %p300
        %p523 = pneg %p331
        %p524 = pneg %p328
        %s525 = smul.u32 8, %s33
        %p526 = scmp.lt.s32.totalorder %s32, 1
        %s527 = scalar_select %p526, %s32, 1
        %p528 = scmp.lt.s32.totalorder %s525, 15
        %s529 = scalar_select %p528, %s525, 15
        %s530 = smul.addr %s529, 2
        %s531 = smul.addr %s527, 32
        %s532 = sadd.s32 %s530, %s531
        %s533 = smul.addr %s532, 8
        %s534 = scalar_lea.vmem %s11, %s533
        %s535 = smul.u32 %s33, 8
        %s536 = ssub.s32 %s535, 1
        %p537 = scmp.gt.s32.totalorder %s536, 0
        %s538 = scalar_select %p537, %s536, 0
        %s539 = smul.u32 8, %s33
        %s540 = smul.u32 %s33, 8
        %s541 = sadd.s32 %s540, 8
        %p542 = scmp.lt.s32.totalorder %s541, 15
        %s543 = scalar_select %p542, %s541, 15
        %s544 = smul.u32 8, %s33
        %p545 = scmp.lt.s32.totalorder %s32, 1
        %s546 = scalar_select %p545, %s32, 1
        %p547 = scmp.lt.s32.totalorder %s544, 15
        %s548 = scalar_select %p547, %s544, 15
        %s549 = smul.addr %s548, 2
        %s550 = smul.addr %s546, 32
        %s551 = sadd.s32 %s549, %s550
        %s552 = smul.addr %s551, 8
        %s553 = scalar_lea.vmem %s11, %s552
        %s554 = smul.u32 8, %s33
        %v558 = vld [vmem:[%s4] sm:$0x1]
        %v559 = vld [vmem:[%s5] sm:$0x1]
        %p560 = scmp.gt.s32.totalorder %s33, 0
        %v561 = vld [vmem:[%s463] sm:$0xff]
        %v562 = vld [vmem:[%s463 + $0x8] sm:$0xff]
        %v564 = vlaneseq
        %v565 = vshrl.u32 %v564, 7
        %v566 = vsub.s32 0, %v565
        %v567 = vrot.slane %v558, %v566
        %v569 = vmul.f32 %v561, %v567
        %v570 = vmul.f32 %v562, %v567
        %v572 = vlaneseq
        %v573 = vshrl.u32 %v572, 7
        %v574 = vsub.s32 0, %v573
        %v575 = vrot.slane %v559, %v574
        %v577 = vadd.f32 %v569, %v575
        %v578 = vadd.f32 %v570, %v575
        %v579 = vmax.f32 %v577, 0.0
        %v580 = vmax.f32 %v578, 0.0
        %v581 = vpack.c.bf16 %v580, %v579
        %s582 = scalar_select %p560, 1, 0
        %v583 = vstv %s582
        %vm584 = vcmp.eq.s32.totalorder %v583, 1
        %v585 = vsel %vm584, %v581, 0
        %v586 = vld [vmem:[%s472] sm:$0xff]
        %v587 = vld [vmem:[%s472 + $0x8] sm:$0xff]
        %v588 = vld [vmem:[%s472 + $0x10] sm:$0xff]
        %v589 = vld [vmem:[%s472 + $0x18] sm:$0xff]
        %v590 = vld [vmem:[%s472 + $0x20] sm:$0xff]
        %v591 = vld [vmem:[%s472 + $0x28] sm:$0xff]
        %v592 = vld [vmem:[%s472 + $0x30] sm:$0xff]
        %v593 = vld [vmem:[%s472 + $0x38] sm:$0xff]
        %v594 = vld [vmem:[%s472 + $0x40] sm:$0xff]
        %v595 = vld [vmem:[%s472 + $0x48] sm:$0xff]
        %v596 = vld [vmem:[%s472 + $0x50] sm:$0xff]
        %v597 = vld [vmem:[%s472 + $0x58] sm:$0xff]
        %v598 = vld [vmem:[%s472 + $0x60] sm:$0xff]
        %v599 = vld [vmem:[%s472 + $0x68] sm:$0xff]
        %v600 = vld [vmem:[%s472 + $0x70] sm:$0xff]
        %v601 = vld [vmem:[%s472 + $0x78] sm:$0xff]
        %v602 = vmul.f32 %v586, %v567
        %v603 = vmul.f32 %v587, %v567
        %v604 = vmul.f32 %v588, %v567
        %v605 = vmul.f32 %v589, %v567
        %v606 = vmul.f32 %v590, %v567
        %v607 = vmul.f32 %v591, %v567
        %v608 = vmul.f32 %v592, %v567
        %v609 = vmul.f32 %v593, %v567
        %v610 = vmul.f32 %v594, %v567
        %v611 = vmul.f32 %v595, %v567
        %v612 = vmul.f32 %v596, %v567
        %v613 = vmul.f32 %v597, %v567
        %v614 = vmul.f32 %v598, %v567
        %v615 = vmul.f32 %v599, %v567
        %v616 = vmul.f32 %v600, %v567
        %v617 = vmul.f32 %v601, %v567
        %v618 = vadd.f32 %v602, %v575
        %v619 = vadd.f32 %v603, %v575
        %v620 = vadd.f32 %v604, %v575
        %v621 = vadd.f32 %v605, %v575
        %v622 = vadd.f32 %v606, %v575
        %v623 = vadd.f32 %v607, %v575
        %v624 = vadd.f32 %v608, %v575
        %v625 = vadd.f32 %v609, %v575
        %v626 = vadd.f32 %v610, %v575
        %v627 = vadd.f32 %v611, %v575
        %v628 = vadd.f32 %v612, %v575
        %v629 = vadd.f32 %v613, %v575
        %v630 = vadd.f32 %v614, %v575
        %v631 = vadd.f32 %v615, %v575
        %v632 = vadd.f32 %v616, %v575
        %v633 = vadd.f32 %v617, %v575
        %v634 = vmax.f32 %v618, 0.0
        %v635 = vmax.f32 %v619, 0.0
        %v636 = vmax.f32 %v620, 0.0
        %v637 = vmax.f32 %v621, 0.0
        %v638 = vmax.f32 %v622, 0.0
        %v639 = vmax.f32 %v623, 0.0
        %v640 = vmax.f32 %v624, 0.0
        %v641 = vmax.f32 %v625, 0.0
        %v642 = vmax.f32 %v626, 0.0
        %v643 = vmax.f32 %v627, 0.0
        %v644 = vmax.f32 %v628, 0.0
        %v645 = vmax.f32 %v629, 0.0
        %v646 = vmax.f32 %v630, 0.0
        %v647 = vmax.f32 %v631, 0.0
        %v648 = vmax.f32 %v632, 0.0
        %v649 = vmax.f32 %v633, 0.0
        %v650 = vpack.c.bf16 %v635, %v634
        %v651 = vpack.c.bf16 %v637, %v636
        %v652 = vpack.c.bf16 %v639, %v638
        %v653 = vpack.c.bf16 %v641, %v640
        %v654 = vpack.c.bf16 %v643, %v642
        %v655 = vpack.c.bf16 %v645, %v644
        %v656 = vpack.c.bf16 %v647, %v646
        %v657 = vpack.c.bf16 %v649, %v648
        %p658 = scmp.lt.s32.totalorder %s33, 1
        %v659 = vld [vmem:[%s481] sm:$0xff]
        %v660 = vld [vmem:[%s481 + $0x8] sm:$0xff]
        %v661 = vmul.f32 %v659, %v567
        %v662 = vmul.f32 %v660, %v567
        %v663 = vadd.f32 %v661, %v575
        %v664 = vadd.f32 %v662, %v575
        %v665 = vmax.f32 %v663, 0.0
        %v666 = vmax.f32 %v664, 0.0
        %v667 = vpack.c.bf16 %v666, %v665
        %s668 = scalar_select %p658, 1, 0
        %v669 = vstv %s668
        %vm670 = vcmp.eq.s32.totalorder %v669, 1
        %v671 = vsel %vm670, %v667, 0
        %vm672 = vcmask 130048
        %673 = vst.msk [vmem:[#allocation2] sm:$0xff] %vm672, 0
        %674 = vst.msk [vmem:[#allocation2 + $0x8] sm:$0xff] %vm672, %v585
        %675 = vst.msk [vmem:[#allocation2 + $0x10] sm:$0xff] %vm672, %v650
        %676 = vst.msk [vmem:[#allocation2 + $0x18] sm:$0xff] %vm672, %v651
        %677 = vst.msk [vmem:[#allocation2 + $0x20] sm:$0xff] %vm672, %v652
        %678 = vst.msk [vmem:[#allocation2 + $0x28] sm:$0xff] %vm672, %v653
        %679 = vst.msk [vmem:[#allocation2 + $0x30] sm:$0xff] %vm672, %v654
        %680 = vst.msk [vmem:[#allocation2 + $0x38] sm:$0xff] %vm672, %v655
        %681 = vst.msk [vmem:[#allocation2 + $0x40] sm:$0xff] %vm672, %v656
        %682 = vst.msk [vmem:[#allocation2 + $0x48] sm:$0xff] %vm672, %v657
        %683 = vst.msk [vmem:[#allocation2 + $0x50] sm:$0xff] %vm672, %v671
        %684 = vst.msk [vmem:[#allocation2 + $0x58] sm:$0xff] %vm672, 0
        %v685 = vld [vmem:[#allocation2] sm:$0xff]
        %v686 = vld [vmem:[#allocation2 + $0x8] sm:$0xff]
        %v687 = vld [vmem:[#allocation2 + $0x10] sm:$0xff]
        %v688 = vld [vmem:[#allocation2 + $0x18] sm:$0xff]
        %v689 = vld [vmem:[#allocation2 + $0x20] sm:$0xff]
        %v690 = vld [vmem:[#allocation2 + $0x28] sm:$0xff]
        %v691 = vld [vmem:[#allocation2 + $0x30] sm:$0xff]
        %v692 = vld [vmem:[#allocation2 + $0x38] sm:$0xff]
        %v693 = vld [vmem:[#allocation2 + $0x40] sm:$0xff]
        %v694 = vld [vmem:[#allocation2 + $0x48] sm:$0xff]
        %v695 = vld [vmem:[#allocation2 + $0x50] sm:$0xff]
        %v696 = vld [vmem:[#allocation2 + $0x58] sm:$0xff]
        %v697 = vld [vmem:[%s3] sm:$0xff]
        %v698 = vld [vmem:[%s3 + $0x8] sm:$0xff]
        %v699 = vld [vmem:[%s3 + $0x10] sm:$0xff]
        %v700 = vld [vmem:[%s3 + $0x18] sm:$0xff]
        %v701 = vld [vmem:[%s3 + $0x20] sm:$0xff]
        %v702 = vld [vmem:[%s3 + $0x28] sm:$0xff]
        %v703 = vld [vmem:[%s3 + $0x30] sm:$0xff]
        %v704 = vld [vmem:[%s3 + $0x38] sm:$0xff]
        %v705 = vld [vmem:[%s3 + $0x40] sm:$0xff]
        %v706 = vld [vmem:[%s3 + $0x48] sm:$0xff]
        %v707 = vld [vmem:[%s3 + $0x50] sm:$0xff]
        %v708 = vld [vmem:[%s3 + $0x58] sm:$0xff]
        %v709 = vld [vmem:[%s3 + $0x60] sm:$0xff]
        %v710 = vld [vmem:[%s3 + $0x68] sm:$0xff]
        %v711 = vld [vmem:[%s3 + $0x70] sm:$0xff]
        %v712 = vld [vmem:[%s3 + $0x78] sm:$0xff]
        %vm713 = vcmp.gt.s32.totalorder %v697, 0
        %vm714 = vcmp.gt.s32.totalorder %v698, 0
        %vm715 = vcmp.gt.s32.totalorder %v699, 0
        %vm716 = vcmp.gt.s32.totalorder %v700, 0
        %vm717 = vcmp.gt.s32.totalorder %v701, 0
        %vm718 = vcmp.gt.s32.totalorder %v702, 0
        %vm719 = vcmp.gt.s32.totalorder %v703, 0
        %vm720 = vcmp.gt.s32.totalorder %v704, 0
        %vm721 = vcmp.gt.s32.totalorder %v705, 0
        %vm722 = vcmp.gt.s32.totalorder %v706, 0
        %vm723 = vcmp.gt.s32.totalorder %v707, 0
        %vm724 = vcmp.gt.s32.totalorder %v708, 0
        %vm725 = vcmp.gt.s32.totalorder %v709, 0
        %vm726 = vcmp.gt.s32.totalorder %v710, 0
        %vm727 = vcmp.gt.s32.totalorder %v711, 0
        %vm728 = vcmp.gt.s32.totalorder %v712, 0
        %vm729 = vcmp.lt.s32.totalorder %v697, 15
        %vm730 = vcmp.lt.s32.totalorder %v698, 15
        %vm731 = vcmp.lt.s32.totalorder %v699, 15
        %vm732 = vcmp.lt.s32.totalorder %v700, 15
        %vm733 = vcmp.lt.s32.totalorder %v701, 15
        %vm734 = vcmp.lt.s32.totalorder %v702, 15
        %vm735 = vcmp.lt.s32.totalorder %v703, 15
        %vm736 = vcmp.lt.s32.totalorder %v704, 15
        %vm737 = vcmp.lt.s32.totalorder %v705, 15
        %vm738 = vcmp.lt.s32.totalorder %v706, 15
        %vm739 = vcmp.lt.s32.totalorder %v707, 15
        %vm740 = vcmp.lt.s32.totalorder %v708, 15
        %vm741 = vcmp.lt.s32.totalorder %v709, 15
        %vm742 = vcmp.lt.s32.totalorder %v710, 15
        %vm743 = vcmp.lt.s32.totalorder %v711, 15
        %vm744 = vcmp.lt.s32.totalorder %v712, 15
        %v745 = vsel %vm713, 1, 0
        %v746 = vsel %vm714, 1, 0
        %v747 = vsel %vm715, 1, 0
        %v748 = vsel %vm716, 1, 0
        %v749 = vsel %vm717, 1, 0
        %v750 = vsel %vm718, 1, 0
        %v751 = vsel %vm719, 1, 0
        %v752 = vsel %vm720, 1, 0
        %v753 = vsel %vm721, 1, 0
        %v754 = vsel %vm722, 1, 0
        %v755 = vsel %vm723, 1, 0
        %v756 = vsel %vm724, 1, 0
        %v757 = vsel %vm725, 1, 0
        %v758 = vsel %vm726, 1, 0
        %v759 = vsel %vm727, 1, 0
        %v760 = vsel %vm728, 1, 0
        %761 = vset.pattern.permute.xlu0 0
        %762 = vperm.xlu0 %761, %v745
        %v763 = vpop.permute.xlu0 %762
        %764 = vset.pattern.permute.xlu0 0
        %765 = vperm.xlu0 %764, %v746
        %v766 = vpop.permute.xlu0 %765
        %767 = vset.pattern.permute.xlu0 0
        %768 = vperm.xlu0 %767, %v747
        %v769 = vpop.permute.xlu0 %768
        %770 = vset.pattern.permute.xlu0 0
        %771 = vperm.xlu0 %770, %v748
        %v772 = vpop.permute.xlu0 %771
        %773 = vset.pattern.permute.xlu0 0
        %774 = vperm.xlu0 %773, %v749
        %v775 = vpop.permute.xlu0 %774
        %776 = vset.pattern.permute.xlu0 0
        %777 = vperm.xlu0 %776, %v750
        %v778 = vpop.permute.xlu0 %777
        %779 = vset.pattern.permute.xlu0 0
        %780 = vperm.xlu0 %779, %v751
        %v781 = vpop.permute.xlu0 %780
        %782 = vset.pattern.permute.xlu0 0
        %783 = vperm.xlu0 %782, %v752
        %v784 = vpop.permute.xlu0 %783
        %785 = vset.pattern.permute.xlu0 0
        %786 = vperm.xlu0 %785, %v753
        %v787 = vpop.permute.xlu0 %786
        %788 = vset.pattern.permute.xlu0 0
        %789 = vperm.xlu0 %788, %v754
        %v790 = vpop.permute.xlu0 %789
        %791 = vset.pattern.permute.xlu0 0
        %792 = vperm.xlu0 %791, %v755
        %v793 = vpop.permute.xlu0 %792
        %794 = vset.pattern.permute.xlu0 0
        %795 = vperm.xlu0 %794, %v756
        %v796 = vpop.permute.xlu0 %795
        %797 = vset.pattern.permute.xlu0 0
        %798 = vperm.xlu0 %797, %v757
        %v799 = vpop.permute.xlu0 %798
        %800 = vset.pattern.permute.xlu0 0
        %801 = vperm.xlu0 %800, %v758
        %v802 = vpop.permute.xlu0 %801
        %803 = vset.pattern.permute.xlu0 0
        %804 = vperm.xlu0 %803, %v759
        %v805 = vpop.permute.xlu0 %804
        %806 = vset.pattern.permute.xlu0 0
        %807 = vperm.xlu0 %806, %v760
        %v808 = vpop.permute.xlu0 %807
        %vm809 = vcmp.eq.s32.totalorder %v763, 1
        %vm810 = vcmp.eq.s32.totalorder %v766, 1
        %vm811 = vcmp.eq.s32.totalorder %v769, 1
        %vm812 = vcmp.eq.s32.totalorder %v772, 1
        %vm813 = vcmp.eq.s32.totalorder %v775, 1
        %vm814 = vcmp.eq.s32.totalorder %v778, 1
        %vm815 = vcmp.eq.s32.totalorder %v781, 1
        %vm816 = vcmp.eq.s32.totalorder %v784, 1
        %vm817 = vcmp.eq.s32.totalorder %v787, 1
        %vm818 = vcmp.eq.s32.totalorder %v790, 1
        %vm819 = vcmp.eq.s32.totalorder %v793, 1
        %vm820 = vcmp.eq.s32.totalorder %v796, 1
        %vm821 = vcmp.eq.s32.totalorder %v799, 1
        %vm822 = vcmp.eq.s32.totalorder %v802, 1
        %vm823 = vcmp.eq.s32.totalorder %v805, 1
        %vm824 = vcmp.eq.s32.totalorder %v808, 1
        %vm825 = vmpackc.low %vm809, %vm809
        %vm826 = vmpackc.low %vm810, %vm810
        %vm827 = vmpackc.low %vm811, %vm811
        %vm828 = vmpackc.low %vm812, %vm812
        %vm829 = vmpackc.low %vm813, %vm813
        %vm830 = vmpackc.low %vm814, %vm814
        %vm831 = vmpackc.low %vm815, %vm815
        %vm832 = vmpackc.low %vm816, %vm816
        %vm833 = vmpackc.low %vm817, %vm817
        %vm834 = vmpackc.low %vm818, %vm818
        %vm835 = vmpackc.low %vm819, %vm819
        %vm836 = vmpackc.low %vm820, %vm820
        %vm837 = vmpackc.low %vm821, %vm821
        %vm838 = vmpackc.low %vm822, %vm822
        %vm839 = vmpackc.low %vm823, %vm823
        %vm840 = vmpackc.low %vm824, %vm824
        %v841 = vsel %vm825, 65537, 0
        %v842 = vsel %vm826, 65537, 0
        %v843 = vsel %vm827, 65537, 0
        %v844 = vsel %vm828, 65537, 0
        %v845 = vsel %vm829, 65537, 0
        %v846 = vsel %vm830, 65537, 0
        %v847 = vsel %vm831, 65537, 0
        %v848 = vsel %vm832, 65537, 0
        %v849 = vsel %vm833, 65537, 0
        %v850 = vsel %vm834, 65537, 0
        %v851 = vsel %vm835, 65537, 0
        %v852 = vsel %vm836, 65537, 0
        %v853 = vsel %vm837, 65537, 0
        %v854 = vsel %vm838, 65537, 0
        %v855 = vsel %vm839, 65537, 0
        %v856 = vsel %vm840, 65537, 0
        %v857 = vunpack.c.l.b16 %v841
        %v858 = vunpack.c.l.b16 %v842
        %v859 = vunpack.c.l.b16 %v843
        %v860 = vunpack.c.l.b16 %v844
        %v861 = vunpack.c.l.b16 %v845
        %v862 = vunpack.c.l.b16 %v846
        %v863 = vunpack.c.l.b16 %v847
        %v864 = vunpack.c.l.b16 %v848
        %v865 = vunpack.c.l.b16 %v849
        %v866 = vunpack.c.l.b16 %v850
        %v867 = vunpack.c.l.b16 %v851
        %v868 = vunpack.c.l.b16 %v852
        %v869 = vunpack.c.l.b16 %v853
        %v870 = vunpack.c.l.b16 %v854
        %v871 = vunpack.c.l.b16 %v855
        %v872 = vunpack.c.l.b16 %v856
        %v873 = vpack.c.b16 %v858, %v857
        %v874 = vpack.c.b16 %v860, %v859
        %v875 = vpack.c.b16 %v862, %v861
        %v876 = vpack.c.b16 %v864, %v863
        %v877 = vpack.c.b16 %v866, %v865
        %v878 = vpack.c.b16 %v868, %v867
        %v879 = vpack.c.b16 %v870, %v869
        %v880 = vpack.c.b16 %v872, %v871
        %vm881 = vsmask.f32 7424
        %v883 = vshll.u32 %v873, 16
        %v885 = vrot.slane %v883, 1
        %v886 = vshrl.u32 %v873, 16
        %v888 = vor.u32 %v886, %v885
        %v890 = vshll.u32 %v874, 16
        %v892 = vrot.slane %v890, 1
        %v893 = vsel %vm881, %v888, %v892
        %v894 = vshrl.u32 %v874, 16
        %v896 = vor.u32 %v894, %v892
        %v898 = vshll.u32 %v875, 16
        %v900 = vrot.slane %v898, 1
        %v901 = vsel %vm881, %v896, %v900
        %v902 = vshrl.u32 %v875, 16
        %v904 = vor.u32 %v902, %v900
        %v906 = vshll.u32 %v876, 16
        %v908 = vrot.slane %v906, 1
        %v909 = vsel %vm881, %v904, %v908
        %v910 = vshrl.u32 %v876, 16
        %v912 = vor.u32 %v910, %v908
        %v914 = vshll.u32 %v877, 16
        %v916 = vrot.slane %v914, 1
        %v917 = vsel %vm881, %v912, %v916
        %v918 = vshrl.u32 %v877, 16
        %v920 = vor.u32 %v918, %v916
        %v922 = vshll.u32 %v878, 16
        %v924 = vrot.slane %v922, 1
        %v925 = vsel %vm881, %v920, %v924
        %v926 = vshrl.u32 %v878, 16
        %v928 = vor.u32 %v926, %v924
        %v930 = vshll.u32 %v879, 16
        %v932 = vrot.slane %v930, 1
        %v933 = vsel %vm881, %v928, %v932
        %v934 = vshrl.u32 %v879, 16
        %v936 = vor.u32 %v934, %v932
        %v938 = vshll.u32 %v880, 16
        %v940 = vrot.slane %v938, 1
        %v941 = vsel %vm881, %v936, %v940
        %v942 = vshrl.u32 %v880, 16
        %v944 = vor.u32 %v942, %v940
        %vm945 = vcmp.ne.s16.totalorder %v885, 0
        %vm946 = vcmp.ne.s16.totalorder %v893, 0
        %vm947 = vcmp.ne.s16.totalorder %v901, 0
        %vm948 = vcmp.ne.s16.totalorder %v909, 0
        %vm949 = vcmp.ne.s16.totalorder %v917, 0
        %vm950 = vcmp.ne.s16.totalorder %v925, 0
        %vm951 = vcmp.ne.s16.totalorder %v933, 0
        %vm952 = vcmp.ne.s16.totalorder %v941, 0
        %vm953 = vcmp.ne.s16.totalorder %v944, 0
        %v954 = vsel %vm945, %v685, 0
        %v955 = vsel %vm946, %v686, 0
        %v956 = vsel %vm947, %v687, 0
        %v957 = vsel %vm948, %v688, 0
        %v958 = vsel %vm949, %v689, 0
        %v959 = vsel %vm950, %v690, 0
        %v960 = vsel %vm951, %v691, 0
        %v961 = vsel %vm952, %v692, 0
        %v962 = vsel %vm953, %v693, 0
        %v963 = vld [vmem:[%s6] sm:$0xf]
        %v964 = vld [vmem:[%s6 + $0x4] sm:$0xf]
        %vm965 = vsmask.f32 256
        %v967 = vshrl.u32 %v954, 16
        %v969 = vrot.slane %v967, 7
        %v971 = vshrl.u32 %v955, 16
        %v973 = vrot.slane %v971, 7
        %v974 = vshll.u32 %v955, 16
        %v976 = vor.u32 %v973, %v974
        %v977 = vsel %vm965, %v969, %v976
        %v979 = vshrl.u32 %v956, 16
        %v981 = vrot.slane %v979, 7
        %v982 = vshll.u32 %v956, 16
        %v984 = vor.u32 %v981, %v982
        %v985 = vsel %vm965, %v973, %v984
        %v987 = vshrl.u32 %v957, 16
        %v989 = vrot.slane %v987, 7
        %v990 = vshll.u32 %v957, 16
        %v992 = vor.u32 %v989, %v990
        %v993 = vsel %vm965, %v981, %v992
        %v995 = vshrl.u32 %v958, 16
        %v997 = vrot.slane %v995, 7
        %v998 = vshll.u32 %v958, 16
        %v1000 = vor.u32 %v997, %v998
        %v1001 = vsel %vm965, %v989, %v1000
        %v1003 = vshrl.u32 %v959, 16
        %v1005 = vrot.slane %v1003, 7
        %v1006 = vshll.u32 %v959, 16
        %v1008 = vor.u32 %v1005, %v1006
        %v1009 = vsel %vm965, %v997, %v1008
        %v1011 = vshrl.u32 %v960, 16
        %v1013 = vrot.slane %v1011, 7
        %v1014 = vshll.u32 %v960, 16
        %v1016 = vor.u32 %v1013, %v1014
        %v1017 = vsel %vm965, %v1005, %v1016
        %v1019 = vshrl.u32 %v961, 16
        %v1021 = vrot.slane %v1019, 7
        %v1022 = vshll.u32 %v961, 16
        %v1024 = vor.u32 %v1021, %v1022
        %v1025 = vsel %vm965, %v1013, %v1024
        %v1027 = vshrl.u32 %v962, 16
        %v1029 = vrot.slane %v1027, 7
        %v1030 = vshll.u32 %v962, 16
        %v1032 = vor.u32 %v1029, %v1030
        %v1033 = vsel %vm965, %v1021, %v1032
        %v1036 = vunpack.c.l.b16 %v963
        %v1037 = vunpack.c.l.b16 %v964
        %v1038 = vpack.c.b16 %v1037, %v1036
        %v1041 = vsel %vm672, %v977, 0
        %v1044 = vsel %vm672, %v985, 0
        %v1047 = vsel %vm672, %v993, 0
        %v1050 = vsel %vm672, %v1001, 0
        %v1053 = vsel %vm672, %v1009, 0
        %v1056 = vsel %vm672, %v1017, 0
        %v1059 = vsel %vm672, %v1025, 0
        %v1062 = vsel %vm672, %v1033, 0
        %1064 = vmatprep.subr.bf16.mxu0 0
        %1065 = vmatpush1.bf16.msra.mxu0 %v1038
        %1066 = vmatprep.subr.bf16.mxu0 0
        %1067 = vmatpush1.bf16.msra.mxu0 0
        %1068 = vmatprep.subr.bf16.mxu0 0
        %1069 = vmatpush1.bf16.msra.mxu0 0
        %1070 = vmatprep.subr.bf16.mxu0 0
        %1071 = vmatpush1.bf16.msra.mxu0 0
        %1072 = vmatprep.subr.bf16.mxu0 0
        %1073 = vmatpush1.bf16.msra.mxu0 0
        %1074 = vmatprep.subr.bf16.mxu0 0
        %1075 = vmatpush1.bf16.msra.mxu0 0
        %1076 = vmatprep.subr.bf16.mxu0 0
        %1077 = vmatpush1.bf16.msra.mxu0 0
        %1078 = vmatprep.subr.bf16.mxu0 0
        %1079 = vmatpush1.bf16.msra.mxu0 0
        %1080 = vmatprep.subr.bf16.mxu0 0
        %1081 = vmatpush1.bf16.msra.mxu0 0
        %1082 = vmatprep.subr.bf16.mxu0 0
        %1083 = vmatpush1.bf16.msra.mxu0 0
        %1084 = vmatprep.subr.bf16.mxu0 0
        %1085 = vmatpush1.bf16.msra.mxu0 0
        %1086 = vmatprep.subr.bf16.mxu0 0
        %1087 = vmatpush1.bf16.msra.mxu0 0
        %1088 = vmatprep.subr.bf16.mxu0 0
        %1089 = vmatpush1.bf16.msra.mxu0 0
        %1090 = vmatprep.subr.bf16.mxu0 0
        %1091 = vmatpush1.bf16.msra.mxu0 0
        %1092 = vmatprep.subr.bf16.mxu0 0
        %1093 = vmatpush1.bf16.msra.mxu0 0
        %1094 = vmatprep.subr.bf16.mxu0 0
        %1095 = vmatpush1.bf16.msra.mxu0 0
        %1096 = vmatprep.mubr.bf16.mxu0 0
        %1097 = vmatmul.mubr.bf16.gmra.mrb[0].mxu0 %v1041
        %v1098 = vpop.f32.mrb[0].mxu0
        %v1099 = vadd.f32 0.0, %v1098
        %v1100 = vpop.f32.mrb[0].mxu0
        %v1101 = vpop.f32.mrb[0].mxu0
        %v1102 = vadd.f32 0.0, %v1101
        %v1103 = vpop.f32.mrb[0].mxu0
        %1104 = vmatprep.mubr.bf16.mxu0 0
        %1105 = vmatmul.mubr.bf16.gmra.mrb[0].mxu0 %v1044
        %v1106 = vpop.f32.mrb[0].mxu0
        %v1107 = vadd.f32 0.0, %v1106
        %v1108 = vpop.f32.mrb[0].mxu0
        %v1109 = vpop.f32.mrb[0].mxu0
        %v1110 = vadd.f32 0.0, %v1109
        %v1111 = vpop.f32.mrb[0].mxu0
        %1112 = vmatprep.mubr.bf16.mxu0 0
        %1113 = vmatmul.mubr.bf16.gmra.mrb[0].mxu0 %v1047
        %v1114 = vpop.f32.mrb[0].mxu0
        %v1115 = vadd.f32 0.0, %v1114
        %v1116 = vpop.f32.mrb[0].mxu0
        %v1117 = vpop.f32.mrb[0].mxu0
        %v1118 = vadd.f32 0.0, %v1117
        %v1119 = vpop.f32.mrb[0].mxu0
        %1120 = vmatprep.mubr.bf16.mxu0 0
        %1121 = vmatmul.mubr.bf16.gmra.mrb[0].mxu0 %v1050
        %v1122 = vpop.f32.mrb[0].mxu0
        %v1123 = vadd.f32 0.0, %v1122
        %v1124 = vpop.f32.mrb[0].mxu0
        %v1125 = vpop.f32.mrb[0].mxu0
        %v1126 = vadd.f32 0.0, %v1125
        %v1127 = vpop.f32.mrb[0].mxu0
        %1128 = vmatprep.mubr.bf16.mxu0 0
        %1129 = vmatmul.mubr.bf16.gmra.mrb[0].mxu0 %v1053
        %v1130 = vpop.f32.mrb[0].mxu0
        %v1131 = vadd.f32 0.0, %v1130
        %v1132 = vpop.f32.mrb[0].mxu0
        %v1133 = vpop.f32.mrb[0].mxu0
        %v1134 = vadd.f32 0.0, %v1133
        %v1135 = vpop.f32.mrb[0].mxu0
        %1136 = vmatprep.mubr.bf16.mxu0 0
        %1137 = vmatmul.mubr.bf16.gmra.mrb[0].mxu0 %v1056
        %v1138 = vpop.f32.mrb[0].mxu0
        %v1139 = vadd.f32 0.0, %v1138
        %v1140 = vpop.f32.mrb[0].mxu0
        %v1141 = vpop.f32.mrb[0].mxu0
        %v1142 = vadd.f32 0.0, %v1141
        %v1143 = vpop.f32.mrb[0].mxu0
        %1144 = vmatprep.mubr.bf16.mxu0 0
        %1145 = vmatmul.mubr.bf16.gmra.mrb[0].mxu0 %v1059
        %v1146 = vpop.f32.mrb[0].mxu0
        %v1147 = vadd.f32 0.0, %v1146
        %v1148 = vpop.f32.mrb[0].mxu0
        %v1149 = vpop.f32.mrb[0].mxu0
        %v1150 = vadd.f32 0.0, %v1149
        %v1151 = vpop.f32.mrb[0].mxu0
        %1152 = vmatprep.mubr.bf16.mxu0 0
        %1153 = vmatmul.mubr.bf16.gmra.mrb[0].mxu0 %v1062
        %v1154 = vpop.f32.mrb[0].mxu0
        %v1155 = vadd.f32 0.0, %v1154
        %v1156 = vpop.f32.mrb[0].mxu0
        %v1157 = vpop.f32.mrb[0].mxu0
        %v1158 = vadd.f32 0.0, %v1157
        %v1159 = vpop.f32.mrb[0].mxu0
        %1160 = vdwg.mxu0
        %vm1161 = vcmask 261120
        %1162 = vst.msk [vmem:[#allocation3] sm:$0xff] %vm1161, %v1099
        %1163 = vst.msk [vmem:[#allocation3 + $0x8] sm:$0xff] %vm1161, %v1102
        %1164 = vst.msk [vmem:[#allocation3 + $0x10] sm:$0xff] %vm1161, %v1107
        %1165 = vst.msk [vmem:[#allocation3 + $0x18] sm:$0xff] %vm1161, %v1110
        %1166 = vst.msk [vmem:[#allocation3 + $0x20] sm:$0xff] %vm1161, %v1115
        %1167 = vst.msk [vmem:[#allocation3 + $0x28] sm:$0xff] %vm1161, %v1118
        %1168 = vst.msk [vmem:[#allocation3 + $0x30] sm:$0xff] %vm1161, %v1123
        %1169 = vst.msk [vmem:[#allocation3 + $0x38] sm:$0xff] %vm1161, %v1126
        %1170 = vst.msk [vmem:[#allocation3 + $0x40] sm:$0xff] %vm1161, %v1131
        %1171 = vst.msk [vmem:[#allocation3 + $0x48] sm:$0xff] %vm1161, %v1134
        %1172 = vst.msk [vmem:[#allocation3 + $0x50] sm:$0xff] %vm1161, %v1139
        %1173 = vst.msk [vmem:[#allocation3 + $0x58] sm:$0xff] %vm1161, %v1142
        %1174 = vst.msk [vmem:[#allocation3 + $0x60] sm:$0xff] %vm1161, %v1147
        %1175 = vst.msk [vmem:[#allocation3 + $0x68] sm:$0xff] %vm1161, %v1150
        %1176 = vst.msk [vmem:[#allocation3 + $0x70] sm:$0xff] %vm1161, %v1155
        %1177 = vst.msk [vmem:[#allocation3 + $0x78] sm:$0xff] %vm1161, %v1158
        %s1178 = scalar_lea.vmem %s6, 8
        %v1179 = vld [vmem:[%s1178] sm:$0xf]
        %v1180 = vld [vmem:[%s1178 + $0x4] sm:$0xf]
        %v1183 = vunpack.c.l.b16 %v1179
        %v1184 = vunpack.c.l.b16 %v1180
        %v1185 = vpack.c.b16 %v1184, %v1183
        %v1188 = vsel %vm672, %v686, 0
        %v1191 = vsel %vm672, %v687, 0
        %v1194 = vsel %vm672, %v688, 0
        %v1197 = vsel %vm672, %v689, 0
        %v1200 = vsel %vm672, %v690, 0
        %v1203 = vsel %vm672, %v691, 0
        %v1206 = vsel %vm672, %v692, 0
        %v1209 = vsel %vm672, %v693, 0
        %1211 = vmatprep.subr.bf16.mxu0 0
        %1212 = vmatpush1.bf16.msra.mxu0 %v1185
        %1213 = vmatprep.subr.bf16.mxu0 0
        %1214 = vmatpush1.bf16.msra.mxu0 0
        %1215 = vmatprep.subr.bf16.mxu0 0
        %1216 = vmatpush1.bf16.msra.mxu0 0
        %1217 = vmatprep.subr.bf16.mxu0 0
        %1218 = vmatpush1.bf16.msra.mxu0 0
        %1219 = vmatprep.subr.bf16.mxu0 0
        %1220 = vmatpush1.bf16.msra.mxu0 0
        %1221 = vmatprep.subr.bf16.mxu0 0
        %1222 = vmatpush1.bf16.msra.mxu0 0
        %1223 = vmatprep.subr.bf16.mxu0 0
        %1224 = vmatpush1.bf16.msra.mxu0 0
        %1225 = vmatprep.subr.bf16.mxu0 0
        %1226 = vmatpush1.bf16.msra.mxu0 0
        %1227 = vmatprep.subr.bf16.mxu0 0
        %1228 = vmatpush1.bf16.msra.mxu0 0
        %1229 = vmatprep.subr.bf16.mxu0 0
        %1230 = vmatpush1.bf16.msra.mxu0 0
        %1231 = vmatprep.subr.bf16.mxu0 0
        %1232 = vmatpush1.bf16.msra.mxu0 0
        %1233 = vmatprep.subr.bf16.mxu0 0
        %1234 = vmatpush1.bf16.msra.mxu0 0
        %1235 = vmatprep.subr.bf16.mxu0 0
        %1236 = vmatpush1.bf16.msra.mxu0 0
        %1237 = vmatprep.subr.bf16.mxu0 0
        %1238 = vmatpush1.bf16.msra.mxu0 0
        %1239 = vmatprep.subr.bf16.mxu0 0
        %1240 = vmatpush1.bf16.msra.mxu0 0
        %1241 = vmatprep.subr.bf16.mxu0 0
        %1242 = vmatpush1.bf16.msra.mxu0 0
        %1243 = vmatprep.mubr.bf16.mxu0 0
        %1244 = vmatmul.mubr.bf16.gmra.mrb[0].mxu0 %v1188
        %v1245 = vpop.f32.mrb[0].mxu0
        %v1246 = vadd.f32 0.0, %v1245
        %v1247 = vpop.f32.mrb[0].mxu0
        %v1248 = vpop.f32.mrb[0].mxu0
        %v1249 = vadd.f32 0.0, %v1248
        %v1250 = vpop.f32.mrb[0].mxu0
        %1251 = vmatprep.mubr.bf16.mxu0 0
        %1252 = vmatmul.mubr.bf16.gmra.mrb[0].mxu0 %v1191
        %v1253 = vpop.f32.mrb[0].mxu0
        %v1254 = vadd.f32 0.0, %v1253
        %v1255 = vpop.f32.mrb[0].mxu0
        %v1256 = vpop.f32.mrb[0].mxu0
        %v1257 = vadd.f32 0.0, %v1256
        %v1258 = vpop.f32.mrb[0].mxu0
        %1259 = vmatprep.mubr.bf16.mxu0 0
        %1260 = vmatmul.mubr.bf16.gmra.mrb[0].mxu0 %v1194
        %v1261 = vpop.f32.mrb[0].mxu0
        %v1262 = vadd.f32 0.0, %v1261
        %v1263 = vpop.f32.mrb[0].mxu0
        %v1264 = vpop.f32.mrb[0].mxu0
        %v1265 = vadd.f32 0.0, %v1264
        %v1266 = vpop.f32.mrb[0].mxu0
        %1267 = vmatprep.mubr.bf16.mxu0 0
        %1268 = vmatmul.mubr.bf16.gmra.mrb[0].mxu0 %v1197
        %v1269 = vpop.f32.mrb[0].mxu0
        %v1270 = vadd.f32 0.0, %v1269
        %v1271 = vpop.f32.mrb[0].mxu0
        %v1272 = vpop.f32.mrb[0].mxu0
        %v1273 = vadd.f32 0.0, %v1272
        %v1274 = vpop.f32.mrb[0].mxu0
        %1275 = vmatprep.mubr.bf16.mxu0 0
        %1276 = vmatmul.mubr.bf16.gmra.mrb[0].mxu0 %v1200
        %v1277 = vpop.f32.mrb[0].mxu0
        %v1278 = vadd.f32 0.0, %v1277
        %v1279 = vpop.f32.mrb[0].mxu0
        %v1280 = vpop.f32.mrb[0].mxu0
        %v1281 = vadd.f32 0.0, %v1280
        %v1282 = vpop.f32.mrb[0].mxu0
        %1283 = vmatprep.mubr.bf16.mxu0 0
        %1284 = vmatmul.mubr.bf16.gmra.mrb[0].mxu0 %v1203
        %v1285 = vpop.f32.mrb[0].mxu0
        %v1286 = vadd.f32 0.0, %v1285
        %v1287 = vpop.f32.mrb[0].mxu0
        %v1288 = vpop.f32.mrb[0].mxu0
        %v1289 = vadd.f32 0.0, %v1288
        %v1290 = vpop.f32.mrb[0].mxu0
        %1291 = vmatprep.mubr.bf16.mxu0 0
        %1292 = vmatmul.mubr.bf16.gmra.mrb[0].mxu0 %v1206
        %v1293 = vpop.f32.mrb[0].mxu0
        %v1294 = vadd.f32 0.0, %v1293
        %v1295 = vpop.f32.mrb[0].mxu0
        %v1296 = vpop.f32.mrb[0].mxu0
        %v1297 = vadd.f32 0.0, %v1296
        %v1298 = vpop.f32.mrb[0].mxu0
        %1299 = vmatprep.mubr.bf16.mxu0 0
        %1300 = vmatmul.mubr.bf16.gmra.mrb[0].mxu0 %v1209
        %v1301 = vpop.f32.mrb[0].mxu0
        %v1302 = vadd.f32 0.0, %v1301
        %v1303 = vpop.f32.mrb[0].mxu0
        %v1304 = vpop.f32.mrb[0].mxu0
        %v1305 = vadd.f32 0.0, %v1304
        %v1306 = vpop.f32.mrb[0].mxu0
        %1307 = vdwg.mxu0
        %v1308 = vld [vmem:[#allocation3] sm:$0xff]
        %v1309 = vld [vmem:[#allocation3 + $0x8] sm:$0xff]
        %v1310 = vld [vmem:[#allocation3 + $0x10] sm:$0xff]
        %v1311 = vld [vmem:[#allocation3 + $0x18] sm:$0xff]
        %v1312 = vld [vmem:[#allocation3 + $0x20] sm:$0xff]
        %v1313 = vld [vmem:[#allocation3 + $0x28] sm:$0xff]
        %v1314 = vld [vmem:[#allocation3 + $0x30] sm:$0xff]
        %v1315 = vld [vmem:[#allocation3 + $0x38] sm:$0xff]
        %v1316 = vld [vmem:[#allocation3 + $0x40] sm:$0xff]
        %v1317 = vld [vmem:[#allocation3 + $0x48] sm:$0xff]
        %v1318 = vld [vmem:[#allocation3 + $0x50] sm:$0xff]
        %v1319 = vld [vmem:[#allocation3 + $0x58] sm:$0xff]
        %v1320 = vld [vmem:[#allocation3 + $0x60] sm:$0xff]
        %v1321 = vld [vmem:[#allocation3 + $0x68] sm:$0xff]
        %v1322 = vld [vmem:[#allocation3 + $0x70] sm:$0xff]
        %v1323 = vld [vmem:[#allocation3 + $0x78] sm:$0xff]
        %v1324 = vadd.f32 %v1308, %v1246
        %v1325 = vadd.f32 %v1309, %v1249
        %v1326 = vadd.f32 %v1310, %v1254
        %v1327 = vadd.f32 %v1311, %v1257
        %v1328 = vadd.f32 %v1312, %v1262
        %v1329 = vadd.f32 %v1313, %v1265
        %v1330 = vadd.f32 %v1314, %v1270
        %v1331 = vadd.f32 %v1315, %v1273
        %v1332 = vadd.f32 %v1316, %v1278
        %v1333 = vadd.f32 %v1317, %v1281
        %v1334 = vadd.f32 %v1318, %v1286
        %v1335 = vadd.f32 %v1319, %v1289
        %v1336 = vadd.f32 %v1320, %v1294
        %v1337 = vadd.f32 %v1321, %v1297
        %v1338 = vadd.f32 %v1322, %v1302
        %v1339 = vadd.f32 %v1323, %v1305
        %1340 = vst.msk [vmem:[#allocation3] sm:$0xff] %vm1161, %v1324
        %1341 = vst.msk [vmem:[#allocation3 + $0x8] sm:$0xff] %vm1161, %v1325
        %1342 = vst.msk [vmem:[#allocation3 + $0x10] sm:$0xff] %vm1161, %v1326
        %1343 = vst.msk [vmem:[#allocation3 + $0x18] sm:$0xff] %vm1161, %v1327
        %1344 = vst.msk [vmem:[#allocation3 + $0x20] sm:$0xff] %vm1161, %v1328
        %1345 = vst.msk [vmem:[#allocation3 + $0x28] sm:$0xff] %vm1161, %v1329
        %1346 = vst.msk [vmem:[#allocation3 + $0x30] sm:$0xff] %vm1161, %v1330
        %1347 = vst.msk [vmem:[#allocation3 + $0x38] sm:$0xff] %vm1161, %v1331
        %1348 = vst.msk [vmem:[#allocation3 + $0x40] sm:$0xff] %vm1161, %v1332
        %1349 = vst.msk [vmem:[#allocation3 + $0x48] sm:$0xff] %vm1161, %v1333
        %1350 = vst.msk [vmem:[#allocation3 + $0x50] sm:$0xff] %vm1161, %v1334
        %1351 = vst.msk [vmem:[#allocation3 + $0x58] sm:$0xff] %vm1161, %v1335
        %1352 = vst.msk [vmem:[#allocation3 + $0x60] sm:$0xff] %vm1161, %v1336
        %1353 = vst.msk [vmem:[#allocation3 + $0x68] sm:$0xff] %vm1161, %v1337
        %1354 = vst.msk [vmem:[#allocation3 + $0x70] sm:$0xff] %vm1161, %v1338
        %1355 = vst.msk [vmem:[#allocation3 + $0x78] sm:$0xff] %vm1161, %v1339
        %v1356 = vsel %vm729, 1, 0
        %v1357 = vsel %vm730, 1, 0
        %v1358 = vsel %vm731, 1, 0
        %v1359 = vsel %vm732, 1, 0
        %v1360 = vsel %vm733, 1, 0
        %v1361 = vsel %vm734, 1, 0
        %v1362 = vsel %vm735, 1, 0
        %v1363 = vsel %vm736, 1, 0
        %v1364 = vsel %vm737, 1, 0
        %v1365 = vsel %vm738, 1, 0
        %v1366 = vsel %vm739, 1, 0
        %v1367 = vsel %vm740, 1, 0
        %v1368 = vsel %vm741, 1, 0
        %v1369 = vsel %vm742, 1, 0
        %v1370 = vsel %vm743, 1, 0
        %v1371 = vsel %vm744, 1, 0
        %1372 = vset.pattern.permute.xlu0 0
        %1373 = vperm.xlu0 %1372, %v1356
        %v1374 = vpop.permute.xlu0 %1373
        %1375 = vset.pattern.permute.xlu0 0
        %1376 = vperm.xlu0 %1375, %v1357
        %v1377 = vpop.permute.xlu0 %1376
        %1378 = vset.pattern.permute.xlu0 0
        %1379 = vperm.xlu0 %1378, %v1358
        %v1380 = vpop.permute.xlu0 %1379
        %1381 = vset.pattern.permute.xlu0 0
        %1382 = vperm.xlu0 %1381, %v1359
        %v1383 = vpop.permute.xlu0 %1382
        %1384 = vset.pattern.permute.xlu0 0
        %1385 = vperm.xlu0 %1384, %v1360
        %v1386 = vpop.permute.xlu0 %1385
        %1387 = vset.pattern.permute.xlu0 0
        %1388 = vperm.xlu0 %1387, %v1361
        %v1389 = vpop.permute.xlu0 %1388
        %1390 = vset.pattern.permute.xlu0 0
        %1391 = vperm.xlu0 %1390, %v1362
        %v1392 = vpop.permute.xlu0 %1391
        %1393 = vset.pattern.permute.xlu0 0
        %1394 = vperm.xlu0 %1393, %v1363
        %v1395 = vpop.permute.xlu0 %1394
        %1396 = vset.pattern.permute.xlu0 0
        %1397 = vperm.xlu0 %1396, %v1364
        %v1398 = vpop.permute.xlu0 %1397
        %1399 = vset.pattern.permute.xlu0 0
        %1400 = vperm.xlu0 %1399, %v1365
        %v1401 = vpop.permute.xlu0 %1400
        %1402 = vset.pattern.permute.xlu0 0
        %1403 = vperm.xlu0 %1402, %v1366
        %v1404 = vpop.permute.xlu0 %1403
        %1405 = vset.pattern.permute.xlu0 0
        %1406 = vperm.xlu0 %1405, %v1367
        %v1407 = vpop.permute.xlu0 %1406
        %1408 = vset.pattern.permute.xlu0 0
        %1409 = vperm.xlu0 %1408, %v1368
        %v1410 = vpop.permute.xlu0 %1409
        %1411 = vset.pattern.permute.xlu0 0
        %1412 = vperm.xlu0 %1411, %v1369
        %v1413 = vpop.permute.xlu0 %1412
        %1414 = vset.pattern.permute.xlu0 0
        %1415 = vperm.xlu0 %1414, %v1370
        %v1416 = vpop.permute.xlu0 %1415
        %1417 = vset.pattern.permute.xlu0 0
        %1418 = vperm.xlu0 %1417, %v1371
        %v1419 = vpop.permute.xlu0 %1418
        %vm1420 = vcmp.eq.s32.totalorder %v1374, 1
        %vm1421 = vcmp.eq.s32.totalorder %v1377, 1
        %vm1422 = vcmp.eq.s32.totalorder %v1380, 1
        %vm1423 = vcmp.eq.s32.totalorder %v1383, 1
        %vm1424 = vcmp.eq.s32.totalorder %v1386, 1
        %vm1425 = vcmp.eq.s32.totalorder %v1389, 1
        %vm1426 = vcmp.eq.s32.totalorder %v1392, 1
        %vm1427 = vcmp.eq.s32.totalorder %v1395, 1
        %vm1428 = vcmp.eq.s32.totalorder %v1398, 1
        %vm1429 = vcmp.eq.s32.totalorder %v1401, 1
        %vm1430 = vcmp.eq.s32.totalorder %v1404, 1
        %vm1431 = vcmp.eq.s32.totalorder %v1407, 1
        %vm1432 = vcmp.eq.s32.totalorder %v1410, 1
        %vm1433 = vcmp.eq.s32.totalorder %v1413, 1
        %vm1434 = vcmp.eq.s32.totalorder %v1416, 1
        %vm1435 = vcmp.eq.s32.totalorder %v1419, 1
        %vm1436 = vmpackc.low %vm1420, %vm1420
        %vm1437 = vmpackc.low %vm1421, %vm1421
        %vm1438 = vmpackc.low %vm1422, %vm1422
        %vm1439 = vmpackc.low %vm1423, %vm1423
        %vm1440 = vmpackc.low %vm1424, %vm1424
        %vm1441 = vmpackc.low %vm1425, %vm1425
        %vm1442 = vmpackc.low %vm1426, %vm1426
        %vm1443 = vmpackc.low %vm1427, %vm1427
        %vm1444 = vmpackc.low %vm1428, %vm1428
        %vm1445 = vmpackc.low %vm1429, %vm1429
        %vm1446 = vmpackc.low %vm1430, %vm1430
        %vm1447 = vmpackc.low %vm1431, %vm1431
        %vm1448 = vmpackc.low %vm1432, %vm1432
        %vm1449 = vmpackc.low %vm1433, %vm1433
        %vm1450 = vmpackc.low %vm1434, %vm1434
        %vm1451 = vmpackc.low %vm1435, %vm1435
        %v1452 = vsel %vm1436, 65537, 0
        %v1453 = vsel %vm1437, 65537, 0
        %v1454 = vsel %vm1438, 65537, 0
        %v1455 = vsel %vm1439, 65537, 0
        %v1456 = vsel %vm1440, 65537, 0
        %v1457 = vsel %vm1441, 65537, 0
        %v1458 = vsel %vm1442, 65537, 0
        %v1459 = vsel %vm1443, 65537, 0
        %v1460 = vsel %vm1444, 65537, 0
        %v1461 = vsel %vm1445, 65537, 0
        %v1462 = vsel %vm1446, 65537, 0
        %v1463 = vsel %vm1447, 65537, 0
        %v1464 = vsel %vm1448, 65537, 0
        %v1465 = vsel %vm1449, 65537, 0
        %v1466 = vsel %vm1450, 65537, 0
        %v1467 = vsel %vm1451, 65537, 0
        %v1468 = vunpack.c.l.b16 %v1452
        %v1469 = vunpack.c.l.b16 %v1453
        %v1470 = vunpack.c.l.b16 %v1454
        %v1471 = vunpack.c.l.b16 %v1455
        %v1472 = vunpack.c.l.b16 %v1456
        %v1473 = vunpack.c.l.b16 %v1457
        %v1474 = vunpack.c.l.b16 %v1458
        %v1475 = vunpack.c.l.b16 %v1459
        %v1476 = vunpack.c.l.b16 %v1460
        %v1477 = vunpack.c.l.b16 %v1461
        %v1478 = vunpack.c.l.b16 %v1462
        %v1479 = vunpack.c.l.b16 %v1463
        %v1480 = vunpack.c.l.b16 %v1464
        %v1481 = vunpack.c.l.b16 %v1465
        %v1482 = vunpack.c.l.b16 %v1466
        %v1483 = vunpack.c.l.b16 %v1467
        %v1484 = vpack.c.b16 %v1469, %v1468
        %v1485 = vpack.c.b16 %v1471, %v1470
        %v1486 = vpack.c.b16 %v1473, %v1472
        %v1487 = vpack.c.b16 %v1475, %v1474
        %v1488 = vpack.c.b16 %v1477, %v1476
        %v1489 = vpack.c.b16 %v1479, %v1478
        %v1490 = vpack.c.b16 %v1481, %v1480
        %v1491 = vpack.c.b16 %v1483, %v1482
        %v1493 = vshrl.u32 %v1484, 16
        %v1495 = vrot.slane %v1493, 7
        %v1496 = vshll.u32 %v1484, 16
        %v1498 = vor.u32 %v1495, %v1496
        %v1500 = vshrl.u32 %v1485, 16
        %v1502 = vrot.slane %v1500, 7
        %v1503 = vshll.u32 %v1485, 16
        %v1505 = vor.u32 %v1502, %v1503
        %v1506 = vsel %vm965, %v1495, %v1505
        %v1508 = vshrl.u32 %v1486, 16
        %v1510 = vrot.slane %v1508, 7
        %v1511 = vshll.u32 %v1486, 16
        %v1513 = vor.u32 %v1510, %v1511
        %v1514 = vsel %vm965, %v1502, %v1513
        %v1516 = vshrl.u32 %v1487, 16
        %v1518 = vrot.slane %v1516, 7
        %v1519 = vshll.u32 %v1487, 16
        %v1521 = vor.u32 %v1518, %v1519
        %v1522 = vsel %vm965, %v1510, %v1521
        %v1524 = vshrl.u32 %v1488, 16
        %v1526 = vrot.slane %v1524, 7
        %v1527 = vshll.u32 %v1488, 16
        %v1529 = vor.u32 %v1526, %v1527
        %v1530 = vsel %vm965, %v1518, %v1529
        %v1532 = vshrl.u32 %v1489, 16
        %v1534 = vrot.slane %v1532, 7
        %v1535 = vshll.u32 %v1489, 16
        %v1537 = vor.u32 %v1534, %v1535
        %v1538 = vsel %vm965, %v1526, %v1537
        %v1540 = vshrl.u32 %v1490, 16
        %v1542 = vrot.slane %v1540, 7
        %v1543 = vshll.u32 %v1490, 16
        %v1545 = vor.u32 %v1542, %v1543
        %v1546 = vsel %vm965, %v1534, %v1545
        %v1548 = vshrl.u32 %v1491, 16
        %v1550 = vrot.slane %v1548, 7
        %v1551 = vshll.u32 %v1491, 16
        %v1553 = vor.u32 %v1550, %v1551
        %v1554 = vsel %vm965, %v1542, %v1553
        %vm1555 = vcmp.ne.s16.totalorder %v1498, 0
        %vm1556 = vcmp.ne.s16.totalorder %v1506, 0
        %vm1557 = vcmp.ne.s16.totalorder %v1514, 0
        %vm1558 = vcmp.ne.s16.totalorder %v1522, 0
        %vm1559 = vcmp.ne.s16.totalorder %v1530, 0
        %vm1560 = vcmp.ne.s16.totalorder %v1538, 0
        %vm1561 = vcmp.ne.s16.totalorder %v1546, 0
        %vm1562 = vcmp.ne.s16.totalorder %v1554, 0
        %vm1563 = vcmp.ne.s16.totalorder %v1550, 0
        %v1564 = vsel %vm1555, %v686, 0
        %v1565 = vsel %vm1556, %v687, 0
        %v1566 = vsel %vm1557, %v688, 0
        %v1567 = vsel %vm1558, %v689, 0
        %v1568 = vsel %vm1559, %v690, 0
        %v1569 = vsel %vm1560, %v691, 0
        %v1570 = vsel %vm1561, %v692, 0
        %v1571 = vsel %vm1562, %v693, 0
        %v1572 = vsel %vm1563, %v694, 0
        %s1573 = scalar_lea.vmem %s6, 16
        %v1574 = vld [vmem:[%s1573] sm:$0xf]
        %v1575 = vld [vmem:[%s1573 + $0x4] sm:$0xf]
        %v1577 = vshrl.u32 %v1564, 16
        %v1579 = vshll.u32 %v1564, 16
        %v1581 = vrot.slane %v1579, 1
        %v1582 = vor.u32 %v1577, %v1581
        %v1584 = vshll.u32 %v1565, 16
        %v1586 = vrot.slane %v1584, 1
        %v1587 = vsel %vm881, %v1582, %v1586
        %v1588 = vshrl.u32 %v1565, 16
        %v1590 = vor.u32 %v1588, %v1586
        %v1592 = vshll.u32 %v1566, 16
        %v1594 = vrot.slane %v1592, 1
        %v1595 = vsel %vm881, %v1590, %v1594
        %v1596 = vshrl.u32 %v1566, 16
        %v1598 = vor.u32 %v1596, %v1594
        %v1600 = vshll.u32 %v1567, 16
        %v1602 = vrot.slane %v1600, 1
        %v1603 = vsel %vm881, %v1598, %v1602
        %v1604 = vshrl.u32 %v1567, 16
        %v1606 = vor.u32 %v1604, %v1602
        %v1608 = vshll.u32 %v1568, 16
        %v1610 = vrot.slane %v1608, 1
        %v1611 = vsel %vm881, %v1606, %v1610
        %v1612 = vshrl.u32 %v1568, 16
        %v1614 = vor.u32 %v1612, %v1610
        %v1616 = vshll.u32 %v1569, 16
        %v1618 = vrot.slane %v1616, 1
        %v1619 = vsel %vm881, %v1614, %v1618
        %v1620 = vshrl.u32 %v1569, 16
        %v1622 = vor.u32 %v1620, %v1618
        %v1624 = vshll.u32 %v1570, 16
        %v1626 = vrot.slane %v1624, 1
        %v1627 = vsel %vm881, %v1622, %v1626
        %v1628 = vshrl.u32 %v1570, 16
        %v1630 = vor.u32 %v1628, %v1626
        %v1632 = vshll.u32 %v1571, 16
        %v1634 = vrot.slane %v1632, 1
        %v1635 = vsel %vm881, %v1630, %v1634
        %v1636 = vshrl.u32 %v1571, 16
        %v1638 = vor.u32 %v1636, %v1634
        %v1640 = vshll.u32 %v1572, 16
        %v1642 = vrot.slane %v1640, 1
        %v1643 = vsel %vm881, %v1638, %v1642
        %v1646 = vunpack.c.l.b16 %v1574
        %v1647 = vunpack.c.l.b16 %v1575
        %v1648 = vpack.c.b16 %v1647, %v1646
        %v1651 = vsel %vm672, %v1587, 0
        %v1654 = vsel %vm672, %v1595, 0
        %v1657 = vsel %vm672, %v1603, 0
        %v1660 = vsel %vm672, %v1611, 0
        %v1663 = vsel %vm672, %v1619, 0
        %v1666 = vsel %vm672, %v1627, 0
        %v1669 = vsel %vm672, %v1635, 0
        %v1672 = vsel %vm672, %v1643, 0
        %1674 = vmatprep.subr.bf16.mxu0 0
        %1675 = vmatpush1.bf16.msra.mxu0 %v1648
        %1676 = vmatprep.subr.bf16.mxu0 0
        %1677 = vmatpush1.bf16.msra.mxu0 0
        %1678 = vmatprep.subr.bf16.mxu0 0
        %1679 = vmatpush1.bf16.msra.mxu0 0
        %1680 = vmatprep.subr.bf16.mxu0 0
        %1681 = vmatpush1.bf16.msra.mxu0 0
        %1682 = vmatprep.subr.bf16.mxu0 0
        %1683 = vmatpush1.bf16.msra.mxu0 0
        %1684 = vmatprep.subr.bf16.mxu0 0
        %1685 = vmatpush1.bf16.msra.mxu0 0
        %1686 = vmatprep.subr.bf16.mxu0 0
        %1687 = vmatpush1.bf16.msra.mxu0 0
        %1688 = vmatprep.subr.bf16.mxu0 0
        %1689 = vmatpush1.bf16.msra.mxu0 0
        %1690 = vmatprep.subr.bf16.mxu0 0
        %1691 = vmatpush1.bf16.msra.mxu0 0
        %1692 = vmatprep.subr.bf16.mxu0 0
        %1693 = vmatpush1.bf16.msra.mxu0 0
        %1694 = vmatprep.subr.bf16.mxu0 0
        %1695 = vmatpush1.bf16.msra.mxu0 0
        %1696 = vmatprep.subr.bf16.mxu0 0
        %1697 = vmatpush1.bf16.msra.mxu0 0
        %1698 = vmatprep.subr.bf16.mxu0 0
        %1699 = vmatpush1.bf16.msra.mxu0 0
        %1700 = vmatprep.subr.bf16.mxu0 0
        %1701 = vmatpush1.bf16.msra.mxu0 0
        %1702 = vmatprep.subr.bf16.mxu0 0
        %1703 = vmatpush1.bf16.msra.mxu0 0
        %1704 = vmatprep.subr.bf16.mxu0 0
        %1705 = vmatpush1.bf16.msra.mxu0 0
        %1706 = vmatprep.mubr.bf16.mxu0 0
        %1707 = vmatmul.mubr.bf16.gmra.mrb[0].mxu0 %v1651
        %v1708 = vpop.f32.mrb[0].mxu0
        %v1709 = vadd.f32 0.0, %v1708
        %v1710 = vpop.f32.mrb[0].mxu0
        %v1711 = vpop.f32.mrb[0].mxu0
        %v1712 = vadd.f32 0.0, %v1711
        %v1713 = vpop.f32.mrb[0].mxu0
        %1714 = vmatprep.mubr.bf16.mxu0 0
        %1715 = vmatmul.mubr.bf16.gmra.mrb[0].mxu0 %v1654
        %v1716 = vpop.f32.mrb[0].mxu0
        %v1717 = vadd.f32 0.0, %v1716
        %v1718 = vpop.f32.mrb[0].mxu0
        %v1719 = vpop.f32.mrb[0].mxu0
        %v1720 = vadd.f32 0.0, %v1719
        %v1721 = vpop.f32.mrb[0].mxu0
        %1722 = vmatprep.mubr.bf16.mxu0 0
        %1723 = vmatmul.mubr.bf16.gmra.mrb[0].mxu0 %v1657
        %v1724 = vpop.f32.mrb[0].mxu0
        %v1725 = vadd.f32 0.0, %v1724
        %v1726 = vpop.f32.mrb[0].mxu0
        %v1727 = vpop.f32.mrb[0].mxu0
        %v1728 = vadd.f32 0.0, %v1727
        %v1729 = vpop.f32.mrb[0].mxu0
        %1730 = vmatprep.mubr.bf16.mxu0 0
        %1731 = vmatmul.mubr.bf16.gmra.mrb[0].mxu0 %v1660
        %v1732 = vpop.f32.mrb[0].mxu0
        %v1733 = vadd.f32 0.0, %v1732
        %v1734 = vpop.f32.mrb[0].mxu0
        %v1735 = vpop.f32.mrb[0].mxu0
        %v1736 = vadd.f32 0.0, %v1735
        %v1737 = vpop.f32.mrb[0].mxu0
        %1738 = vmatprep.mubr.bf16.mxu0 0
        %1739 = vmatmul.mubr.bf16.gmra.mrb[0].mxu0 %v1663
        %v1740 = vpop.f32.mrb[0].mxu0
        %v1741 = vadd.f32 0.0, %v1740
        %v1742 = vpop.f32.mrb[0].mxu0
        %v1743 = vpop.f32.mrb[0].mxu0
        %v1744 = vadd.f32 0.0, %v1743
        %v1745 = vpop.f32.mrb[0].mxu0
        %1746 = vmatprep.mubr.bf16.mxu0 0
        %1747 = vmatmul.mubr.bf16.gmra.mrb[0].mxu0 %v1666
        %v1748 = vpop.f32.mrb[0].mxu0
        %v1749 = vadd.f32 0.0, %v1748
        %v1750 = vpop.f32.mrb[0].mxu0
        %v1751 = vpop.f32.mrb[0].mxu0
        %v1752 = vadd.f32 0.0, %v1751
        %v1753 = vpop.f32.mrb[0].mxu0
        %1754 = vmatprep.mubr.bf16.mxu0 0
        %1755 = vmatmul.mubr.bf16.gmra.mrb[0].mxu0 %v1669
        %v1756 = vpop.f32.mrb[0].mxu0
        %v1757 = vadd.f32 0.0, %v1756
        %v1758 = vpop.f32.mrb[0].mxu0
        %v1759 = vpop.f32.mrb[0].mxu0
        %v1760 = vadd.f32 0.0, %v1759
        %v1761 = vpop.f32.mrb[0].mxu0
        %1762 = vmatprep.mubr.bf16.mxu0 0
        %1763 = vmatmul.mubr.bf16.gmra.mrb[0].mxu0 %v1672
        %v1764 = vpop.f32.mrb[0].mxu0
        %v1765 = vadd.f32 0.0, %v1764
        %v1766 = vpop.f32.mrb[0].mxu0
        %v1767 = vpop.f32.mrb[0].mxu0
        %v1768 = vadd.f32 0.0, %v1767
        %v1769 = vpop.f32.mrb[0].mxu0
        %1770 = vdwg.mxu0
        %v1771 = vld [vmem:[#allocation3] sm:$0xff]
        %v1772 = vld [vmem:[#allocation3 + $0x8] sm:$0xff]
        %v1773 = vld [vmem:[#allocation3 + $0x10] sm:$0xff]
        %v1774 = vld [vmem:[#allocation3 + $0x18] sm:$0xff]
        %v1775 = vld [vmem:[#allocation3 + $0x20] sm:$0xff]
        %v1776 = vld [vmem:[#allocation3 + $0x28] sm:$0xff]
        %v1777 = vld [vmem:[#allocation3 + $0x30] sm:$0xff]
        %v1778 = vld [vmem:[#allocation3 + $0x38] sm:$0xff]
        %v1779 = vld [vmem:[#allocation3 + $0x40] sm:$0xff]
        %v1780 = vld [vmem:[#allocation3 + $0x48] sm:$0xff]
        %v1781 = vld [vmem:[#allocation3 + $0x50] sm:$0xff]
        %v1782 = vld [vmem:[#allocation3 + $0x58] sm:$0xff]
        %v1783 = vld [vmem:[#allocation3 + $0x60] sm:$0xff]
        %v1784 = vld [vmem:[#allocation3 + $0x68] sm:$0xff]
        %v1785 = vld [vmem:[#allocation3 + $0x70] sm:$0xff]
        %v1786 = vld [vmem:[#allocation3 + $0x78] sm:$0xff]
        %v1787 = vadd.f32 %v1771, %v1709
        %v1788 = vadd.f32 %v1772, %v1712
        %v1789 = vadd.f32 %v1773, %v1717
        %v1790 = vadd.f32 %v1774, %v1720
        %v1791 = vadd.f32 %v1775, %v1725
        %v1792 = vadd.f32 %v1776, %v1728
        %v1793 = vadd.f32 %v1777, %v1733
        %v1794 = vadd.f32 %v1778, %v1736
        %v1795 = vadd.f32 %v1779, %v1741
        %v1796 = vadd.f32 %v1780, %v1744
        %v1797 = vadd.f32 %v1781, %v1749
        %v1798 = vadd.f32 %v1782, %v1752
        %v1799 = vadd.f32 %v1783, %v1757
        %v1800 = vadd.f32 %v1784, %v1760
        %v1801 = vadd.f32 %v1785, %v1765
        %v1802 = vadd.f32 %v1786, %v1768
        %1803 = vst.msk [vmem:[#allocation3] sm:$0xff] %vm1161, %v1787
        %1804 = vst.msk [vmem:[#allocation3 + $0x8] sm:$0xff] %vm1161, %v1788
        %1805 = vst.msk [vmem:[#allocation3 + $0x10] sm:$0xff] %vm1161, %v1789
        %1806 = vst.msk [vmem:[#allocation3 + $0x18] sm:$0xff] %vm1161, %v1790
        %1807 = vst.msk [vmem:[#allocation3 + $0x20] sm:$0xff] %vm1161, %v1791
        %1808 = vst.msk [vmem:[#allocation3 + $0x28] sm:$0xff] %vm1161, %v1792
        %1809 = vst.msk [vmem:[#allocation3 + $0x30] sm:$0xff] %vm1161, %v1793
        %1810 = vst.msk [vmem:[#allocation3 + $0x38] sm:$0xff] %vm1161, %v1794
        %1811 = vst.msk [vmem:[#allocation3 + $0x40] sm:$0xff] %vm1161, %v1795
        %1812 = vst.msk [vmem:[#allocation3 + $0x48] sm:$0xff] %vm1161, %v1796
        %1813 = vst.msk [vmem:[#allocation3 + $0x50] sm:$0xff] %vm1161, %v1797
        %1814 = vst.msk [vmem:[#allocation3 + $0x58] sm:$0xff] %vm1161, %v1798
        %1815 = vst.msk [vmem:[#allocation3 + $0x60] sm:$0xff] %vm1161, %v1799
        %1816 = vst.msk [vmem:[#allocation3 + $0x68] sm:$0xff] %vm1161, %v1800
        %1817 = vst.msk [vmem:[#allocation3 + $0x70] sm:$0xff] %vm1161, %v1801
        %1818 = vst.msk [vmem:[#allocation3 + $0x78] sm:$0xff] %vm1161, %v1802
        %v1819 = vsel %vm945, %v686, 0
        %v1820 = vsel %vm946, %v687, 0
        %v1821 = vsel %vm947, %v688, 0
        %v1822 = vsel %vm948, %v689, 0
        %v1823 = vsel %vm949, %v690, 0
        %v1824 = vsel %vm950, %v691, 0
        %v1825 = vsel %vm951, %v692, 0
        %v1826 = vsel %vm952, %v693, 0
        %v1827 = vsel %vm953, %v694, 0
        %s1828 = scalar_lea.vmem %s6, 24
        %v1829 = vld [vmem:[%s1828] sm:$0xf]
        %v1830 = vld [vmem:[%s1828 + $0x4] sm:$0xf]
        %v1832 = vshrl.u32 %v1819, 16
        %v1834 = vrot.slane %v1832, 7
        %v1836 = vshrl.u32 %v1820, 16
        %v1838 = vrot.slane %v1836, 7
        %v1839 = vshll.u32 %v1820, 16
        %v1841 = vor.u32 %v1838, %v1839
        %v1842 = vsel %vm965, %v1834, %v1841
        %v1844 = vshrl.u32 %v1821, 16
        %v1846 = vrot.slane %v1844, 7
        %v1847 = vshll.u32 %v1821, 16
        %v1849 = vor.u32 %v1846, %v1847
        %v1850 = vsel %vm965, %v1838, %v1849
        %v1852 = vshrl.u32 %v1822, 16
        %v1854 = vrot.slane %v1852, 7
        %v1855 = vshll.u32 %v1822, 16
        %v1857 = vor.u32 %v1854, %v1855
        %v1858 = vsel %vm965, %v1846, %v1857
        %v1860 = vshrl.u32 %v1823, 16
        %v1862 = vrot.slane %v1860, 7
        %v1863 = vshll.u32 %v1823, 16
        %v1865 = vor.u32 %v1862, %v1863
        %v1866 = vsel %vm965, %v1854, %v1865
        %v1868 = vshrl.u32 %v1824, 16
        %v1870 = vrot.slane %v1868, 7
        %v1871 = vshll.u32 %v1824, 16
        %v1873 = vor.u32 %v1870, %v1871
        %v1874 = vsel %vm965, %v1862, %v1873
        %v1876 = vshrl.u32 %v1825, 16
        %v1878 = vrot.slane %v1876, 7
        %v1879 = vshll.u32 %v1825, 16
        %v1881 = vor.u32 %v1878, %v1879
        %v1882 = vsel %vm965, %v1870, %v1881
        %v1884 = vshrl.u32 %v1826, 16
        %v1886 = vrot.slane %v1884, 7
        %v1887 = vshll.u32 %v1826, 16
        %v1889 = vor.u32 %v1886, %v1887
        %v1890 = vsel %vm965, %v1878, %v1889
        %v1892 = vshrl.u32 %v1827, 16
        %v1894 = vrot.slane %v1892, 7
        %v1895 = vshll.u32 %v1827, 16
        %v1897 = vor.u32 %v1894, %v1895
        %v1898 = vsel %vm965, %v1886, %v1897
        %v1901 = vunpack.c.l.b16 %v1829
        %v1902 = vunpack.c.l.b16 %v1830
        %v1903 = vpack.c.b16 %v1902, %v1901
        %v1906 = vsel %vm672, %v1842, 0
        %v1909 = vsel %vm672, %v1850, 0
        %v1912 = vsel %vm672, %v1858, 0
        %v1915 = vsel %vm672, %v1866, 0
        %v1918 = vsel %vm672, %v1874, 0
        %v1921 = vsel %vm672, %v1882, 0
        %v1924 = vsel %vm672, %v1890, 0
        %v1927 = vsel %vm672, %v1898, 0
        %1929 = vmatprep.subr.bf16.mxu0 0
        %1930 = vmatpush1.bf16.msra.mxu0 %v1903
        %1931 = vmatprep.subr.bf16.mxu0 0
        %1932 = vmatpush1.bf16.msra.mxu0 0
        %1933 = vmatprep.subr.bf16.mxu0 0
        %1934 = vmatpush1.bf16.msra.mxu0 0
        %1935 = vmatprep.subr.bf16.mxu0 0
        %1936 = vmatpush1.bf16.msra.mxu0 0
        %1937 = vmatprep.subr.bf16.mxu0 0
        %1938 = vmatpush1.bf16.msra.mxu0 0
        %1939 = vmatprep.subr.bf16.mxu0 0
        %1940 = vmatpush1.bf16.msra.mxu0 0
        %1941 = vmatprep.subr.bf16.mxu0 0
        %1942 = vmatpush1.bf16.msra.mxu0 0
        %1943 = vmatprep.subr.bf16.mxu0 0
        %1944 = vmatpush1.bf16.msra.mxu0 0
        %1945 = vmatprep.subr.bf16.mxu0 0
        %1946 = vmatpush1.bf16.msra.mxu0 0
        %1947 = vmatprep.subr.bf16.mxu0 0
        %1948 = vmatpush1.bf16.msra.mxu0 0
        %1949 = vmatprep.subr.bf16.mxu0 0
        %1950 = vmatpush1.bf16.msra.mxu0 0
        %1951 = vmatprep.subr.bf16.mxu0 0
        %1952 = vmatpush1.bf16.msra.mxu0 0
        %1953 = vmatprep.subr.bf16.mxu0 0
        %1954 = vmatpush1.bf16.msra.mxu0 0
        %1955 = vmatprep.subr.bf16.mxu0 0
        %1956 = vmatpush1.bf16.msra.mxu0 0
        %1957 = vmatprep.subr.bf16.mxu0 0
        %1958 = vmatpush1.bf16.msra.mxu0 0
        %1959 = vmatprep.subr.bf16.mxu0 0
        %1960 = vmatpush1.bf16.msra.mxu0 0
        %1961 = vmatprep.mubr.bf16.mxu0 0
        %1962 = vmatmul.mubr.bf16.gmra.mrb[0].mxu0 %v1906
        %v1963 = vpop.f32.mrb[0].mxu0
        %v1964 = vadd.f32 0.0, %v1963
        %v1965 = vpop.f32.mrb[0].mxu0
        %v1966 = vpop.f32.mrb[0].mxu0
        %v1967 = vadd.f32 0.0, %v1966
        %v1968 = vpop.f32.mrb[0].mxu0
        %1969 = vmatprep.mubr.bf16.mxu0 0
        %1970 = vmatmul.mubr.bf16.gmra.mrb[0].mxu0 %v1909
        %v1971 = vpop.f32.mrb[0].mxu0
        %v1972 = vadd.f32 0.0, %v1971
        %v1973 = vpop.f32.mrb[0].mxu0
        %v1974 = vpop.f32.mrb[0].mxu0
        %v1975 = vadd.f32 0.0, %v1974
        %v1976 = vpop.f32.mrb[0].mxu0
        %1977 = vmatprep.mubr.bf16.mxu0 0
        %1978 = vmatmul.mubr.bf16.gmra.mrb[0].mxu0 %v1912
        %v1979 = vpop.f32.mrb[0].mxu0
        %v1980 = vadd.f32 0.0, %v1979
        %v1981 = vpop.f32.mrb[0].mxu0
        %v1982 = vpop.f32.mrb[0].mxu0
        %v1983 = vadd.f32 0.0, %v1982
        %v1984 = vpop.f32.mrb[0].mxu0
        %1985 = vmatprep.mubr.bf16.mxu0 0
        %1986 = vmatmul.mubr.bf16.gmra.mrb[0].mxu0 %v1915
        %v1987 = vpop.f32.mrb[0].mxu0
        %v1988 = vadd.f32 0.0, %v1987
        %v1989 = vpop.f32.mrb[0].mxu0
        %v1990 = vpop.f32.mrb[0].mxu0
        %v1991 = vadd.f32 0.0, %v1990
        %v1992 = vpop.f32.mrb[0].mxu0
        %1993 = vmatprep.mubr.bf16.mxu0 0
        %1994 = vmatmul.mubr.bf16.gmra.mrb[0].mxu0 %v1918
        %v1995 = vpop.f32.mrb[0].mxu0
        %v1996 = vadd.f32 0.0, %v1995
        %v1997 = vpop.f32.mrb[0].mxu0
        %v1998 = vpop.f32.mrb[0].mxu0
        %v1999 = vadd.f32 0.0, %v1998
        %v2000 = vpop.f32.mrb[0].mxu0
        %2001 = vmatprep.mubr.bf16.mxu0 0
        %2002 = vmatmul.mubr.bf16.gmra.mrb[0].mxu0 %v1921
        %v2003 = vpop.f32.mrb[0].mxu0
        %v2004 = vadd.f32 0.0, %v2003
        %v2005 = vpop.f32.mrb[0].mxu0
        %v2006 = vpop.f32.mrb[0].mxu0
        %v2007 = vadd.f32 0.0, %v2006
        %v2008 = vpop.f32.mrb[0].mxu0
        %2009 = vmatprep.mubr.bf16.mxu0 0
        %2010 = vmatmul.mubr.bf16.gmra.mrb[0].mxu0 %v1924
        %v2011 = vpop.f32.mrb[0].mxu0
        %v2012 = vadd.f32 0.0, %v2011
        %v2013 = vpop.f32.mrb[0].mxu0
        %v2014 = vpop.f32.mrb[0].mxu0
        %v2015 = vadd.f32 0.0, %v2014
        %v2016 = vpop.f32.mrb[0].mxu0
        %2017 = vmatprep.mubr.bf16.mxu0 0
        %2018 = vmatmul.mubr.bf16.gmra.mrb[0].mxu0 %v1927
        %v2019 = vpop.f32.mrb[0].mxu0
        %v2020 = vadd.f32 0.0, %v2019
        %v2021 = vpop.f32.mrb[0].mxu0
        %v2022 = vpop.f32.mrb[0].mxu0
        %v2023 = vadd.f32 0.0, %v2022
        %v2024 = vpop.f32.mrb[0].mxu0
        %2025 = vdwg.mxu0
        %v2026 = vld [vmem:[#allocation3] sm:$0xff]
        %v2027 = vld [vmem:[#allocation3 + $0x8] sm:$0xff]
        %v2028 = vld [vmem:[#allocation3 + $0x10] sm:$0xff]
        %v2029 = vld [vmem:[#allocation3 + $0x18] sm:$0xff]
        %v2030 = vld [vmem:[#allocation3 + $0x20] sm:$0xff]
        %v2031 = vld [vmem:[#allocation3 + $0x28] sm:$0xff]
        %v2032 = vld [vmem:[#allocation3 + $0x30] sm:$0xff]
        %v2033 = vld [vmem:[#allocation3 + $0x38] sm:$0xff]
        %v2034 = vld [vmem:[#allocation3 + $0x40] sm:$0xff]
        %v2035 = vld [vmem:[#allocation3 + $0x48] sm:$0xff]
        %v2036 = vld [vmem:[#allocation3 + $0x50] sm:$0xff]
        %v2037 = vld [vmem:[#allocation3 + $0x58] sm:$0xff]
        %v2038 = vld [vmem:[#allocation3 + $0x60] sm:$0xff]
        %v2039 = vld [vmem:[#allocation3 + $0x68] sm:$0xff]
        %v2040 = vld [vmem:[#allocation3 + $0x70] sm:$0xff]
        %v2041 = vld [vmem:[#allocation3 + $0x78] sm:$0xff]
        %v2042 = vadd.f32 %v2026, %v1964
        %v2043 = vadd.f32 %v2027, %v1967
        %v2044 = vadd.f32 %v2028, %v1972
        %v2045 = vadd.f32 %v2029, %v1975
        %v2046 = vadd.f32 %v2030, %v1980
        %v2047 = vadd.f32 %v2031, %v1983
        %v2048 = vadd.f32 %v2032, %v1988
        %v2049 = vadd.f32 %v2033, %v1991
        %v2050 = vadd.f32 %v2034, %v1996
        %v2051 = vadd.f32 %v2035, %v1999
        %v2052 = vadd.f32 %v2036, %v2004
        %v2053 = vadd.f32 %v2037, %v2007
        %v2054 = vadd.f32 %v2038, %v2012
        %v2055 = vadd.f32 %v2039, %v2015
        %v2056 = vadd.f32 %v2040, %v2020
        %v2057 = vadd.f32 %v2041, %v2023
        %2058 = vst.msk [vmem:[#allocation3] sm:$0xff] %vm1161, %v2042
        %2059 = vst.msk [vmem:[#allocation3 + $0x8] sm:$0xff] %vm1161, %v2043
        %2060 = vst.msk [vmem:[#allocation3 + $0x10] sm:$0xff] %vm1161, %v2044
        %2061 = vst.msk [vmem:[#allocation3 + $0x18] sm:$0xff] %vm1161, %v2045
        %2062 = vst.msk [vmem:[#allocation3 + $0x20] sm:$0xff] %vm1161, %v2046
        %2063 = vst.msk [vmem:[#allocation3 + $0x28] sm:$0xff] %vm1161, %v2047
        %2064 = vst.msk [vmem:[#allocation3 + $0x30] sm:$0xff] %vm1161, %v2048
        %2065 = vst.msk [vmem:[#allocation3 + $0x38] sm:$0xff] %vm1161, %v2049
        %2066 = vst.msk [vmem:[#allocation3 + $0x40] sm:$0xff] %vm1161, %v2050
        %2067 = vst.msk [vmem:[#allocation3 + $0x48] sm:$0xff] %vm1161, %v2051
        %2068 = vst.msk [vmem:[#allocation3 + $0x50] sm:$0xff] %vm1161, %v2052
        %2069 = vst.msk [vmem:[#allocation3 + $0x58] sm:$0xff] %vm1161, %v2053
        %2070 = vst.msk [vmem:[#allocation3 + $0x60] sm:$0xff] %vm1161, %v2054
        %2071 = vst.msk [vmem:[#allocation3 + $0x68] sm:$0xff] %vm1161, %v2055
        %2072 = vst.msk [vmem:[#allocation3 + $0x70] sm:$0xff] %vm1161, %v2056
        %2073 = vst.msk [vmem:[#allocation3 + $0x78] sm:$0xff] %vm1161, %v2057
        %s2074 = scalar_lea.vmem %s6, 32
        %v2075 = vld [vmem:[%s2074] sm:$0xf]
        %v2076 = vld [vmem:[%s2074 + $0x4] sm:$0xf]
        %v2079 = vunpack.c.l.b16 %v2075
        %v2080 = vunpack.c.l.b16 %v2076
        %v2081 = vpack.c.b16 %v2080, %v2079
        %v2084 = vsel %vm672, %v694, 0
        %2086 = vmatprep.subr.bf16.mxu0 0
        %2087 = vmatpush1.bf16.msra.mxu0 %v2081
        %2088 = vmatprep.subr.bf16.mxu0 0
        %2089 = vmatpush1.bf16.msra.mxu0 0
        %2090 = vmatprep.subr.bf16.mxu0 0
        %2091 = vmatpush1.bf16.msra.mxu0 0
        %2092 = vmatprep.subr.bf16.mxu0 0
        %2093 = vmatpush1.bf16.msra.mxu0 0
        %2094 = vmatprep.subr.bf16.mxu0 0
        %2095 = vmatpush1.bf16.msra.mxu0 0
        %2096 = vmatprep.subr.bf16.mxu0 0
        %2097 = vmatpush1.bf16.msra.mxu0 0
        %2098 = vmatprep.subr.bf16.mxu0 0
        %2099 = vmatpush1.bf16.msra.mxu0 0
        %2100 = vmatprep.subr.bf16.mxu0 0
        %2101 = vmatpush1.bf16.msra.mxu0 0
        %2102 = vmatprep.subr.bf16.mxu0 0
        %2103 = vmatpush1.bf16.msra.mxu0 0
        %2104 = vmatprep.subr.bf16.mxu0 0
        %2105 = vmatpush1.bf16.msra.mxu0 0
        %2106 = vmatprep.subr.bf16.mxu0 0
        %2107 = vmatpush1.bf16.msra.mxu0 0
        %2108 = vmatprep.subr.bf16.mxu0 0
        %2109 = vmatpush1.bf16.msra.mxu0 0
        %2110 = vmatprep.subr.bf16.mxu0 0
        %2111 = vmatpush1.bf16.msra.mxu0 0
        %2112 = vmatprep.subr.bf16.mxu0 0
        %2113 = vmatpush1.bf16.msra.mxu0 0
        %2114 = vmatprep.subr.bf16.mxu0 0
        %2115 = vmatpush1.bf16.msra.mxu0 0
        %2116 = vmatprep.subr.bf16.mxu0 0
        %2117 = vmatpush1.bf16.msra.mxu0 0
        %2118 = vmatprep.mubr.bf16.mxu0 0
        %2119 = vmatmul.mubr.bf16.gmra.mrb[0].mxu0 %v1191
        %v2120 = vpop.f32.mrb[0].mxu0
        %v2121 = vadd.f32 0.0, %v2120
        %v2122 = vpop.f32.mrb[0].mxu0
        %v2123 = vpop.f32.mrb[0].mxu0
        %v2124 = vadd.f32 0.0, %v2123
        %v2125 = vpop.f32.mrb[0].mxu0
        %2126 = vmatprep.mubr.bf16.mxu0 0
        %2127 = vmatmul.mubr.bf16.gmra.mrb[0].mxu0 %v1194
        %v2128 = vpop.f32.mrb[0].mxu0
        %v2129 = vadd.f32 0.0, %v2128
        %v2130 = vpop.f32.mrb[0].mxu0
        %v2131 = vpop.f32.mrb[0].mxu0
        %v2132 = vadd.f32 0.0, %v2131
        %v2133 = vpop.f32.mrb[0].mxu0
        %2134 = vmatprep.mubr.bf16.mxu0 0
        %2135 = vmatmul.mubr.bf16.gmra.mrb[0].mxu0 %v1197
        %v2136 = vpop.f32.mrb[0].mxu0
        %v2137 = vadd.f32 0.0, %v2136
        %v2138 = vpop.f32.mrb[0].mxu0
        %v2139 = vpop.f32.mrb[0].mxu0
        %v2140 = vadd.f32 0.0, %v2139
        %v2141 = vpop.f32.mrb[0].mxu0
        %2142 = vmatprep.mubr.bf16.mxu0 0
        %2143 = vmatmul.mubr.bf16.gmra.mrb[0].mxu0 %v1200
        %v2144 = vpop.f32.mrb[0].mxu0
        %v2145 = vadd.f32 0.0, %v2144
        %v2146 = vpop.f32.mrb[0].mxu0
        %v2147 = vpop.f32.mrb[0].mxu0
        %v2148 = vadd.f32 0.0, %v2147
        %v2149 = vpop.f32.mrb[0].mxu0
        %2150 = vmatprep.mubr.bf16.mxu0 0
        %2151 = vmatmul.mubr.bf16.gmra.mrb[0].mxu0 %v1203
        %v2152 = vpop.f32.mrb[0].mxu0
        %v2153 = vadd.f32 0.0, %v2152
        %v2154 = vpop.f32.mrb[0].mxu0
        %v2155 = vpop.f32.mrb[0].mxu0
        %v2156 = vadd.f32 0.0, %v2155
        %v2157 = vpop.f32.mrb[0].mxu0
        %2158 = vmatprep.mubr.bf16.mxu0 0
        %2159 = vmatmul.mubr.bf16.gmra.mrb[0].mxu0 %v1206
        %v2160 = vpop.f32.mrb[0].mxu0
        %v2161 = vadd.f32 0.0, %v2160
        %v2162 = vpop.f32.mrb[0].mxu0
        %v2163 = vpop.f32.mrb[0].mxu0
        %v2164 = vadd.f32 0.0, %v2163
        %v2165 = vpop.f32.mrb[0].mxu0
        %2166 = vmatprep.mubr.bf16.mxu0 0
        %2167 = vmatmul.mubr.bf16.gmra.mrb[0].mxu0 %v1209
        %v2168 = vpop.f32.mrb[0].mxu0
        %v2169 = vadd.f32 0.0, %v2168
        %v2170 = vpop.f32.mrb[0].mxu0
        %v2171 = vpop.f32.mrb[0].mxu0
        %v2172 = vadd.f32 0.0, %v2171
        %v2173 = vpop.f32.mrb[0].mxu0
        %2174 = vmatprep.mubr.bf16.mxu0 0
        %2175 = vmatmul.mubr.bf16.gmra.mrb[0].mxu0 %v2084
        %v2176 = vpop.f32.mrb[0].mxu0
        %v2177 = vadd.f32 0.0, %v2176
        %v2178 = vpop.f32.mrb[0].mxu0
        %v2179 = vpop.f32.mrb[0].mxu0
        %v2180 = vadd.f32 0.0, %v2179
        %v2181 = vpop.f32.mrb[0].mxu0
        %2182 = vdwg.mxu0
        %v2183 = vld [vmem:[#allocation3] sm:$0xff]
        %v2184 = vld [vmem:[#allocation3 + $0x8] sm:$0xff]
        %v2185 = vld [vmem:[#allocation3 + $0x10] sm:$0xff]
        %v2186 = vld [vmem:[#allocation3 + $0x18] sm:$0xff]
        %v2187 = vld [vmem:[#allocation3 + $0x20] sm:$0xff]
        %v2188 = vld [vmem:[#allocation3 + $0x28] sm:$0xff]
        %v2189 = vld [vmem:[#allocation3 + $0x30] sm:$0xff]
        %v2190 = vld [vmem:[#allocation3 + $0x38] sm:$0xff]
        %v2191 = vld [vmem:[#allocation3 + $0x40] sm:$0xff]
        %v2192 = vld [vmem:[#allocation3 + $0x48] sm:$0xff]
        %v2193 = vld [vmem:[#allocation3 + $0x50] sm:$0xff]
        %v2194 = vld [vmem:[#allocation3 + $0x58] sm:$0xff]
        %v2195 = vld [vmem:[#allocation3 + $0x60] sm:$0xff]
        %v2196 = vld [vmem:[#allocation3 + $0x68] sm:$0xff]
        %v2197 = vld [vmem:[#allocation3 + $0x70] sm:$0xff]
        %v2198 = vld [vmem:[#allocation3 + $0x78] sm:$0xff]
        %v2199 = vadd.f32 %v2183, %v2121
        %v2200 = vadd.f32 %v2184, %v2124
        %v2201 = vadd.f32 %v2185, %v2129
        %v2202 = vadd.f32 %v2186, %v2132
        %v2203 = vadd.f32 %v2187, %v2137
        %v2204 = vadd.f32 %v2188, %v2140
        %v2205 = vadd.f32 %v2189, %v2145
        %v2206 = vadd.f32 %v2190, %v2148
        %v2207 = vadd.f32 %v2191, %v2153
        %v2208 = vadd.f32 %v2192, %v2156
        %v2209 = vadd.f32 %v2193, %v2161
        %v2210 = vadd.f32 %v2194, %v2164
        %v2211 = vadd.f32 %v2195, %v2169
        %v2212 = vadd.f32 %v2196, %v2172
        %v2213 = vadd.f32 %v2197, %v2177
        %v2214 = vadd.f32 %v2198, %v2180
        %2215 = vst.msk [vmem:[#allocation3] sm:$0xff] %vm1161, %v2199
        %2216 = vst.msk [vmem:[#allocation3 + $0x8] sm:$0xff] %vm1161, %v2200
        %2217 = vst.msk [vmem:[#allocation3 + $0x10] sm:$0xff] %vm1161, %v2201
        %2218 = vst.msk [vmem:[#allocation3 + $0x18] sm:$0xff] %vm1161, %v2202
        %2219 = vst.msk [vmem:[#allocation3 + $0x20] sm:$0xff] %vm1161, %v2203
        %2220 = vst.msk [vmem:[#allocation3 + $0x28] sm:$0xff] %vm1161, %v2204
        %2221 = vst.msk [vmem:[#allocation3 + $0x30] sm:$0xff] %vm1161, %v2205
        %2222 = vst.msk [vmem:[#allocation3 + $0x38] sm:$0xff] %vm1161, %v2206
        %2223 = vst.msk [vmem:[#allocation3 + $0x40] sm:$0xff] %vm1161, %v2207
        %2224 = vst.msk [vmem:[#allocation3 + $0x48] sm:$0xff] %vm1161, %v2208
        %2225 = vst.msk [vmem:[#allocation3 + $0x50] sm:$0xff] %vm1161, %v2209
        %2226 = vst.msk [vmem:[#allocation3 + $0x58] sm:$0xff] %vm1161, %v2210
        %2227 = vst.msk [vmem:[#allocation3 + $0x60] sm:$0xff] %vm1161, %v2211
        %2228 = vst.msk [vmem:[#allocation3 + $0x68] sm:$0xff] %vm1161, %v2212
        %2229 = vst.msk [vmem:[#allocation3 + $0x70] sm:$0xff] %vm1161, %v2213
        %2230 = vst.msk [vmem:[#allocation3 + $0x78] sm:$0xff] %vm1161, %v2214
        %v2231 = vsel %vm1555, %v687, 0
        %v2232 = vsel %vm1556, %v688, 0
        %v2233 = vsel %vm1557, %v689, 0
        %v2234 = vsel %vm1558, %v690, 0
        %v2235 = vsel %vm1559, %v691, 0
        %v2236 = vsel %vm1560, %v692, 0
        %v2237 = vsel %vm1561, %v693, 0
        %v2238 = vsel %vm1562, %v694, 0
        %v2239 = vsel %vm1563, %v695, 0
        %s2240 = scalar_lea.vmem %s6, 40
        %v2241 = vld [vmem:[%s2240] sm:$0xf]
        %v2242 = vld [vmem:[%s2240 + $0x4] sm:$0xf]
        %v2244 = vshrl.u32 %v2231, 16
        %v2246 = vshll.u32 %v2231, 16
        %v2248 = vrot.slane %v2246, 1
        %v2249 = vor.u32 %v2244, %v2248
        %v2251 = vshll.u32 %v2232, 16
        %v2253 = vrot.slane %v2251, 1
        %v2254 = vsel %vm881, %v2249, %v2253
        %v2255 = vshrl.u32 %v2232, 16
        %v2257 = vor.u32 %v2255, %v2253
        %v2259 = vshll.u32 %v2233, 16
        %v2261 = vrot.slane %v2259, 1
        %v2262 = vsel %vm881, %v2257, %v2261
        %v2263 = vshrl.u32 %v2233, 16
        %v2265 = vor.u32 %v2263, %v2261
        %v2267 = vshll.u32 %v2234, 16
        %v2269 = vrot.slane %v2267, 1
        %v2270 = vsel %vm881, %v2265, %v2269
        %v2271 = vshrl.u32 %v2234, 16
        %v2273 = vor.u32 %v2271, %v2269
        %v2275 = vshll.u32 %v2235, 16
        %v2277 = vrot.slane %v2275, 1
        %v2278 = vsel %vm881, %v2273, %v2277
        %v2279 = vshrl.u32 %v2235, 16
        %v2281 = vor.u32 %v2279, %v2277
        %v2283 = vshll.u32 %v2236, 16
        %v2285 = vrot.slane %v2283, 1
        %v2286 = vsel %vm881, %v2281, %v2285
        %v2287 = vshrl.u32 %v2236, 16
        %v2289 = vor.u32 %v2287, %v2285
        %v2291 = vshll.u32 %v2237, 16
        %v2293 = vrot.slane %v2291, 1
        %v2294 = vsel %vm881, %v2289, %v2293
        %v2295 = vshrl.u32 %v2237, 16
        %v2297 = vor.u32 %v2295, %v2293
        %v2299 = vshll.u32 %v2238, 16
        %v2301 = vrot.slane %v2299, 1
        %v2302 = vsel %vm881, %v2297, %v2301
        %v2303 = vshrl.u32 %v2238, 16
        %v2305 = vor.u32 %v2303, %v2301
        %v2307 = vshll.u32 %v2239, 16
        %v2309 = vrot.slane %v2307, 1
        %v2310 = vsel %vm881, %v2305, %v2309
        %v2313 = vunpack.c.l.b16 %v2241
        %v2314 = vunpack.c.l.b16 %v2242
        %v2315 = vpack.c.b16 %v2314, %v2313
        %v2318 = vsel %vm672, %v2254, 0
        %v2321 = vsel %vm672, %v2262, 0
        %v2324 = vsel %vm672, %v2270, 0
        %v2327 = vsel %vm672, %v2278, 0
        %v2330 = vsel %vm672, %v2286, 0
        %v2333 = vsel %vm672, %v2294, 0
        %v2336 = vsel %vm672, %v2302, 0
        %v2339 = vsel %vm672, %v2310, 0
        %2341 = vmatprep.subr.bf16.mxu0 0
        %2342 = vmatpush1.bf16.msra.mxu0 %v2315
        %2343 = vmatprep.subr.bf16.mxu0 0
        %2344 = vmatpush1.bf16.msra.mxu0 0
        %2345 = vmatprep.subr.bf16.mxu0 0
        %2346 = vmatpush1.bf16.msra.mxu0 0
        %2347 = vmatprep.subr.bf16.mxu0 0
        %2348 = vmatpush1.bf16.msra.mxu0 0
        %2349 = vmatprep.subr.bf16.mxu0 0
        %2350 = vmatpush1.bf16.msra.mxu0 0
        %2351 = vmatprep.subr.bf16.mxu0 0
        %2352 = vmatpush1.bf16.msra.mxu0 0
        %2353 = vmatprep.subr.bf16.mxu0 0
        %2354 = vmatpush1.bf16.msra.mxu0 0
        %2355 = vmatprep.subr.bf16.mxu0 0
        %2356 = vmatpush1.bf16.msra.mxu0 0
        %2357 = vmatprep.subr.bf16.mxu0 0
        %2358 = vmatpush1.bf16.msra.mxu0 0
        %2359 = vmatprep.subr.bf16.mxu0 0
        %2360 = vmatpush1.bf16.msra.mxu0 0
        %2361 = vmatprep.subr.bf16.mxu0 0
        %2362 = vmatpush1.bf16.msra.mxu0 0
        %2363 = vmatprep.subr.bf16.mxu0 0
        %2364 = vmatpush1.bf16.msra.mxu0 0
        %2365 = vmatprep.subr.bf16.mxu0 0
        %2366 = vmatpush1.bf16.msra.mxu0 0
        %2367 = vmatprep.subr.bf16.mxu0 0
        %2368 = vmatpush1.bf16.msra.mxu0 0
        %2369 = vmatprep.subr.bf16.mxu0 0
        %2370 = vmatpush1.bf16.msra.mxu0 0
        %2371 = vmatprep.subr.bf16.mxu0 0
        %2372 = vmatpush1.bf16.msra.mxu0 0
        %2373 = vmatprep.mubr.bf16.mxu0 0
        %2374 = vmatmul.mubr.bf16.gmra.mrb[0].mxu0 %v2318
        %v2375 = vpop.f32.mrb[0].mxu0
        %v2376 = vadd.f32 0.0, %v2375
        %v2377 = vpop.f32.mrb[0].mxu0
        %v2378 = vpop.f32.mrb[0].mxu0
        %v2379 = vadd.f32 0.0, %v2378
        %v2380 = vpop.f32.mrb[0].mxu0
        %2381 = vmatprep.mubr.bf16.mxu0 0
        %2382 = vmatmul.mubr.bf16.gmra.mrb[0].mxu0 %v2321
        %v2383 = vpop.f32.mrb[0].mxu0
        %v2384 = vadd.f32 0.0, %v2383
        %v2385 = vpop.f32.mrb[0].mxu0
        %v2386 = vpop.f32.mrb[0].mxu0
        %v2387 = vadd.f32 0.0, %v2386
        %v2388 = vpop.f32.mrb[0].mxu0
        %2389 = vmatprep.mubr.bf16.mxu0 0
        %2390 = vmatmul.mubr.bf16.gmra.mrb[0].mxu0 %v2324
        %v2391 = vpop.f32.mrb[0].mxu0
        %v2392 = vadd.f32 0.0, %v2391
        %v2393 = vpop.f32.mrb[0].mxu0
        %v2394 = vpop.f32.mrb[0].mxu0
        %v2395 = vadd.f32 0.0, %v2394
        %v2396 = vpop.f32.mrb[0].mxu0
        %2397 = vmatprep.mubr.bf16.mxu0 0
        %2398 = vmatmul.mubr.bf16.gmra.mrb[0].mxu0 %v2327
        %v2399 = vpop.f32.mrb[0].mxu0
        %v2400 = vadd.f32 0.0, %v2399
        %v2401 = vpop.f32.mrb[0].mxu0
        %v2402 = vpop.f32.mrb[0].mxu0
        %v2403 = vadd.f32 0.0, %v2402
        %v2404 = vpop.f32.mrb[0].mxu0
        %2405 = vmatprep.mubr.bf16.mxu0 0
        %2406 = vmatmul.mubr.bf16.gmra.mrb[0].mxu0 %v2330
        %v2407 = vpop.f32.mrb[0].mxu0
        %v2408 = vadd.f32 0.0, %v2407
        %v2409 = vpop.f32.mrb[0].mxu0
        %v2410 = vpop.f32.mrb[0].mxu0
        %v2411 = vadd.f32 0.0, %v2410
        %v2412 = vpop.f32.mrb[0].mxu0
        %2413 = vmatprep.mubr.bf16.mxu0 0
        %2414 = vmatmul.mubr.bf16.gmra.mrb[0].mxu0 %v2333
        %v2415 = vpop.f32.mrb[0].mxu0
        %v2416 = vadd.f32 0.0, %v2415
        %v2417 = vpop.f32.mrb[0].mxu0
        %v2418 = vpop.f32.mrb[0].mxu0
        %v2419 = vadd.f32 0.0, %v2418
        %v2420 = vpop.f32.mrb[0].mxu0
        %2421 = vmatprep.mubr.bf16.mxu0 0
        %2422 = vmatmul.mubr.bf16.gmra.mrb[0].mxu0 %v2336
        %v2423 = vpop.f32.mrb[0].mxu0
        %v2424 = vadd.f32 0.0, %v2423
        %v2425 = vpop.f32.mrb[0].mxu0
        %v2426 = vpop.f32.mrb[0].mxu0
        %v2427 = vadd.f32 0.0, %v2426
        %v2428 = vpop.f32.mrb[0].mxu0
        %2429 = vmatprep.mubr.bf16.mxu0 0
        %2430 = vmatmul.mubr.bf16.gmra.mrb[0].mxu0 %v2339
        %v2431 = vpop.f32.mrb[0].mxu0
        %v2432 = vadd.f32 0.0, %v2431
        %v2433 = vpop.f32.mrb[0].mxu0
        %v2434 = vpop.f32.mrb[0].mxu0
        %v2435 = vadd.f32 0.0, %v2434
        %v2436 = vpop.f32.mrb[0].mxu0
        %2437 = vdwg.mxu0
        %v2438 = vld [vmem:[#allocation3] sm:$0xff]
        %v2439 = vld [vmem:[#allocation3 + $0x8] sm:$0xff]
        %v2440 = vld [vmem:[#allocation3 + $0x10] sm:$0xff]
        %v2441 = vld [vmem:[#allocation3 + $0x18] sm:$0xff]
        %v2442 = vld [vmem:[#allocation3 + $0x20] sm:$0xff]
        %v2443 = vld [vmem:[#allocation3 + $0x28] sm:$0xff]
        %v2444 = vld [vmem:[#allocation3 + $0x30] sm:$0xff]
        %v2445 = vld [vmem:[#allocation3 + $0x38] sm:$0xff]
        %v2446 = vld [vmem:[#allocation3 + $0x40] sm:$0xff]
        %v2447 = vld [vmem:[#allocation3 + $0x48] sm:$0xff]
        %v2448 = vld [vmem:[#allocation3 + $0x50] sm:$0xff]
        %v2449 = vld [vmem:[#allocation3 + $0x58] sm:$0xff]
        %v2450 = vld [vmem:[#allocation3 + $0x60] sm:$0xff]
        %v2451 = vld [vmem:[#allocation3 + $0x68] sm:$0xff]
        %v2452 = vld [vmem:[#allocation3 + $0x70] sm:$0xff]
        %v2453 = vld [vmem:[#allocation3 + $0x78] sm:$0xff]
        %v2454 = vadd.f32 %v2438, %v2376
        %v2455 = vadd.f32 %v2439, %v2379
        %v2456 = vadd.f32 %v2440, %v2384
        %v2457 = vadd.f32 %v2441, %v2387
        %v2458 = vadd.f32 %v2442, %v2392
        %v2459 = vadd.f32 %v2443, %v2395
        %v2460 = vadd.f32 %v2444, %v2400
        %v2461 = vadd.f32 %v2445, %v2403
        %v2462 = vadd.f32 %v2446, %v2408
        %v2463 = vadd.f32 %v2447, %v2411
        %v2464 = vadd.f32 %v2448, %v2416
        %v2465 = vadd.f32 %v2449, %v2419
        %v2466 = vadd.f32 %v2450, %v2424
        %v2467 = vadd.f32 %v2451, %v2427
        %v2468 = vadd.f32 %v2452, %v2432
        %v2469 = vadd.f32 %v2453, %v2435
        %2470 = vst.msk [vmem:[#allocation3] sm:$0xff] %vm1161, %v2454
        %2471 = vst.msk [vmem:[#allocation3 + $0x8] sm:$0xff] %vm1161, %v2455
        %2472 = vst.msk [vmem:[#allocation3 + $0x10] sm:$0xff] %vm1161, %v2456
        %2473 = vst.msk [vmem:[#allocation3 + $0x18] sm:$0xff] %vm1161, %v2457
        %2474 = vst.msk [vmem:[#allocation3 + $0x20] sm:$0xff] %vm1161, %v2458
        %2475 = vst.msk [vmem:[#allocation3 + $0x28] sm:$0xff] %vm1161, %v2459
        %2476 = vst.msk [vmem:[#allocation3 + $0x30] sm:$0xff] %vm1161, %v2460
        %2477 = vst.msk [vmem:[#allocation3 + $0x38] sm:$0xff] %vm1161, %v2461
        %2478 = vst.msk [vmem:[#allocation3 + $0x40] sm:$0xff] %vm1161, %v2462
        %2479 = vst.msk [vmem:[#allocation3 + $0x48] sm:$0xff] %vm1161, %v2463
        %2480 = vst.msk [vmem:[#allocation3 + $0x50] sm:$0xff] %vm1161, %v2464
        %2481 = vst.msk [vmem:[#allocation3 + $0x58] sm:$0xff] %vm1161, %v2465
        %2482 = vst.msk [vmem:[#allocation3 + $0x60] sm:$0xff] %vm1161, %v2466
        %2483 = vst.msk [vmem:[#allocation3 + $0x68] sm:$0xff] %vm1161, %v2467
        %2484 = vst.msk [vmem:[#allocation3 + $0x70] sm:$0xff] %vm1161, %v2468
        %2485 = vst.msk [vmem:[#allocation3 + $0x78] sm:$0xff] %vm1161, %v2469
        %v2486 = vsel %vm945, %v687, 0
        %v2487 = vsel %vm946, %v688, 0
        %v2488 = vsel %vm947, %v689, 0
        %v2489 = vsel %vm948, %v690, 0
        %v2490 = vsel %vm949, %v691, 0
        %v2491 = vsel %vm950, %v692, 0
        %v2492 = vsel %vm951, %v693, 0
        %v2493 = vsel %vm952, %v694, 0
        %v2494 = vsel %vm953, %v695, 0
        %s2495 = scalar_lea.vmem %s6, 48
        %v2496 = vld [vmem:[%s2495] sm:$0xf]
        %v2497 = vld [vmem:[%s2495 + $0x4] sm:$0xf]
        %v2499 = vshrl.u32 %v2486, 16
        %v2501 = vrot.slane %v2499, 7
        %v2503 = vshrl.u32 %v2487, 16
        %v2505 = vrot.slane %v2503, 7
        %v2506 = vshll.u32 %v2487, 16
        %v2508 = vor.u32 %v2505, %v2506
        %v2509 = vsel %vm965, %v2501, %v2508
        %v2511 = vshrl.u32 %v2488, 16
        %v2513 = vrot.slane %v2511, 7
        %v2514 = vshll.u32 %v2488, 16
        %v2516 = vor.u32 %v2513, %v2514
        %v2517 = vsel %vm965, %v2505, %v2516
        %v2519 = vshrl.u32 %v2489, 16
        %v2521 = vrot.slane %v2519, 7
        %v2522 = vshll.u32 %v2489, 16
        %v2524 = vor.u32 %v2521, %v2522
        %v2525 = vsel %vm965, %v2513, %v2524
        %v2527 = vshrl.u32 %v2490, 16
        %v2529 = vrot.slane %v2527, 7
        %v2530 = vshll.u32 %v2490, 16
        %v2532 = vor.u32 %v2529, %v2530
        %v2533 = vsel %vm965, %v2521, %v2532
        %v2535 = vshrl.u32 %v2491, 16
        %v2537 = vrot.slane %v2535, 7
        %v2538 = vshll.u32 %v2491, 16
        %v2540 = vor.u32 %v2537, %v2538
        %v2541 = vsel %vm965, %v2529, %v2540
        %v2543 = vshrl.u32 %v2492, 16
        %v2545 = vrot.slane %v2543, 7
        %v2546 = vshll.u32 %v2492, 16
        %v2548 = vor.u32 %v2545, %v2546
        %v2549 = vsel %vm965, %v2537, %v2548
        %v2551 = vshrl.u32 %v2493, 16
        %v2553 = vrot.slane %v2551, 7
        %v2554 = vshll.u32 %v2493, 16
        %v2556 = vor.u32 %v2553, %v2554
        %v2557 = vsel %vm965, %v2545, %v2556
        %v2559 = vshrl.u32 %v2494, 16
        %v2561 = vrot.slane %v2559, 7
        %v2562 = vshll.u32 %v2494, 16
        %v2564 = vor.u32 %v2561, %v2562
        %v2565 = vsel %vm965, %v2553, %v2564
        %v2568 = vunpack.c.l.b16 %v2496
        %v2569 = vunpack.c.l.b16 %v2497
        %v2570 = vpack.c.b16 %v2569, %v2568
        %v2573 = vsel %vm672, %v2509, 0
        %v2576 = vsel %vm672, %v2517, 0
        %v2579 = vsel %vm672, %v2525, 0
        %v2582 = vsel %vm672, %v2533, 0
        %v2585 = vsel %vm672, %v2541, 0
        %v2588 = vsel %vm672, %v2549, 0
        %v2591 = vsel %vm672, %v2557, 0
        %v2594 = vsel %vm672, %v2565, 0
        %2596 = vmatprep.subr.bf16.mxu0 0
        %2597 = vmatpush1.bf16.msra.mxu0 %v2570
        %2598 = vmatprep.subr.bf16.mxu0 0
        %2599 = vmatpush1.bf16.msra.mxu0 0
        %2600 = vmatprep.subr.bf16.mxu0 0
        %2601 = vmatpush1.bf16.msra.mxu0 0
        %2602 = vmatprep.subr.bf16.mxu0 0
        %2603 = vmatpush1.bf16.msra.mxu0 0
        %2604 = vmatprep.subr.bf16.mxu0 0
        %2605 = vmatpush1.bf16.msra.mxu0 0
        %2606 = vmatprep.subr.bf16.mxu0 0
        %2607 = vmatpush1.bf16.msra.mxu0 0
        %2608 = vmatprep.subr.bf16.mxu0 0
        %2609 = vmatpush1.bf16.msra.mxu0 0
        %2610 = vmatprep.subr.bf16.mxu0 0
        %2611 = vmatpush1.bf16.msra.mxu0 0
        %2612 = vmatprep.subr.bf16.mxu0 0
        %2613 = vmatpush1.bf16.msra.mxu0 0
        %2614 = vmatprep.subr.bf16.mxu0 0
        %2615 = vmatpush1.bf16.msra.mxu0 0
        %2616 = vmatprep.subr.bf16.mxu0 0
        %2617 = vmatpush1.bf16.msra.mxu0 0
        %2618 = vmatprep.subr.bf16.mxu0 0
        %2619 = vmatpush1.bf16.msra.mxu0 0
        %2620 = vmatprep.subr.bf16.mxu0 0
        %2621 = vmatpush1.bf16.msra.mxu0 0
        %2622 = vmatprep.subr.bf16.mxu0 0
        %2623 = vmatpush1.bf16.msra.mxu0 0
        %2624 = vmatprep.subr.bf16.mxu0 0
        %2625 = vmatpush1.bf16.msra.mxu0 0
        %2626 = vmatprep.subr.bf16.mxu0 0
        %2627 = vmatpush1.bf16.msra.mxu0 0
        %2628 = vmatprep.mubr.bf16.mxu0 0
        %2629 = vmatmul.mubr.bf16.gmra.mrb[0].mxu0 %v2573
        %v2630 = vpop.f32.mrb[0].mxu0
        %v2631 = vadd.f32 0.0, %v2630
        %v2632 = vpop.f32.mrb[0].mxu0
        %v2633 = vpop.f32.mrb[0].mxu0
        %v2634 = vadd.f32 0.0, %v2633
        %v2635 = vpop.f32.mrb[0].mxu0
        %2636 = vmatprep.mubr.bf16.mxu0 0
        %2637 = vmatmul.mubr.bf16.gmra.mrb[0].mxu0 %v2576
        %v2638 = vpop.f32.mrb[0].mxu0
        %v2639 = vadd.f32 0.0, %v2638
        %v2640 = vpop.f32.mrb[0].mxu0
        %v2641 = vpop.f32.mrb[0].mxu0
        %v2642 = vadd.f32 0.0, %v2641
        %v2643 = vpop.f32.mrb[0].mxu0
        %2644 = vmatprep.mubr.bf16.mxu0 0
        %2645 = vmatmul.mubr.bf16.gmra.mrb[0].mxu0 %v2579
        %v2646 = vpop.f32.mrb[0].mxu0
        %v2647 = vadd.f32 0.0, %v2646
        %v2648 = vpop.f32.mrb[0].mxu0
        %v2649 = vpop.f32.mrb[0].mxu0
        %v2650 = vadd.f32 0.0, %v2649
        %v2651 = vpop.f32.mrb[0].mxu0
        %2652 = vmatprep.mubr.bf16.mxu0 0
        %2653 = vmatmul.mubr.bf16.gmra.mrb[0].mxu0 %v2582
        %v2654 = vpop.f32.mrb[0].mxu0
        %v2655 = vadd.f32 0.0, %v2654
        %v2656 = vpop.f32.mrb[0].mxu0
        %v2657 = vpop.f32.mrb[0].mxu0
        %v2658 = vadd.f32 0.0, %v2657
        %v2659 = vpop.f32.mrb[0].mxu0
        %2660 = vmatprep.mubr.bf16.mxu0 0
        %2661 = vmatmul.mubr.bf16.gmra.mrb[0].mxu0 %v2585
        %v2662 = vpop.f32.mrb[0].mxu0
        %v2663 = vadd.f32 0.0, %v2662
        %v2664 = vpop.f32.mrb[0].mxu0
        %v2665 = vpop.f32.mrb[0].mxu0
        %v2666 = vadd.f32 0.0, %v2665
        %v2667 = vpop.f32.mrb[0].mxu0
        %2668 = vmatprep.mubr.bf16.mxu0 0
        %2669 = vmatmul.mubr.bf16.gmra.mrb[0].mxu0 %v2588
        %v2670 = vpop.f32.mrb[0].mxu0
        %v2671 = vadd.f32 0.0, %v2670
        %v2672 = vpop.f32.mrb[0].mxu0
        %v2673 = vpop.f32.mrb[0].mxu0
        %v2674 = vadd.f32 0.0, %v2673
        %v2675 = vpop.f32.mrb[0].mxu0
        %2676 = vmatprep.mubr.bf16.mxu0 0
        %2677 = vmatmul.mubr.bf16.gmra.mrb[0].mxu0 %v2591
        %v2678 = vpop.f32.mrb[0].mxu0
        %v2679 = vadd.f32 0.0, %v2678
        %v2680 = vpop.f32.mrb[0].mxu0
        %v2681 = vpop.f32.mrb[0].mxu0
        %v2682 = vadd.f32 0.0, %v2681
        %v2683 = vpop.f32.mrb[0].mxu0
        %2684 = vmatprep.mubr.bf16.mxu0 0
        %2685 = vmatmul.mubr.bf16.gmra.mrb[0].mxu0 %v2594
        %v2686 = vpop.f32.mrb[0].mxu0
        %v2687 = vadd.f32 0.0, %v2686
        %v2688 = vpop.f32.mrb[0].mxu0
        %v2689 = vpop.f32.mrb[0].mxu0
        %v2690 = vadd.f32 0.0, %v2689
        %v2691 = vpop.f32.mrb[0].mxu0
        %2692 = vdwg.mxu0
        %v2693 = vld [vmem:[#allocation3] sm:$0xff]
        %v2694 = vld [vmem:[#allocation3 + $0x8] sm:$0xff]
        %v2695 = vld [vmem:[#allocation3 + $0x10] sm:$0xff]
        %v2696 = vld [vmem:[#allocation3 + $0x18] sm:$0xff]
        %v2697 = vld [vmem:[#allocation3 + $0x20] sm:$0xff]
        %v2698 = vld [vmem:[#allocation3 + $0x28] sm:$0xff]
        %v2699 = vld [vmem:[#allocation3 + $0x30] sm:$0xff]
        %v2700 = vld [vmem:[#allocation3 + $0x38] sm:$0xff]
        %v2701 = vld [vmem:[#allocation3 + $0x40] sm:$0xff]
        %v2702 = vld [vmem:[#allocation3 + $0x48] sm:$0xff]
        %v2703 = vld [vmem:[#allocation3 + $0x50] sm:$0xff]
        %v2704 = vld [vmem:[#allocation3 + $0x58] sm:$0xff]
        %v2705 = vld [vmem:[#allocation3 + $0x60] sm:$0xff]
        %v2706 = vld [vmem:[#allocation3 + $0x68] sm:$0xff]
        %v2707 = vld [vmem:[#allocation3 + $0x70] sm:$0xff]
        %v2708 = vld [vmem:[#allocation3 + $0x78] sm:$0xff]
        %v2709 = vadd.f32 %v2693, %v2631
        %v2710 = vadd.f32 %v2694, %v2634
        %v2711 = vadd.f32 %v2695, %v2639
        %v2712 = vadd.f32 %v2696, %v2642
        %v2713 = vadd.f32 %v2697, %v2647
        %v2714 = vadd.f32 %v2698, %v2650
        %v2715 = vadd.f32 %v2699, %v2655
        %v2716 = vadd.f32 %v2700, %v2658
        %v2717 = vadd.f32 %v2701, %v2663
        %v2718 = vadd.f32 %v2702, %v2666
        %v2719 = vadd.f32 %v2703, %v2671
        %v2720 = vadd.f32 %v2704, %v2674
        %v2721 = vadd.f32 %v2705, %v2679
        %v2722 = vadd.f32 %v2706, %v2682
        %v2723 = vadd.f32 %v2707, %v2687
        %v2724 = vadd.f32 %v2708, %v2690
        %2725 = vst.msk [vmem:[#allocation3] sm:$0xff] %vm1161, %v2709
        %2726 = vst.msk [vmem:[#allocation3 + $0x8] sm:$0xff] %vm1161, %v2710
        %2727 = vst.msk [vmem:[#allocation3 + $0x10] sm:$0xff] %vm1161, %v2711
        %2728 = vst.msk [vmem:[#allocation3 + $0x18] sm:$0xff] %vm1161, %v2712
        %2729 = vst.msk [vmem:[#allocation3 + $0x20] sm:$0xff] %vm1161, %v2713
        %2730 = vst.msk [vmem:[#allocation3 + $0x28] sm:$0xff] %vm1161, %v2714
        %2731 = vst.msk [vmem:[#allocation3 + $0x30] sm:$0xff] %vm1161, %v2715
        %2732 = vst.msk [vmem:[#allocation3 + $0x38] sm:$0xff] %vm1161, %v2716
        %2733 = vst.msk [vmem:[#allocation3 + $0x40] sm:$0xff] %vm1161, %v2717
        %2734 = vst.msk [vmem:[#allocation3 + $0x48] sm:$0xff] %vm1161, %v2718
        %2735 = vst.msk [vmem:[#allocation3 + $0x50] sm:$0xff] %vm1161, %v2719
        %2736 = vst.msk [vmem:[#allocation3 + $0x58] sm:$0xff] %vm1161, %v2720
        %2737 = vst.msk [vmem:[#allocation3 + $0x60] sm:$0xff] %vm1161, %v2721
        %2738 = vst.msk [vmem:[#allocation3 + $0x68] sm:$0xff] %vm1161, %v2722
        %2739 = vst.msk [vmem:[#allocation3 + $0x70] sm:$0xff] %vm1161, %v2723
        %2740 = vst.msk [vmem:[#allocation3 + $0x78] sm:$0xff] %vm1161, %v2724
        %s2741 = scalar_lea.vmem %s6, 56
        %v2742 = vld [vmem:[%s2741] sm:$0xf]
        %v2743 = vld [vmem:[%s2741 + $0x4] sm:$0xf]
        %v2746 = vunpack.c.l.b16 %v2742
        %v2747 = vunpack.c.l.b16 %v2743
        %v2748 = vpack.c.b16 %v2747, %v2746
        %v2751 = vsel %vm672, %v695, 0
        %2753 = vmatprep.subr.bf16.mxu0 0
        %2754 = vmatpush1.bf16.msra.mxu0 %v2748
        %2755 = vmatprep.subr.bf16.mxu0 0
        %2756 = vmatpush1.bf16.msra.mxu0 0
        %2757 = vmatprep.subr.bf16.mxu0 0
        %2758 = vmatpush1.bf16.msra.mxu0 0
        %2759 = vmatprep.subr.bf16.mxu0 0
        %2760 = vmatpush1.bf16.msra.mxu0 0
        %2761 = vmatprep.subr.bf16.mxu0 0
        %2762 = vmatpush1.bf16.msra.mxu0 0
        %2763 = vmatprep.subr.bf16.mxu0 0
        %2764 = vmatpush1.bf16.msra.mxu0 0
        %2765 = vmatprep.subr.bf16.mxu0 0
        %2766 = vmatpush1.bf16.msra.mxu0 0
        %2767 = vmatprep.subr.bf16.mxu0 0
        %2768 = vmatpush1.bf16.msra.mxu0 0
        %2769 = vmatprep.subr.bf16.mxu0 0
        %2770 = vmatpush1.bf16.msra.mxu0 0
        %2771 = vmatprep.subr.bf16.mxu0 0
        %2772 = vmatpush1.bf16.msra.mxu0 0
        %2773 = vmatprep.subr.bf16.mxu0 0
        %2774 = vmatpush1.bf16.msra.mxu0 0
        %2775 = vmatprep.subr.bf16.mxu0 0
        %2776 = vmatpush1.bf16.msra.mxu0 0
        %2777 = vmatprep.subr.bf16.mxu0 0
        %2778 = vmatpush1.bf16.msra.mxu0 0
        %2779 = vmatprep.subr.bf16.mxu0 0
        %2780 = vmatpush1.bf16.msra.mxu0 0
        %2781 = vmatprep.subr.bf16.mxu0 0
        %2782 = vmatpush1.bf16.msra.mxu0 0
        %2783 = vmatprep.subr.bf16.mxu0 0
        %2784 = vmatpush1.bf16.msra.mxu0 0
        %2785 = vmatprep.mubr.bf16.mxu0 0
        %2786 = vmatmul.mubr.bf16.gmra.mrb[0].mxu0 %v1194
        %v2787 = vpop.f32.mrb[0].mxu0
        %v2788 = vadd.f32 0.0, %v2787
        %v2789 = vpop.f32.mrb[0].mxu0
        %v2790 = vpop.f32.mrb[0].mxu0
        %v2791 = vadd.f32 0.0, %v2790
        %v2792 = vpop.f32.mrb[0].mxu0
        %2793 = vmatprep.mubr.bf16.mxu0 0
        %2794 = vmatmul.mubr.bf16.gmra.mrb[0].mxu0 %v1197
        %v2795 = vpop.f32.mrb[0].mxu0
        %v2796 = vadd.f32 0.0, %v2795
        %v2797 = vpop.f32.mrb[0].mxu0
        %v2798 = vpop.f32.mrb[0].mxu0
        %v2799 = vadd.f32 0.0, %v2798
        %v2800 = vpop.f32.mrb[0].mxu0
        %2801 = vmatprep.mubr.bf16.mxu0 0
        %2802 = vmatmul.mubr.bf16.gmra.mrb[0].mxu0 %v1200
        %v2803 = vpop.f32.mrb[0].mxu0
        %v2804 = vadd.f32 0.0, %v2803
        %v2805 = vpop.f32.mrb[0].mxu0
        %v2806 = vpop.f32.mrb[0].mxu0
        %v2807 = vadd.f32 0.0, %v2806
        %v2808 = vpop.f32.mrb[0].mxu0
        %2809 = vmatprep.mubr.bf16.mxu0 0
        %2810 = vmatmul.mubr.bf16.gmra.mrb[0].mxu0 %v1203
        %v2811 = vpop.f32.mrb[0].mxu0
        %v2812 = vadd.f32 0.0, %v2811
        %v2813 = vpop.f32.mrb[0].mxu0
        %v2814 = vpop.f32.mrb[0].mxu0
        %v2815 = vadd.f32 0.0, %v2814
        %v2816 = vpop.f32.mrb[0].mxu0
        %2817 = vmatprep.mubr.bf16.mxu0 0
        %2818 = vmatmul.mubr.bf16.gmra.mrb[0].mxu0 %v1206
        %v2819 = vpop.f32.mrb[0].mxu0
        %v2820 = vadd.f32 0.0, %v2819
        %v2821 = vpop.f32.mrb[0].mxu0
        %v2822 = vpop.f32.mrb[0].mxu0
        %v2823 = vadd.f32 0.0, %v2822
        %v2824 = vpop.f32.mrb[0].mxu0
        %2825 = vmatprep.mubr.bf16.mxu0 0
        %2826 = vmatmul.mubr.bf16.gmra.mrb[0].mxu0 %v1209
        %v2827 = vpop.f32.mrb[0].mxu0
        %v2828 = vadd.f32 0.0, %v2827
        %v2829 = vpop.f32.mrb[0].mxu0
        %v2830 = vpop.f32.mrb[0].mxu0
        %v2831 = vadd.f32 0.0, %v2830
        %v2832 = vpop.f32.mrb[0].mxu0
        %2833 = vmatprep.mubr.bf16.mxu0 0
        %2834 = vmatmul.mubr.bf16.gmra.mrb[0].mxu0 %v2084
        %v2835 = vpop.f32.mrb[0].mxu0
        %v2836 = vadd.f32 0.0, %v2835
        %v2837 = vpop.f32.mrb[0].mxu0
        %v2838 = vpop.f32.mrb[0].mxu0
        %v2839 = vadd.f32 0.0, %v2838
        %v2840 = vpop.f32.mrb[0].mxu0
        %2841 = vmatprep.mubr.bf16.mxu0 0
        %2842 = vmatmul.mubr.bf16.gmra.mrb[0].mxu0 %v2751
        %v2843 = vpop.f32.mrb[0].mxu0
        %v2844 = vadd.f32 0.0, %v2843
        %v2845 = vpop.f32.mrb[0].mxu0
        %v2846 = vpop.f32.mrb[0].mxu0
        %v2847 = vadd.f32 0.0, %v2846
        %v2848 = vpop.f32.mrb[0].mxu0
        %2849 = vdwg.mxu0
        %v2850 = vld [vmem:[#allocation3] sm:$0xff]
        %v2851 = vld [vmem:[#allocation3 + $0x8] sm:$0xff]
        %v2852 = vld [vmem:[#allocation3 + $0x10] sm:$0xff]
        %v2853 = vld [vmem:[#allocation3 + $0x18] sm:$0xff]
        %v2854 = vld [vmem:[#allocation3 + $0x20] sm:$0xff]
        %v2855 = vld [vmem:[#allocation3 + $0x28] sm:$0xff]
        %v2856 = vld [vmem:[#allocation3 + $0x30] sm:$0xff]
        %v2857 = vld [vmem:[#allocation3 + $0x38] sm:$0xff]
        %v2858 = vld [vmem:[#allocation3 + $0x40] sm:$0xff]
        %v2859 = vld [vmem:[#allocation3 + $0x48] sm:$0xff]
        %v2860 = vld [vmem:[#allocation3 + $0x50] sm:$0xff]
        %v2861 = vld [vmem:[#allocation3 + $0x58] sm:$0xff]
        %v2862 = vld [vmem:[#allocation3 + $0x60] sm:$0xff]
        %v2863 = vld [vmem:[#allocation3 + $0x68] sm:$0xff]
        %v2864 = vld [vmem:[#allocation3 + $0x70] sm:$0xff]
        %v2865 = vld [vmem:[#allocation3 + $0x78] sm:$0xff]
        %v2866 = vadd.f32 %v2850, %v2788
        %v2867 = vadd.f32 %v2851, %v2791
        %v2868 = vadd.f32 %v2852, %v2796
        %v2869 = vadd.f32 %v2853, %v2799
        %v2870 = vadd.f32 %v2854, %v2804
        %v2871 = vadd.f32 %v2855, %v2807
        %v2872 = vadd.f32 %v2856, %v2812
        %v2873 = vadd.f32 %v2857, %v2815
        %v2874 = vadd.f32 %v2858, %v2820
        %v2875 = vadd.f32 %v2859, %v2823
        %v2876 = vadd.f32 %v2860, %v2828
        %v2877 = vadd.f32 %v2861, %v2831
        %v2878 = vadd.f32 %v2862, %v2836
        %v2879 = vadd.f32 %v2863, %v2839
        %v2880 = vadd.f32 %v2864, %v2844
        %v2881 = vadd.f32 %v2865, %v2847
        %2882 = vst.msk [vmem:[#allocation3] sm:$0xff] %vm1161, %v2866
        %2883 = vst.msk [vmem:[#allocation3 + $0x8] sm:$0xff] %vm1161, %v2867
        %2884 = vst.msk [vmem:[#allocation3 + $0x10] sm:$0xff] %vm1161, %v2868
        %2885 = vst.msk [vmem:[#allocation3 + $0x18] sm:$0xff] %vm1161, %v2869
        %2886 = vst.msk [vmem:[#allocation3 + $0x20] sm:$0xff] %vm1161, %v2870
        %2887 = vst.msk [vmem:[#allocation3 + $0x28] sm:$0xff] %vm1161, %v2871
        %2888 = vst.msk [vmem:[#allocation3 + $0x30] sm:$0xff] %vm1161, %v2872
        %2889 = vst.msk [vmem:[#allocation3 + $0x38] sm:$0xff] %vm1161, %v2873
        %2890 = vst.msk [vmem:[#allocation3 + $0x40] sm:$0xff] %vm1161, %v2874
        %2891 = vst.msk [vmem:[#allocation3 + $0x48] sm:$0xff] %vm1161, %v2875
        %2892 = vst.msk [vmem:[#allocation3 + $0x50] sm:$0xff] %vm1161, %v2876
        %2893 = vst.msk [vmem:[#allocation3 + $0x58] sm:$0xff] %vm1161, %v2877
        %2894 = vst.msk [vmem:[#allocation3 + $0x60] sm:$0xff] %vm1161, %v2878
        %2895 = vst.msk [vmem:[#allocation3 + $0x68] sm:$0xff] %vm1161, %v2879
        %2896 = vst.msk [vmem:[#allocation3 + $0x70] sm:$0xff] %vm1161, %v2880
        %2897 = vst.msk [vmem:[#allocation3 + $0x78] sm:$0xff] %vm1161, %v2881
        %v2898 = vsel %vm1555, %v688, 0
        %v2899 = vsel %vm1556, %v689, 0
        %v2900 = vsel %vm1557, %v690, 0
        %v2901 = vsel %vm1558, %v691, 0
        %v2902 = vsel %vm1559, %v692, 0
        %v2903 = vsel %vm1560, %v693, 0
        %v2904 = vsel %vm1561, %v694, 0
        %v2905 = vsel %vm1562, %v695, 0
        %v2906 = vsel %vm1563, %v696, 0
        %s2907 = scalar_lea.vmem %s6, 64
        %v2908 = vld [vmem:[%s2907] sm:$0xf]
        %v2909 = vld [vmem:[%s2907 + $0x4] sm:$0xf]
        %v2911 = vshrl.u32 %v2898, 16
        %v2913 = vshll.u32 %v2898, 16
        %v2915 = vrot.slane %v2913, 1
        %v2916 = vor.u32 %v2911, %v2915
        %v2918 = vshll.u32 %v2899, 16
        %v2920 = vrot.slane %v2918, 1
        %v2921 = vsel %vm881, %v2916, %v2920
        %v2922 = vshrl.u32 %v2899, 16
        %v2924 = vor.u32 %v2922, %v2920
        %v2926 = vshll.u32 %v2900, 16
        %v2928 = vrot.slane %v2926, 1
        %v2929 = vsel %vm881, %v2924, %v2928
        %v2930 = vshrl.u32 %v2900, 16
        %v2932 = vor.u32 %v2930, %v2928
        %v2934 = vshll.u32 %v2901, 16
        %v2936 = vrot.slane %v2934, 1
        %v2937 = vsel %vm881, %v2932, %v2936
        %v2938 = vshrl.u32 %v2901, 16
        %v2940 = vor.u32 %v2938, %v2936
        %v2942 = vshll.u32 %v2902, 16
        %v2944 = vrot.slane %v2942, 1
        %v2945 = vsel %vm881, %v2940, %v2944
        %v2946 = vshrl.u32 %v2902, 16
        %v2948 = vor.u32 %v2946, %v2944
        %v2950 = vshll.u32 %v2903, 16
        %v2952 = vrot.slane %v2950, 1
        %v2953 = vsel %vm881, %v2948, %v2952
        %v2954 = vshrl.u32 %v2903, 16
        %v2956 = vor.u32 %v2954, %v2952
        %v2958 = vshll.u32 %v2904, 16
        %v2960 = vrot.slane %v2958, 1
        %v2961 = vsel %vm881, %v2956, %v2960
        %v2962 = vshrl.u32 %v2904, 16
        %v2964 = vor.u32 %v2962, %v2960
        %v2966 = vshll.u32 %v2905, 16
        %v2968 = vrot.slane %v2966, 1
        %v2969 = vsel %vm881, %v2964, %v2968
        %v2970 = vshrl.u32 %v2905, 16
        %v2972 = vor.u32 %v2970, %v2968
        %v2974 = vshll.u32 %v2906, 16
        %v2976 = vrot.slane %v2974, 1
        %v2977 = vsel %vm881, %v2972, %v2976
        %v2980 = vunpack.c.l.b16 %v2908
        %v2981 = vunpack.c.l.b16 %v2909
        %v2982 = vpack.c.b16 %v2981, %v2980
        %v2985 = vsel %vm672, %v2921, 0
        %v2988 = vsel %vm672, %v2929, 0
        %v2991 = vsel %vm672, %v2937, 0
        %v2994 = vsel %vm672, %v2945, 0
        %v2997 = vsel %vm672, %v2953, 0
        %v3000 = vsel %vm672, %v2961, 0
        %v3003 = vsel %vm672, %v2969, 0
        %v3006 = vsel %vm672, %v2977, 0
        %3008 = vmatprep.subr.bf16.mxu0 0
        %3009 = vmatpush1.bf16.msra.mxu0 %v2982
        %3010 = vmatprep.subr.bf16.mxu0 0
        %3011 = vmatpush1.bf16.msra.mxu0 0
        %3012 = vmatprep.subr.bf16.mxu0 0
        %3013 = vmatpush1.bf16.msra.mxu0 0
        %3014 = vmatprep.subr.bf16.mxu0 0
        %3015 = vmatpush1.bf16.msra.mxu0 0
        %3016 = vmatprep.subr.bf16.mxu0 0
        %3017 = vmatpush1.bf16.msra.mxu0 0
        %3018 = vmatprep.subr.bf16.mxu0 0
        %3019 = vmatpush1.bf16.msra.mxu0 0
        %3020 = vmatprep.subr.bf16.mxu0 0
        %3021 = vmatpush1.bf16.msra.mxu0 0
        %3022 = vmatprep.subr.bf16.mxu0 0
        %3023 = vmatpush1.bf16.msra.mxu0 0
        %3024 = vmatprep.subr.bf16.mxu0 0
        %3025 = vmatpush1.bf16.msra.mxu0 0
        %3026 = vmatprep.subr.bf16.mxu0 0
        %3027 = vmatpush1.bf16.msra.mxu0 0
        %3028 = vmatprep.subr.bf16.mxu0 0
        %3029 = vmatpush1.bf16.msra.mxu0 0
        %3030 = vmatprep.subr.bf16.mxu0 0
        %3031 = vmatpush1.bf16.msra.mxu0 0
        %3032 = vmatprep.subr.bf16.mxu0 0
        %3033 = vmatpush1.bf16.msra.mxu0 0
        %3034 = vmatprep.subr.bf16.mxu0 0
        %3035 = vmatpush1.bf16.msra.mxu0 0
        %3036 = vmatprep.subr.bf16.mxu0 0
        %3037 = vmatpush1.bf16.msra.mxu0 0
        %3038 = vmatprep.subr.bf16.mxu0 0
        %3039 = vmatpush1.bf16.msra.mxu0 0
        %3040 = vmatprep.mubr.bf16.mxu0 0
        %3041 = vmatmul.mubr.bf16.gmra.mrb[0].mxu0 %v2985
        %v3042 = vpop.f32.mrb[0].mxu0
        %v3043 = vadd.f32 0.0, %v3042
        %v3044 = vpop.f32.mrb[0].mxu0
        %v3045 = vpop.f32.mrb[0].mxu0
        %v3046 = vadd.f32 0.0, %v3045
        %v3047 = vpop.f32.mrb[0].mxu0
        %3048 = vmatprep.mubr.bf16.mxu0 0
        %3049 = vmatmul.mubr.bf16.gmra.mrb[0].mxu0 %v2988
        %v3050 = vpop.f32.mrb[0].mxu0
        %v3051 = vadd.f32 0.0, %v3050
        %v3052 = vpop.f32.mrb[0].mxu0
        %v3053 = vpop.f32.mrb[0].mxu0
        %v3054 = vadd.f32 0.0, %v3053
        %v3055 = vpop.f32.mrb[0].mxu0
        %3056 = vmatprep.mubr.bf16.mxu0 0
        %3057 = vmatmul.mubr.bf16.gmra.mrb[0].mxu0 %v2991
        %v3058 = vpop.f32.mrb[0].mxu0
        %v3059 = vadd.f32 0.0, %v3058
        %v3060 = vpop.f32.mrb[0].mxu0
        %v3061 = vpop.f32.mrb[0].mxu0
        %v3062 = vadd.f32 0.0, %v3061
        %v3063 = vpop.f32.mrb[0].mxu0
        %3064 = vmatprep.mubr.bf16.mxu0 0
        %3065 = vmatmul.mubr.bf16.gmra.mrb[0].mxu0 %v2994
        %v3066 = vpop.f32.mrb[0].mxu0
        %v3067 = vadd.f32 0.0, %v3066
        %v3068 = vpop.f32.mrb[0].mxu0
        %v3069 = vpop.f32.mrb[0].mxu0
        %v3070 = vadd.f32 0.0, %v3069
        %v3071 = vpop.f32.mrb[0].mxu0
        %3072 = vmatprep.mubr.bf16.mxu0 0
        %3073 = vmatmul.mubr.bf16.gmra.mrb[0].mxu0 %v2997
        %v3074 = vpop.f32.mrb[0].mxu0
        %v3075 = vadd.f32 0.0, %v3074
        %v3076 = vpop.f32.mrb[0].mxu0
        %v3077 = vpop.f32.mrb[0].mxu0
        %v3078 = vadd.f32 0.0, %v3077
        %v3079 = vpop.f32.mrb[0].mxu0
        %3080 = vmatprep.mubr.bf16.mxu0 0
        %3081 = vmatmul.mubr.bf16.gmra.mrb[0].mxu0 %v3000
        %v3082 = vpop.f32.mrb[0].mxu0
        %v3083 = vadd.f32 0.0, %v3082
        %v3084 = vpop.f32.mrb[0].mxu0
        %v3085 = vpop.f32.mrb[0].mxu0
        %v3086 = vadd.f32 0.0, %v3085
        %v3087 = vpop.f32.mrb[0].mxu0
        %3088 = vmatprep.mubr.bf16.mxu0 0
        %3089 = vmatmul.mubr.bf16.gmra.mrb[0].mxu0 %v3003
        %v3090 = vpop.f32.mrb[0].mxu0
        %v3091 = vadd.f32 0.0, %v3090
        %v3092 = vpop.f32.mrb[0].mxu0
        %v3093 = vpop.f32.mrb[0].mxu0
        %v3094 = vadd.f32 0.0, %v3093
        %v3095 = vpop.f32.mrb[0].mxu0
        %3096 = vmatprep.mubr.bf16.mxu0 0
        %3097 = vmatmul.mubr.bf16.gmra.mrb[0].mxu0 %v3006
        %v3098 = vpop.f32.mrb[0].mxu0
        %v3099 = vadd.f32 0.0, %v3098
        %v3100 = vpop.f32.mrb[0].mxu0
        %v3101 = vpop.f32.mrb[0].mxu0
        %v3102 = vadd.f32 0.0, %v3101
        %v3103 = vpop.f32.mrb[0].mxu0
        %3104 = vdwg.mxu0
        %v3105 = vld [vmem:[#allocation3] sm:$0xff]
        %v3106 = vld [vmem:[#allocation3 + $0x8] sm:$0xff]
        %v3107 = vld [vmem:[#allocation3 + $0x10] sm:$0xff]
        %v3108 = vld [vmem:[#allocation3 + $0x18] sm:$0xff]
        %v3109 = vld [vmem:[#allocation3 + $0x20] sm:$0xff]
        %v3110 = vld [vmem:[#allocation3 + $0x28] sm:$0xff]
        %v3111 = vld [vmem:[#allocation3 + $0x30] sm:$0xff]
        %v3112 = vld [vmem:[#allocation3 + $0x38] sm:$0xff]
        %v3113 = vld [vmem:[#allocation3 + $0x40] sm:$0xff]
        %v3114 = vld [vmem:[#allocation3 + $0x48] sm:$0xff]
        %v3115 = vld [vmem:[#allocation3 + $0x50] sm:$0xff]
        %v3116 = vld [vmem:[#allocation3 + $0x58] sm:$0xff]
        %v3117 = vld [vmem:[#allocation3 + $0x60] sm:$0xff]
        %v3118 = vld [vmem:[#allocation3 + $0x68] sm:$0xff]
        %v3119 = vld [vmem:[#allocation3 + $0x70] sm:$0xff]
        %v3120 = vld [vmem:[#allocation3 + $0x78] sm:$0xff]
        %v3121 = vadd.f32 %v3105, %v3043
        %v3122 = vadd.f32 %v3106, %v3046
        %v3123 = vadd.f32 %v3107, %v3051
        %v3124 = vadd.f32 %v3108, %v3054
        %v3125 = vadd.f32 %v3109, %v3059
        %v3126 = vadd.f32 %v3110, %v3062
        %v3127 = vadd.f32 %v3111, %v3067
        %v3128 = vadd.f32 %v3112, %v3070
        %v3129 = vadd.f32 %v3113, %v3075
        %v3130 = vadd.f32 %v3114, %v3078
        %v3131 = vadd.f32 %v3115, %v3083
        %v3132 = vadd.f32 %v3116, %v3086
        %v3133 = vadd.f32 %v3117, %v3091
        %v3134 = vadd.f32 %v3118, %v3094
        %v3135 = vadd.f32 %v3119, %v3099
        %v3136 = vadd.f32 %v3120, %v3102
        %3137 = vst.msk [vmem:[#allocation3] sm:$0xff] %vm1161, %v3121
        %3138 = vst.msk [vmem:[#allocation3 + $0x8] sm:$0xff] %vm1161, %v3122
        %3139 = vst.msk [vmem:[#allocation3 + $0x10] sm:$0xff] %vm1161, %v3123
        %3140 = vst.msk [vmem:[#allocation3 + $0x18] sm:$0xff] %vm1161, %v3124
        %3141 = vst.msk [vmem:[#allocation3 + $0x20] sm:$0xff] %vm1161, %v3125
        %3142 = vst.msk [vmem:[#allocation3 + $0x28] sm:$0xff] %vm1161, %v3126
        %3143 = vst.msk [vmem:[#allocation3 + $0x30] sm:$0xff] %vm1161, %v3127
        %3144 = vst.msk [vmem:[#allocation3 + $0x38] sm:$0xff] %vm1161, %v3128
        %3145 = vst.msk [vmem:[#allocation3 + $0x40] sm:$0xff] %vm1161, %v3129
        %3146 = vst.msk [vmem:[#allocation3 + $0x48] sm:$0xff] %vm1161, %v3130
        %3147 = vst.msk [vmem:[#allocation3 + $0x50] sm:$0xff] %vm1161, %v3131
        %3148 = vst.msk [vmem:[#allocation3 + $0x58] sm:$0xff] %vm1161, %v3132
        %3149 = vst.msk [vmem:[#allocation3 + $0x60] sm:$0xff] %vm1161, %v3133
        %3150 = vst.msk [vmem:[#allocation3 + $0x68] sm:$0xff] %vm1161, %v3134
        %3151 = vst.msk [vmem:[#allocation3 + $0x70] sm:$0xff] %vm1161, %v3135
        %3152 = vst.msk [vmem:[#allocation3 + $0x78] sm:$0xff] %vm1161, %v3136
        %v3153 = vld [vmem:[#allocation3] sm:$0xff]
        %v3154 = vld [vmem:[#allocation3 + $0x8] sm:$0xff]
        %v3155 = vld [vmem:[#allocation3 + $0x10] sm:$0xff]
        %v3156 = vld [vmem:[#allocation3 + $0x18] sm:$0xff]
        %v3157 = vld [vmem:[#allocation3 + $0x20] sm:$0xff]
        %v3158 = vld [vmem:[#allocation3 + $0x28] sm:$0xff]
        %v3159 = vld [vmem:[#allocation3 + $0x30] sm:$0xff]
        %v3160 = vld [vmem:[#allocation3 + $0x38] sm:$0xff]
        %v3161 = vld [vmem:[#allocation3 + $0x40] sm:$0xff]
        %v3162 = vld [vmem:[#allocation3 + $0x48] sm:$0xff]
        %v3163 = vld [vmem:[#allocation3 + $0x50] sm:$0xff]
        %v3164 = vld [vmem:[#allocation3 + $0x58] sm:$0xff]
        %v3165 = vld [vmem:[#allocation3 + $0x60] sm:$0xff]
        %v3166 = vld [vmem:[#allocation3 + $0x68] sm:$0xff]
        %v3167 = vld [vmem:[#allocation3 + $0x70] sm:$0xff]
        %v3168 = vld [vmem:[#allocation3 + $0x78] sm:$0xff]
        %v3169 = vld [vmem:[%s7] sm:$0x1]
        %v3171 = vlaneseq
        %v3172 = vshrl.u32 %v3171, 7
        %v3173 = vsub.s32 0, %v3172
        %v3174 = vrot.slane %v3169, %v3173
        %v3176 = vmul.f32 %v3153, %v3174
        %v3177 = vmul.f32 %v3154, %v3174
        %v3178 = vmul.f32 %v3155, %v3174
        %v3179 = vmul.f32 %v3156, %v3174
        %v3180 = vmul.f32 %v3157, %v3174
        %v3181 = vmul.f32 %v3158, %v3174
        %v3182 = vmul.f32 %v3159, %v3174
        %v3183 = vmul.f32 %v3160, %v3174
        %v3184 = vmul.f32 %v3161, %v3174
        %v3185 = vmul.f32 %v3162, %v3174
        %v3186 = vmul.f32 %v3163, %v3174
        %v3187 = vmul.f32 %v3164, %v3174
        %v3188 = vmul.f32 %v3165, %v3174
        %v3189 = vmul.f32 %v3166, %v3174
        %v3190 = vmul.f32 %v3167, %v3174
        %v3191 = vmul.f32 %v3168, %v3174
        %v3192 = vld [vmem:[%s8] sm:$0x1]
        %v3194 = vlaneseq
        %v3195 = vshrl.u32 %v3194, 7
        %v3196 = vsub.s32 0, %v3195
        %v3197 = vrot.slane %v3192, %v3196
        %v3199 = vadd.f32 %v3176, %v3197
        %v3200 = vadd.f32 %v3177, %v3197
        %v3201 = vadd.f32 %v3178, %v3197
        %v3202 = vadd.f32 %v3179, %v3197
        %v3203 = vadd.f32 %v3180, %v3197
        %v3204 = vadd.f32 %v3181, %v3197
        %v3205 = vadd.f32 %v3182, %v3197
        %v3206 = vadd.f32 %v3183, %v3197
        %v3207 = vadd.f32 %v3184, %v3197
        %v3208 = vadd.f32 %v3185, %v3197
        %v3209 = vadd.f32 %v3186, %v3197
        %v3210 = vadd.f32 %v3187, %v3197
        %v3211 = vadd.f32 %v3188, %v3197
        %v3212 = vadd.f32 %v3189, %v3197
        %v3213 = vadd.f32 %v3190, %v3197
        %v3214 = vadd.f32 %v3191, %v3197
        %v3215 = vmax.f32 %v3199, 0.0
        %v3216 = vmax.f32 %v3200, 0.0
        %v3217 = vmax.f32 %v3201, 0.0
        %v3218 = vmax.f32 %v3202, 0.0
        %v3219 = vmax.f32 %v3203, 0.0
        %v3220 = vmax.f32 %v3204, 0.0
        %v3221 = vmax.f32 %v3205, 0.0
        %v3222 = vmax.f32 %v3206, 0.0
        %v3223 = vmax.f32 %v3207, 0.0
        %v3224 = vmax.f32 %v3208, 0.0
        %v3225 = vmax.f32 %v3209, 0.0
        %v3226 = vmax.f32 %v3210, 0.0
        %v3227 = vmax.f32 %v3211, 0.0
        %v3228 = vmax.f32 %v3212, 0.0
        %v3229 = vmax.f32 %v3213, 0.0
        %v3230 = vmax.f32 %v3214, 0.0
        %v3231 = vpack.c.bf16 %v3216, %v3215
        %v3232 = vpack.c.bf16 %v3218, %v3217
        %v3233 = vpack.c.bf16 %v3220, %v3219
        %v3234 = vpack.c.bf16 %v3222, %v3221
        %v3235 = vpack.c.bf16 %v3224, %v3223
        %v3236 = vpack.c.bf16 %v3226, %v3225
        %v3237 = vpack.c.bf16 %v3228, %v3227
        %v3238 = vpack.c.bf16 %v3230, %v3229
        %v3239 = vld [vmem:[%s9] sm:$0xf]
        %v3240 = vld [vmem:[%s9 + $0x4] sm:$0xf]
        %v3241 = vld [vmem:[%s9 + $0x8] sm:$0xf]
        %v3242 = vld [vmem:[%s9 + $0xc] sm:$0xf]
        %v3243 = vld [vmem:[%s10] sm:$0x1]
        %v3245 = vlaneseq
        %v3246 = vshrl.u32 %v3245, 7
        %v3247 = vsub.s32 0, %v3246
        %v3248 = vrot.slane %v3243, %v3247
        %v3254 = vunpack.c.l.b16 %v3239
        %v3255 = vunpack.c.l.b16 %v3240
        %v3256 = vunpack.c.l.b16 %v3241
        %v3257 = vunpack.c.l.b16 %v3242
        %v3258 = vpack.c.b16 %v3255, %v3254
        %v3259 = vpack.c.b16 %v3257, %v3256
        %v3263 = vsel %vm1161, %v3231, 0
        %v3266 = vsel %vm1161, %v3232, 0
        %v3269 = vsel %vm1161, %v3233, 0
        %v3272 = vsel %vm1161, %v3234, 0
        %v3275 = vsel %vm1161, %v3235, 0
        %v3278 = vsel %vm1161, %v3236, 0
        %v3281 = vsel %vm1161, %v3237, 0
        %v3284 = vsel %vm1161, %v3238, 0
        %3286 = vmatprep.subr.bf16.mxu0 0
        %3287 = vmatpush1.bf16.msra.mxu0 %v3258
        %3288 = vmatprep.subr.bf16.mxu0 0
        %3289 = vmatpush1.bf16.msra.mxu0 %v3259
        %3290 = vmatprep.subr.bf16.mxu0 0
        %3291 = vmatpush1.bf16.msra.mxu0 0
        %3292 = vmatprep.subr.bf16.mxu0 0
        %3293 = vmatpush1.bf16.msra.mxu0 0
        %3294 = vmatprep.subr.bf16.mxu0 0
        %3295 = vmatpush1.bf16.msra.mxu0 0
        %3296 = vmatprep.subr.bf16.mxu0 0
        %3297 = vmatpush1.bf16.msra.mxu0 0
        %3298 = vmatprep.subr.bf16.mxu0 0
        %3299 = vmatpush1.bf16.msra.mxu0 0
        %3300 = vmatprep.subr.bf16.mxu0 0
        %3301 = vmatpush1.bf16.msra.mxu0 0
        %3302 = vmatprep.subr.bf16.mxu0 0
        %3303 = vmatpush1.bf16.msra.mxu0 0
        %3304 = vmatprep.subr.bf16.mxu0 0
        %3305 = vmatpush1.bf16.msra.mxu0 0
        %3306 = vmatprep.subr.bf16.mxu0 0
        %3307 = vmatpush1.bf16.msra.mxu0 0
        %3308 = vmatprep.subr.bf16.mxu0 0
        %3309 = vmatpush1.bf16.msra.mxu0 0
        %3310 = vmatprep.subr.bf16.mxu0 0
        %3311 = vmatpush1.bf16.msra.mxu0 0
        %3312 = vmatprep.subr.bf16.mxu0 0
        %3313 = vmatpush1.bf16.msra.mxu0 0
        %3314 = vmatprep.subr.bf16.mxu0 0
        %3315 = vmatpush1.bf16.msra.mxu0 0
        %3316 = vmatprep.subr.bf16.mxu0 0
        %3317 = vmatpush1.bf16.msra.mxu0 0
        %3318 = vmatprep.mubr.bf16.mxu0 0
        %3319 = vmatmul.mubr.bf16.gmra.mrb[0].mxu0 %v3263
        %v3320 = vpop.f32.mrb[0].mxu0
        %v3321 = vadd.f32 %v3248, %v3320
        %v3322 = vpop.f32.mrb[0].mxu0
        %v3323 = vpop.f32.mrb[0].mxu0
        %v3324 = vadd.f32 %v3248, %v3323
        %v3325 = vpop.f32.mrb[0].mxu0
        %3326 = vmatprep.mubr.bf16.mxu0 0
        %3327 = vmatmul.mubr.bf16.gmra.mrb[0].mxu0 %v3266
        %v3328 = vpop.f32.mrb[0].mxu0
        %v3329 = vadd.f32 %v3248, %v3328
        %v3330 = vpop.f32.mrb[0].mxu0
        %v3331 = vpop.f32.mrb[0].mxu0
        %v3332 = vadd.f32 %v3248, %v3331
        %v3333 = vpop.f32.mrb[0].mxu0
        %3334 = vmatprep.mubr.bf16.mxu0 0
        %3335 = vmatmul.mubr.bf16.gmra.mrb[0].mxu0 %v3269
        %v3336 = vpop.f32.mrb[0].mxu0
        %v3337 = vadd.f32 %v3248, %v3336
        %v3338 = vpop.f32.mrb[0].mxu0
        %v3339 = vpop.f32.mrb[0].mxu0
        %v3340 = vadd.f32 %v3248, %v3339
        %v3341 = vpop.f32.mrb[0].mxu0
        %3342 = vmatprep.mubr.bf16.mxu0 0
        %3343 = vmatmul.mubr.bf16.gmra.mrb[0].mxu0 %v3272
        %v3344 = vpop.f32.mrb[0].mxu0
        %v3345 = vadd.f32 %v3248, %v3344
        %v3346 = vpop.f32.mrb[0].mxu0
        %v3347 = vpop.f32.mrb[0].mxu0
        %v3348 = vadd.f32 %v3248, %v3347
        %v3349 = vpop.f32.mrb[0].mxu0
        %3350 = vmatprep.mubr.bf16.mxu0 0
        %3351 = vmatmul.mubr.bf16.gmra.mrb[0].mxu0 %v3275
        %v3352 = vpop.f32.mrb[0].mxu0
        %v3353 = vadd.f32 %v3248, %v3352
        %v3354 = vpop.f32.mrb[0].mxu0
        %v3355 = vpop.f32.mrb[0].mxu0
        %v3356 = vadd.f32 %v3248, %v3355
        %v3357 = vpop.f32.mrb[0].mxu0
        %3358 = vmatprep.mubr.bf16.mxu0 0
        %3359 = vmatmul.mubr.bf16.gmra.mrb[0].mxu0 %v3278
        %v3360 = vpop.f32.mrb[0].mxu0
        %v3361 = vadd.f32 %v3248, %v3360
        %v3362 = vpop.f32.mrb[0].mxu0
        %v3363 = vpop.f32.mrb[0].mxu0
        %v3364 = vadd.f32 %v3248, %v3363
        %v3365 = vpop.f32.mrb[0].mxu0
        %3366 = vmatprep.mubr.bf16.mxu0 0
        %3367 = vmatmul.mubr.bf16.gmra.mrb[0].mxu0 %v3281
        %v3368 = vpop.f32.mrb[0].mxu0
        %v3369 = vadd.f32 %v3248, %v3368
        %v3370 = vpop.f32.mrb[0].mxu0
        %v3371 = vpop.f32.mrb[0].mxu0
        %v3372 = vadd.f32 %v3248, %v3371
        %v3373 = vpop.f32.mrb[0].mxu0
        %3374 = vmatprep.mubr.bf16.mxu0 0
        %3375 = vmatmul.mubr.bf16.gmra.mrb[0].mxu0 %v3284
        %v3376 = vpop.f32.mrb[0].mxu0
        %v3377 = vadd.f32 %v3248, %v3376
        %v3378 = vpop.f32.mrb[0].mxu0
        %v3379 = vpop.f32.mrb[0].mxu0
        %v3380 = vadd.f32 %v3248, %v3379
        %v3381 = vpop.f32.mrb[0].mxu0
        %3382 = vdwg.mxu0
        %3383 = vst [vmem:[%s553] sm:$0xff] %v3321
        %3384 = vst [vmem:[%s553 + $0x8] sm:$0xff] %v3324
        %3385 = vst [vmem:[%s553 + $0x10] sm:$0xff] %v3329
        %3386 = vst [vmem:[%s553 + $0x18] sm:$0xff] %v3332
        %3387 = vst [vmem:[%s553 + $0x20] sm:$0xff] %v3337
        %3388 = vst [vmem:[%s553 + $0x28] sm:$0xff] %v3340
        %3389 = vst [vmem:[%s553 + $0x30] sm:$0xff] %v3345
        %3390 = vst [vmem:[%s553 + $0x38] sm:$0xff] %v3348
        %3391 = vst [vmem:[%s553 + $0x40] sm:$0xff] %v3353
        %3392 = vst [vmem:[%s553 + $0x48] sm:$0xff] %v3356
        %3393 = vst [vmem:[%s553 + $0x50] sm:$0xff] %v3361
        %3394 = vst [vmem:[%s553 + $0x58] sm:$0xff] %v3364
        %3395 = vst [vmem:[%s553 + $0x60] sm:$0xff] %v3369
        %3396 = vst [vmem:[%s553 + $0x68] sm:$0xff] %v3372
        %3397 = vst [vmem:[%s553 + $0x70] sm:$0xff] %v3377
        %3398 = vst [vmem:[%s553 + $0x78] sm:$0xff] %v3380
        %s3399 = smul.u32 8, %s33
        %p3400 = scmp.lt.s32.totalorder %s32, 1
        %s3401 = scalar_select %p3400, %s32, 1
        %p3402 = scmp.lt.s32.totalorder %s3399, 15
        %s3403 = scalar_select %p3402, %s3399, 15
        %s3404 = smul.addr %s3403, 2
        %s3405 = smul.addr %s3401, 32
        %s3406 = sadd.s32 %s3404, %s3405
        %s3407 = smul.addr %s3406, 8
        %s3408 = scalar_lea.vmem %s11, %s3407
        // Predicated region
        $region77: #{_lambda_.1} parent=63 // pred_check
          %p3409 = pneg %p328
        $region78: #{_lambda_.1} parent=63 // pred_check_branch
          %3411 = sbr.rel (%p3409) target = $region80
        $region79: #{_lambda_.1} parent=63 // pred_region
          %s3412 = smul.u32 8, %s33
        $region80: #{_lambda_.1} parent=63 // pred_fallthru
          _
      $region64: #{_lambda_.1} parent=5 // pred_fallthru
        _
      %p3413 = scmp.le.s32.totalorder 2, %s23
      // Predicated region
      $region81: #{_lambda_.1} parent=5 // pred_check
        %p3414 = pneg %p3413
      $region82: #{_lambda_.1} parent=5 // pred_check_branch
        %3416 = sbr.rel (%p3414) target = $region84
      $region83: #{_lambda_.1} parent=5 // pred_region
        %s3417 = ssub.s32 %s23, 2
        // Predicated region
        $region85: #{_lambda_.1} parent=83 // pred_check
          %p3418 = pneg %p334
        $region86: #{_lambda_.1} parent=83 // pred_check_branch
          %3420 = sbr.rel (%p3418) target = $region88
        $region87: #{_lambda_.1} parent=83 // pred_region
          %s3421 = smul.u32 8, %s35
          %p3422 = scmp.lt.s32.totalorder %s34, 1
          %s3423 = scalar_select %p3422, %s34, 1
          %p3424 = scmp.lt.s32.totalorder %s3421, 15
          %s3425 = scalar_select %p3424, %s3421, 15
          %s3426 = smul.addr %s3425, 2
          %s3427 = smul.addr %s3423, 32
          %s3428 = sadd.s32 %s3426, %s3427
          %s3429 = smul.addr %s3428, 8
          %s3430 = scalar_lea.vmem %s11, %s3429
        $region88: #{_lambda_.1} parent=83 // pred_fallthru
          _
      $region84: #{_lambda_.1} parent=5 // pred_fallthru
        _
    $region6: #{_lambda_.1} parent=1 // loop_footer
      %s27 = sadd.s32 1, %s23
    $region7: #{_lambda_.1} parent=1 // loop_footer_branch
      %22 = sbr.rel target = $region3
    $region8: #{_lambda_.1} parent=1 // loop_exit
      _
    %3431 = vsyncpa [#allocation5], 1
    %s3432 = scalar_lea.sflag [#allocation5], 1
    %3433 = vsyncpa %s3432, 1
    %3434 = vsyncpa [#allocation7], 1
    %s3435 = scalar_lea.sflag [#allocation7], 1
    %3436 = vsyncpa %s3435, 1

</llo_original>
